<compile_context>
chip_gen: v7x
topology: tpu7x:2x2x1
jax: 0.10.0
libtpu: 0.0.40
codegen_flags: <defaults>
</compile_context>

<pallas_src>
import jax
import jax.numpy as jnp
from jax import lax
from jax.experimental import pallas as pl
from jax.experimental.pallas import tpu as pltpu

_LANE = 128      # lane tiling (last dim)
_SUBLANE = 8     # sublane tiling (second-to-last dim)


def _round_up(n, m):
    return ((n + m - 1) // m) * m


# ============================================================================
# One-time weight folding (setup-time, wrapper side).
# Internal flat ordering of an (H, W, C) activation is row-major (y, x, c).
# ============================================================================
def _conv2d_row_band(w, b, w_in, stride):
    """Per-output-row band operator for Conv2d (padding=0).

    Identical for every output row (no vertical padding): the row `oy` of the
    output is  x_flat[:, stride*oy*W*Cin : stride*oy*W*Cin + kh*W*Cin] @ mat + bias,
    with mat of shape (kh*W*Cin, Wout*Cout) and bias of shape (Wout*Cout,).
    w: (Cout, Cin, kh, kw), b: (Cout,)."""
    c_out, c_in, kh, kw = w.shape
    w_out = (w_in - kw) // stride + 1
    k_band = kh * w_in * c_in
    mat = jnp.zeros((k_band, w_out * c_out), jnp.float32)
    ox = jnp.arange(w_out)
    ci = jnp.arange(c_in)
    co = jnp.arange(c_out)
    for ky in range(kh):
        for kx in range(kw):
            ix = stride * ox + kx                                      # (Wo,)
            rows = (ky * w_in + ix)[:, None] * c_in + ci[None, :]      # (Wo,Cin)
            cols = ox[:, None] * c_out + co[None, :]                   # (Wo,Cout)
            blk = w[:, :, ky, kx].T                                    # (Cin,Cout)
            vals = jnp.broadcast_to(blk[None], (w_out, c_in, c_out))
            r = jnp.broadcast_to(rows[:, :, None], vals.shape)
            c = jnp.broadcast_to(cols[:, None, :], vals.shape)
            mat = mat.at[r.reshape(-1), c.reshape(-1)].add(vals.reshape(-1))
    bias = jnp.tile(b, w_out)                  # (x, c) order, c fastest
    return mat, bias, w_out


def _conv2d_as_dense(w, b, h_in, w_in, stride, k_in=None, in_row_pitch=None):
    """PyTorch Conv2d (padding=0) as a dense operator on a (y, x, c)-flat input.
    `in_row_pitch` = flat offset between consecutive input spatial rows (allows
    a per-row-padded input layout); `k_in` = total flat input width.
    Returns (M, bias, Ho, Wo) with  out_flat = in_flat @ M + bias."""
    c_out, c_in, kh, kw = w.shape
    if in_row_pitch is None:
        in_row_pitch = w_in * c_in
    if k_in is None:
        k_in = (h_in - 1) * in_row_pitch + w_in * c_in
    h_out = (h_in - kh) // stride + 1
    w_out = (w_in - kw) // stride + 1
    mat = jnp.zeros((k_in, h_out * w_out * c_out), jnp.float32)
    oy = jnp.arange(h_out)
    ox = jnp.arange(w_out)
    ci = jnp.arange(c_in)
    co = jnp.arange(c_out)
    for ky in range(kh):
        for kx in range(kw):
            iy = stride * oy + ky                                      # (Ho,)
            ix = stride * ox + kx                                      # (Wo,)
            in_idx = ((iy[:, None] * in_row_pitch + ix[None, :] * c_in)[:, :, None]
                      + ci[None, None, :])                             # (Ho,Wo,Cin)
            out_idx = ((oy[:, None] * w_out + ox[None, :])[:, :, None] * c_out
                       + co[None, None, :])                            # (Ho,Wo,Cout)
            blk = w[:, :, ky, kx].T                                    # (Cin,Cout)
            vals = jnp.broadcast_to(blk[None, None], (h_out, w_out, c_in, c_out))
            rows = jnp.broadcast_to(in_idx[:, :, :, None], vals.shape)
            cols = jnp.broadcast_to(out_idx[:, :, None, :], vals.shape)
            mat = mat.at[rows.reshape(-1), cols.reshape(-1)].add(vals.reshape(-1))
    bias = jnp.tile(b, h_out * w_out)          # (y, x, c) order, c fastest
    return mat, bias, h_out, w_out


def _conv_transpose2d_as_dense(w, b, h_in, w_in, stride, padding):
    """PyTorch ConvTranspose2d.  w: (Cin, Cout, kh, kw), b: (Cout,).
    Folded directly from out[p] = sum x[i] * w[k] over p = s*i - pad + k."""
    c_in, c_out, kh, kw = w.shape
    h_out = (h_in - 1) * stride - 2 * padding + kh
    w_out = (w_in - 1) * stride - 2 * padding + kw
    mat = jnp.zeros((h_in * w_in * c_in, h_out * w_out * c_out), jnp.float32)
    iy = jnp.arange(h_in)
    ix = jnp.arange(w_in)
    ci = jnp.arange(c_in)
    co = jnp.arange(c_out)
    for ky in range(kh):
        for kx in range(kw):
            oy = stride * iy + ky - padding                            # (Hin,)
            ox = stride * ix + kx - padding                            # (Win,)
            valid = ((oy[:, None] >= 0) & (oy[:, None] < h_out)
                     & (ox[None, :] >= 0) & (ox[None, :] < w_out))     # (Hin,Win)
            in_idx = ((iy[:, None] * w_in + ix[None, :])[:, :, None] * c_in
                      + ci[None, None, :])                             # (Hin,Win,Cin)
            out_idx = ((oy[:, None] * w_out + ox[None, :])[:, :, None] * c_out
                       + co[None, None, :])                            # (Hin,Win,Cout)
            blk = w[:, :, ky, kx]                                      # (Cin,Cout)
            vals = jnp.broadcast_to(blk[None, None], (h_in, w_in, c_in, c_out))
            vals = jnp.where(valid[:, :, None, None], vals, 0.0)
            rows = jnp.broadcast_to(in_idx[:, :, :, None], vals.shape)
            cols = jnp.broadcast_to(out_idx[:, :, None, :], vals.shape)
            cols = jnp.where(valid[:, :, None, None], cols, 0)
            mat = mat.at[rows.reshape(-1), cols.reshape(-1)].add(vals.reshape(-1))
    bias = jnp.tile(b, h_out * w_out)
    return mat, bias, h_out, w_out


def _chw_to_hwc_perm(c, h, w):
    """perm[r_chw] = flat (y, x, c) index of the same element."""
    ci, yi, xi = jnp.meshgrid(jnp.arange(c), jnp.arange(h), jnp.arange(w),
                              indexing="ij")
    return ((yi * w + xi) * c + ci).reshape(-1)


def fold_params(params, n_channels, n_rows, n_cols):
    """Fold the four (transposed) conv layers into lane-padded GEMM operators.

    conv1 is folded as a per-output-row band (one small shared matrix) whenever
    the band slice is lane-aligned; otherwise it falls back to a single dense
    operator (nb == 1 path of the same kernel)."""
    cw1, cb1 = params["conv1_w"], params["conv1_b"]
    c1_out, _, kh1, kw1 = cw1.shape
    s1 = 2
    h1 = (n_rows - kh1) // s1 + 1
    w1 = (n_cols - kw1) // s1 + 1
    k_in = n_rows * n_cols * n_channels

    band_k = kh1 * n_cols * n_channels          # flat width of one conv1 band
    band_stride = s1 * n_cols * n_channels      # flat offset between bands
    band_ok = (band_k % _LANE == 0) and (band_stride % _LANE == 0)

    if band_ok:
        nb = h1                                              # one band per output row
        wb, vb, _ = _conv2d_row_band(cw1, cb1, n_cols, s1)
        n_row = w1 * c1_out                                  # valid cols per band
    else:
        nb = 1                                               # dense fallback
        band_k, band_stride = k_in, 0
        wb, vb, _, _ = _conv2d_as_dense(cw1, cb1, n_rows, n_cols, s1)
        n_row = h1 * w1 * c1_out
    n_row_pad = _round_up(n_row, _LANE)

    # conv2 consumes the per-row-padded layer-1 output.
    if band_ok:
        pitch2, k2_in = n_row_pad, nb * n_row_pad
    else:
        pitch2, k2_in = w1 * c1_out, n_row_pad
    m2, v2, h2, w2 = _conv2d_as_dense(params["conv2_w"], params["conv2_b"],
                                      h1, w1, 2, k_in=k2_in, in_row_pitch=pitch2)
    m3, v3, h3, w3 = _conv_transpose2d_as_dense(params["tconv1_w"],
                                                params["tconv1_b"], h2, w2, 2, 0)
    m4, v4, h4, w4 = _conv_transpose2d_as_dense(params["tconv2_w"],
                                                params["tconv2_b"], h3, w3, 2, 1)
    c_final = params["tconv2_w"].shape[1]

    # Fold the (y,x,c) -> NCHW output reordering into the last matrix so the
    # runtime wrapper only reshapes.
    perm_out = _chw_to_hwc_perm(c_final, h4, w4)
    m4 = m4[:, perm_out]
    v4 = v4[perm_out]

    def pad_mat(m, rows, cols):
        return jnp.pad(m, ((0, rows - m.shape[0]), (0, cols - m.shape[1])))

    def pad_bias(v, cols):
        return jnp.pad(v, (0, cols - v.shape[0])).reshape(1, -1)

    n2_pad = _round_up(m2.shape[1], _LANE)
    n3_pad = _round_up(m3.shape[1], _LANE)
    n4_pad = _round_up(m4.shape[1], _LANE)

    # Padded K rows are zero -> padded columns of the previous layer (0 after
    # ReLU, 0.5 after sigmoid) never leak into valid outputs.
    wb_p = pad_mat(wb, wb.shape[0], n_row_pad).astype(jnp.bfloat16)
    m2_p = pad_mat(m2, k2_in, n2_pad).astype(jnp.bfloat16)
    m3_p = pad_mat(m3, n2_pad, n3_pad).astype(jnp.bfloat16)
    m4_p = pad_mat(m4, n3_pad, n4_pad).astype(jnp.bfloat16)
    vb_p = pad_bias(vb, n_row_pad).astype(jnp.float32)
    v2_p = pad_bias(v2, n2_pad).astype(jnp.float32)
    v3_p = pad_bias(v3, n3_pad).astype(jnp.float32)
    v4_p = pad_bias(v4, n4_pad).astype(jnp.float32)

    return {"mats": (wb_p, m2_p, m3_p, m4_p),
            "biases": (vb_p, v2_p, v3_p, v4_p),
            "nb": nb, "band_k": band_k, "band_stride": band_stride,
            "k_in": k_in, "n4_pad": n4_pad, "out_nchw": (c_final, h4, w4)}


# ============================================================================
# The fused Pallas kernel: banded conv1 + 3 lane-dense GEMMs, all in VMEM.
# ============================================================================
def _make_convae_kernel(nb, band_stride, band_k):
    def kernel(x_ref, wb_ref, vb_ref, w2_ref, b2_ref, w3_ref, b3_ref,
               w4_ref, b4_ref, o_ref):
        x = x_ref[...]                                       # (tm, K_in) bf16

        def sigmoid(v):
            # exp + approx reciprocal both live on the EUP slot (VALU stays free).
            return pl.reciprocal(1.0 + jnp.exp(-v), approx=True)

        # ---- conv1 + ReLU: nb lane-aligned band GEMMs sharing one small matrix.
        wb = wb_ref[...]
        pieces = []
        for r in range(nb):
            a = x[:, r * band_stride: r * band_stride + band_k]      # 128-aligned
            y = jnp.dot(a, wb, preferred_element_type=jnp.float32)
            y = jnp.maximum(y + vb_ref[...], 0.0)
            pieces.append(y.astype(jnp.bfloat16))
        h = pieces[0] if nb == 1 else jnp.concatenate(pieces, axis=1)

        # ---- conv2 + sigmoid (latent)
        z = jnp.dot(h, w2_ref[...], preferred_element_type=jnp.float32)
        z = sigmoid(z + b2_ref[...]).astype(jnp.bfloat16)

        # ---- tconv1 + ReLU
        d = jnp.dot(z, w3_ref[...], preferred_element_type=jnp.float32)
        d = jnp.maximum(d + b3_ref[...], 0.0).astype(jnp.bfloat16)

        # ---- tconv2 + sigmoid, bf16 writeback (halves output HBM traffic)
        o = jnp.dot(d, w4_ref[...], preferred_element_type=jnp.float32)
        o_ref[...] = sigmoid(o + b4_ref[...]).astype(o_ref.dtype)

    return kernel


def make_forward(folded):
    mats, biases = folded["mats"], folded["biases"]
    nb, band_k, band_stride = folded["nb"], folded["band_k"], folded["band_stride"]
    k_in, n4_pad = folded["k_in"], folded["n4_pad"]
    c_out, h_out, w_out = folded["out_nchw"]
    n_valid = c_out * h_out * w_out
    kernel = _make_convae_kernel(nb, band_stride, band_k)

    @jax.jit
    def forward(x):
        b = x.shape[0]
        # M-tile policy:
        #   b <= 8       : single 8-row tile (nothing to split)
        #   8 < b < 512  : >= 2 grid steps so "parallel" engages both v7x TCs
        #   b >= 512     : 256-row tiles (fewer pipeline steps, keeps MXU fed)
        if b <= _SUBLANE:
            tm = _round_up(b, _SUBLANE)
        elif b < 512:
            tm = min(128, _round_up((b + 1) // 2, _SUBLANE))
        else:
            tm = 256
        m_pad = _round_up(b, tm)

        # Single fused wrapper pass: NCHW -> (y,x,c)-flat (enables the banded
        # conv1 GEMM), bf16 cast folded into the same pass, pad M only.
        xf = jnp.transpose(x, (0, 2, 3, 1)).reshape(b, k_in).astype(jnp.bfloat16)
        if m_pad != b:
            xf = jnp.pad(xf, ((0, m_pad - b), (0, 0)))

        flops = 2 * m_pad * (nb * int(mats[0].shape[0]) * int(mats[0].shape[1])
                             + sum(int(m.shape[0]) * int(m.shape[1]) for m in mats[1:]))
        transcendentals = m_pad * (int(mats[1].shape[1]) + int(mats[3].shape[1]))
        bytes_accessed = (int(xf.size) * 2
                          + sum(int(a.size) * a.dtype.itemsize for a in mats + biases)
                          + m_pad * n4_pad * 2)

        in_specs = [pl.BlockSpec((tm, k_in), lambda i: (i, 0))]
        for m, v in zip(mats, biases):
            # Constant block index -> fetched once, VMEM-resident across M tiles.
            in_specs.append(pl.BlockSpec(m.shape, lambda i: (0, 0)))
            in_specs.append(pl.BlockSpec(v.shape, lambda i: (0, 0)))

        y = pl.pallas_call(
            kernel,
            out_shape=jax.ShapeDtypeStruct((m_pad, n4_pad), jnp.bfloat16),
            grid=(m_pad // tm,),
            in_specs=in_specs,
            out_specs=pl.BlockSpec((tm, n4_pad), lambda i: (i, 0)),
            compiler_params=pltpu.CompilerParams(
                dimension_semantics=("parallel",),           # 2-TC split on v7x
                vmem_limit_bytes=32 * 1024 * 1024),
            cost_estimate=pl.CostEstimate(flops=flops,
                                          transcendentals=transcendentals,
                                          bytes_accessed=bytes_accessed),
        )(xf, mats[0], biases[0], mats[1], biases[1],
          mats[2], biases[2], mats[3], biases[3])

        # Slice + cast + reshape fuse into the one wrapper op that exists anyway.
        return (y[:b, :n_valid].astype(jnp.float32)
                .reshape(b, c_out, h_out, w_out))            # NCHW

    return forward


# ============================================================================
# Parameters (PyTorch layouts) and a pure-XLA reference for the self-check.
# ============================================================================
def init_params(key, n_channels):
    ks = jax.random.split(key, 8)
    s = 0.05
    return {
        # nn.Conv2d(n_channels, 32, kernel_size=4, stride=2)
        "conv1_w": s * jax.random.normal(ks[0], (32, n_channels, 4, 4), jnp.float32),
        "conv1_b": s * jax.random.normal(ks[1], (32,), jnp.float32),
        # nn.Conv2d(32, 3, kernel_size=2, stride=2)
        "conv2_w": s * jax.random.normal(ks[2], (3, 32, 2, 2), jnp.float32),
        "conv2_b": s * jax.random.normal(ks[3], (3,), jnp.float32),
        # nn.ConvTranspose2d(3, 32, kernel_size=2, stride=2)
        "tconv1_w": s * jax.random.normal(ks[4], (3, 32, 2, 2), jnp.float32),
        "tconv1_b": s * jax.random.normal(ks[5], (32,), jnp.float32),
        # nn.ConvTranspose2d(32, 3, kernel_size=4, stride=2, padding=1)
        "tconv2_w": s * jax.random.normal(ks[6], (32, 3, 4, 4), jnp.float32),
        "tconv2_b": s * jax.random.normal(ks[7], (3,), jnp.float32),
    }


def _reference_forward(params, x):
    """Pure-XLA reference with PyTorch Conv2d / ConvTranspose2d semantics."""
    dn = ("NCHW", "OIHW", "NCHW")

    def conv(h, w, b, stride):
        h = lax.conv_general_dilated(h, w, (stride, stride), "VALID",
                                     dimension_numbers=dn)
        return h + b[None, :, None, None]

    def tconv(h, w, b, stride, padding):
        kh, kw = w.shape[2], w.shape[3]
        w_conv = jnp.flip(w, (2, 3)).transpose(1, 0, 2, 3)
        pad = ((kh - 1 - padding, kh - 1 - padding),
               (kw - 1 - padding, kw - 1 - padding))
        h = lax.conv_general_dilated(h, w_conv, (1, 1), pad,
                                     lhs_dilation=(stride, stride),
                                     dimension_numbers=dn)
        return h + b[None, :, None, None]

    h = jax.nn.relu(conv(x, params["conv1_w"], params["conv1_b"], 2))
    z = jax.nn.sigmoid(conv(h, params["conv2_w"], params["conv2_b"], 2))
    d = jax.nn.relu(tconv(z, params["tconv1_w"], params["tconv1_b"], 2, 0))
    y = jax.nn.sigmoid(tconv(d, params["tconv2_w"], params["tconv2_b"], 2, 1))
    return y


if __name__ == "__main__":
    key = jax.random.PRNGKey(0)
    k_par, k_x = jax.random.split(key)

    B, C, H, W = 2, 4, 16, 16                 # NCHW, matches PyTorch input layout
    params = init_params(k_par, n_channels=C)
    x = jax.random.uniform(k_x, (B, C, H, W), jnp.float32)

    folded = fold_params(params, C, H, W)     # one-time weight folding
    forward = make_forward(folded)

    y = jax.block_until_ready(forward(x))

    # Expected: conv1 (2,32,7,7) -> conv2 (2,3,3,3) -> tconv1 (2,32,6,6) -> (2,3,12,12)
    assert y.shape == (B, 3, 12, 12), y.shape
    assert bool(jnp.all(jnp.isfinite(y)))
    assert bool(jnp.all((y >= 0.0) & (y <= 1.0)))   # final sigmoid range

    # Cross-check against a pure-XLA reference of the same PyTorch module
    # (loose tolerance: bf16 MXU inputs, bf16 activations/output, approx recip).
    y_ref = _reference_forward(params, x)
    err = float(jnp.max(jnp.abs(y - y_ref)))
    assert err < 2e-2, err

    print("KERNEL_OK")
</pallas_src>

<mosaic_0001>
module attributes {stable_mosaic.version = 11 : i64} {
  func.func @kernel(%arg0: i32, %arg1: memref<8x1024xbf16, #tpu.memory_space<vmem>>, %arg2: memref<256x256xbf16, #tpu.memory_space<vmem>>, %arg3: memref<1x256xf32, #tpu.memory_space<vmem>>, %arg4: memref<1792x128xbf16, #tpu.memory_space<vmem>>, %arg5: memref<1x128xf32, #tpu.memory_space<vmem>>, %arg6: memref<128x1152xbf16, #tpu.memory_space<vmem>>, %arg7: memref<1x1152xf32, #tpu.memory_space<vmem>>, %arg8: memref<1152x512xbf16, #tpu.memory_space<vmem>>, %arg9: memref<1x512xf32, #tpu.memory_space<vmem>>, %arg10: memref<8x512xbf16, #tpu.memory_space<vmem>>) attributes {dimension_semantics = [#tpu.dimension_semantics<parallel>], iteration_bounds = array<i64: 1>, scalar_prefetch = 0 : i64, scratch_operands = 0 : i64, tpu.core_type = #tpu.core_type<tc>, window_params = [{transform_indices = @transform_0, window_bounds = array<i64: 8, 1024>}, {pipeline_mode = #tpu.pipeline_mode<synchronous>, transform_indices = @transform_1, window_bounds = array<i64: 256, 256>}, {pipeline_mode = #tpu.pipeline_mode<synchronous>, transform_indices = @transform_2, window_bounds = array<i64: 1, 256>}, {pipeline_mode = #tpu.pipeline_mode<synchronous>, transform_indices = @transform_3, window_bounds = array<i64: 1792, 128>}, {pipeline_mode = #tpu.pipeline_mode<synchronous>, transform_indices = @transform_4, window_bounds = array<i64: 1, 128>}, {pipeline_mode = #tpu.pipeline_mode<synchronous>, transform_indices = @transform_5, window_bounds = array<i64: 128, 1152>}, {pipeline_mode = #tpu.pipeline_mode<synchronous>, transform_indices = @transform_6, window_bounds = array<i64: 1, 1152>}, {pipeline_mode = #tpu.pipeline_mode<synchronous>, transform_indices = @transform_7, window_bounds = array<i64: 1152, 512>}, {pipeline_mode = #tpu.pipeline_mode<synchronous>, transform_indices = @transform_8, window_bounds = array<i64: 1, 512>}, {transform_indices = @transform_9, window_bounds = array<i64: 8, 512>}]} {
    %c0 = arith.constant 0 : index
    %c0_0 = arith.constant 0 : index
    %0 = vector.load %arg1[%c0, %c0_0] : memref<8x1024xbf16, #tpu.memory_space<vmem>>, vector<8x1024xbf16>
    %c0_1 = arith.constant 0 : index
    %c0_2 = arith.constant 0 : index
    %1 = vector.load %arg2[%c0_1, %c0_2] : memref<256x256xbf16, #tpu.memory_space<vmem>>, vector<256x256xbf16>
    %2 = vector.extract_strided_slice %0 {offsets = [0, 0], sizes = [8, 256], strides = [1, 1]} : vector<8x1024xbf16> to vector<8x256xbf16>
    %cst = arith.constant dense<0.000000e+00> : vector<8x256xf32>
    %3 = tpu.matmul %2, %1, %cst {dimension_numbers = #tpu.dot_dimension_numbers<[1], [0], [0], [1], [0, 0, 1, 1], [], []>} : vector<8x256xbf16>, vector<256x256xbf16>, vector<8x256xf32> -> vector<8x256xf32>
    %c0_3 = arith.constant 0 : index
    %c0_4 = arith.constant 0 : index
    %4 = vector.load %arg3[%c0_3, %c0_4] : memref<1x256xf32, #tpu.memory_space<vmem>>, vector<1x256xf32>
    %5 = vector.broadcast %4 : vector<1x256xf32> to vector<8x256xf32>
    %6 = arith.addf %3, %5 : vector<8x256xf32>
    %cst_5 = arith.constant 0.000000e+00 : f32
    %7 = vector.broadcast %cst_5 : f32 to vector<8x256xf32>
    %8 = arith.maximumf %6, %7 : vector<8x256xf32>
    %9 = arith.truncf %8 : vector<8x256xf32> to vector<8x256xbf16>
    %10 = vector.extract_strided_slice %0 {offsets = [0, 128], sizes = [8, 256], strides = [1, 1]} : vector<8x1024xbf16> to vector<8x256xbf16>
    %cst_6 = arith.constant dense<0.000000e+00> : vector<8x256xf32>
    %11 = tpu.matmul %10, %1, %cst_6 {dimension_numbers = #tpu.dot_dimension_numbers<[1], [0], [0], [1], [0, 0, 1, 1], [], []>} : vector<8x256xbf16>, vector<256x256xbf16>, vector<8x256xf32> -> vector<8x256xf32>
    %c0_7 = arith.constant 0 : index
    %c0_8 = arith.constant 0 : index
    %12 = vector.load %arg3[%c0_7, %c0_8] : memref<1x256xf32, #tpu.memory_space<vmem>>, vector<1x256xf32>
    %13 = vector.broadcast %12 : vector<1x256xf32> to vector<8x256xf32>
    %14 = arith.addf %11, %13 : vector<8x256xf32>
    %cst_9 = arith.constant 0.000000e+00 : f32
    %15 = vector.broadcast %cst_9 : f32 to vector<8x256xf32>
    %16 = arith.maximumf %14, %15 : vector<8x256xf32>
    %17 = arith.truncf %16 : vector<8x256xf32> to vector<8x256xbf16>
    %18 = vector.extract_strided_slice %0 {offsets = [0, 256], sizes = [8, 256], strides = [1, 1]} : vector<8x1024xbf16> to vector<8x256xbf16>
    %cst_10 = arith.constant dense<0.000000e+00> : vector<8x256xf32>
    %19 = tpu.matmul %18, %1, %cst_10 {dimension_numbers = #tpu.dot_dimension_numbers<[1], [0], [0], [1], [0, 0, 1, 1], [], []>} : vector<8x256xbf16>, vector<256x256xbf16>, vector<8x256xf32> -> vector<8x256xf32>
    %c0_11 = arith.constant 0 : index
    %c0_12 = arith.constant 0 : index
    %20 = vector.load %arg3[%c0_11, %c0_12] : memref<1x256xf32, #tpu.memory_space<vmem>>, vector<1x256xf32>
    %21 = vector.broadcast %20 : vector<1x256xf32> to vector<8x256xf32>
    %22 = arith.addf %19, %21 : vector<8x256xf32>
    %cst_13 = arith.constant 0.000000e+00 : f32
    %23 = vector.broadcast %cst_13 : f32 to vector<8x256xf32>
    %24 = arith.maximumf %22, %23 : vector<8x256xf32>
    %25 = arith.truncf %24 : vector<8x256xf32> to vector<8x256xbf16>
    %26 = vector.extract_strided_slice %0 {offsets = [0, 384], sizes = [8, 256], strides = [1, 1]} : vector<8x1024xbf16> to vector<8x256xbf16>
    %cst_14 = arith.constant dense<0.000000e+00> : vector<8x256xf32>
    %27 = tpu.matmul %26, %1, %cst_14 {dimension_numbers = #tpu.dot_dimension_numbers<[1], [0], [0], [1], [0, 0, 1, 1], [], []>} : vector<8x256xbf16>, vector<256x256xbf16>, vector<8x256xf32> -> vector<8x256xf32>
    %c0_15 = arith.constant 0 : index
    %c0_16 = arith.constant 0 : index
    %28 = vector.load %arg3[%c0_15, %c0_16] : memref<1x256xf32, #tpu.memory_space<vmem>>, vector<1x256xf32>
    %29 = vector.broadcast %28 : vector<1x256xf32> to vector<8x256xf32>
    %30 = arith.addf %27, %29 : vector<8x256xf32>
    %cst_17 = arith.constant 0.000000e+00 : f32
    %31 = vector.broadcast %cst_17 : f32 to vector<8x256xf32>
    %32 = arith.maximumf %30, %31 : vector<8x256xf32>
    %33 = arith.truncf %32 : vector<8x256xf32> to vector<8x256xbf16>
    %34 = vector.extract_strided_slice %0 {offsets = [0, 512], sizes = [8, 256], strides = [1, 1]} : vector<8x1024xbf16> to vector<8x256xbf16>
    %cst_18 = arith.constant dense<0.000000e+00> : vector<8x256xf32>
    %35 = tpu.matmul %34, %1, %cst_18 {dimension_numbers = #tpu.dot_dimension_numbers<[1], [0], [0], [1], [0, 0, 1, 1], [], []>} : vector<8x256xbf16>, vector<256x256xbf16>, vector<8x256xf32> -> vector<8x256xf32>
    %c0_19 = arith.constant 0 : index
    %c0_20 = arith.constant 0 : index
    %36 = vector.load %arg3[%c0_19, %c0_20] : memref<1x256xf32, #tpu.memory_space<vmem>>, vector<1x256xf32>
    %37 = vector.broadcast %36 : vector<1x256xf32> to vector<8x256xf32>
    %38 = arith.addf %35, %37 : vector<8x256xf32>
    %cst_21 = arith.constant 0.000000e+00 : f32
    %39 = vector.broadcast %cst_21 : f32 to vector<8x256xf32>
    %40 = arith.maximumf %38, %39 : vector<8x256xf32>
    %41 = arith.truncf %40 : vector<8x256xf32> to vector<8x256xbf16>
    %42 = vector.extract_strided_slice %0 {offsets = [0, 640], sizes = [8, 256], strides = [1, 1]} : vector<8x1024xbf16> to vector<8x256xbf16>
    %cst_22 = arith.constant dense<0.000000e+00> : vector<8x256xf32>
    %43 = tpu.matmul %42, %1, %cst_22 {dimension_numbers = #tpu.dot_dimension_numbers<[1], [0], [0], [1], [0, 0, 1, 1], [], []>} : vector<8x256xbf16>, vector<256x256xbf16>, vector<8x256xf32> -> vector<8x256xf32>
    %c0_23 = arith.constant 0 : index
    %c0_24 = arith.constant 0 : index
    %44 = vector.load %arg3[%c0_23, %c0_24] : memref<1x256xf32, #tpu.memory_space<vmem>>, vector<1x256xf32>
    %45 = vector.broadcast %44 : vector<1x256xf32> to vector<8x256xf32>
    %46 = arith.addf %43, %45 : vector<8x256xf32>
    %cst_25 = arith.constant 0.000000e+00 : f32
    %47 = vector.broadcast %cst_25 : f32 to vector<8x256xf32>
    %48 = arith.maximumf %46, %47 : vector<8x256xf32>
    %49 = arith.truncf %48 : vector<8x256xf32> to vector<8x256xbf16>
    %50 = vector.extract_strided_slice %0 {offsets = [0, 768], sizes = [8, 256], strides = [1, 1]} : vector<8x1024xbf16> to vector<8x256xbf16>
    %cst_26 = arith.constant dense<0.000000e+00> : vector<8x256xf32>
    %51 = tpu.matmul %50, %1, %cst_26 {dimension_numbers = #tpu.dot_dimension_numbers<[1], [0], [0], [1], [0, 0, 1, 1], [], []>} : vector<8x256xbf16>, vector<256x256xbf16>, vector<8x256xf32> -> vector<8x256xf32>
    %c0_27 = arith.constant 0 : index
    %c0_28 = arith.constant 0 : index
    %52 = vector.load %arg3[%c0_27, %c0_28] : memref<1x256xf32, #tpu.memory_space<vmem>>, vector<1x256xf32>
    %53 = vector.broadcast %52 : vector<1x256xf32> to vector<8x256xf32>
    %54 = arith.addf %51, %53 : vector<8x256xf32>
    %cst_29 = arith.constant 0.000000e+00 : f32
    %55 = vector.broadcast %cst_29 : f32 to vector<8x256xf32>
    %56 = arith.maximumf %54, %55 : vector<8x256xf32>
    %57 = arith.truncf %56 : vector<8x256xf32> to vector<8x256xbf16>
    %58 = tpu.concatenate %9, %17, %25, %33, %41, %49, %57 in 1 : vector<8x256xbf16>, vector<8x256xbf16>, vector<8x256xbf16>, vector<8x256xbf16>, vector<8x256xbf16>, vector<8x256xbf16>, vector<8x256xbf16> -> vector<8x1792xbf16>
    %c0_30 = arith.constant 0 : index
    %c0_31 = arith.constant 0 : index
    %59 = vector.load %arg4[%c0_30, %c0_31] : memref<1792x128xbf16, #tpu.memory_space<vmem>>, vector<1792x128xbf16>
    %cst_32 = arith.constant dense<0.000000e+00> : vector<8x128xf32>
    %60 = tpu.matmul %58, %59, %cst_32 {dimension_numbers = #tpu.dot_dimension_numbers<[1], [0], [0], [1], [0, 0, 1, 1], [], []>} : vector<8x1792xbf16>, vector<1792x128xbf16>, vector<8x128xf32> -> vector<8x128xf32>
    %c0_33 = arith.constant 0 : index
    %c0_34 = arith.constant 0 : index
    %61 = vector.load %arg5[%c0_33, %c0_34] : memref<1x128xf32, #tpu.memory_space<vmem>>, vector<1x128xf32>
    %62 = vector.broadcast %61 : vector<1x128xf32> to vector<8x128xf32>
    %63 = arith.addf %60, %62 : vector<8x128xf32>
    %cst_35 = arith.constant 0.000000e+00 : f32
    %64 = vector.broadcast %cst_35 : f32 to vector<8x128xf32>
    %65 = arith.subf %64, %63 : vector<8x128xf32>
    %66 = math.exp %65 : vector<8x128xf32>
    %cst_36 = arith.constant 1.000000e+00 : f32
    %67 = vector.broadcast %cst_36 : f32 to vector<8x128xf32>
    %68 = arith.addf %67, %66 : vector<8x128xf32>
    %69 = tpu.reciprocal %68 {approx = true} : vector<8x128xf32> -> vector<8x128xf32>
    %70 = arith.truncf %69 : vector<8x128xf32> to vector<8x128xbf16>
    %c0_37 = arith.constant 0 : index
    %c0_38 = arith.constant 0 : index
    %71 = vector.load %arg6[%c0_37, %c0_38] : memref<128x1152xbf16, #tpu.memory_space<vmem>>, vector<128x1152xbf16>
    %cst_39 = arith.constant dense<0.000000e+00> : vector<8x1152xf32>
    %72 = tpu.matmul %70, %71, %cst_39 {dimension_numbers = #tpu.dot_dimension_numbers<[1], [0], [0], [1], [0, 0, 1, 1], [], []>} : vector<8x128xbf16>, vector<128x1152xbf16>, vector<8x1152xf32> -> vector<8x1152xf32>
    %c0_40 = arith.constant 0 : index
    %c0_41 = arith.constant 0 : index
    %73 = vector.load %arg7[%c0_40, %c0_41] : memref<1x1152xf32, #tpu.memory_space<vmem>>, vector<1x1152xf32>
    %74 = vector.broadcast %73 : vector<1x1152xf32> to vector<8x1152xf32>
    %75 = arith.addf %72, %74 : vector<8x1152xf32>
    %cst_42 = arith.constant 0.000000e+00 : f32
    %76 = vector.broadcast %cst_42 : f32 to vector<8x1152xf32>
    %77 = arith.maximumf %75, %76 : vector<8x1152xf32>
    %78 = arith.truncf %77 : vector<8x1152xf32> to vector<8x1152xbf16>
    %c0_43 = arith.constant 0 : index
    %c0_44 = arith.constant 0 : index
    %79 = vector.load %arg8[%c0_43, %c0_44] : memref<1152x512xbf16, #tpu.memory_space<vmem>>, vector<1152x512xbf16>
    %cst_45 = arith.constant dense<0.000000e+00> : vector<8x512xf32>
    %80 = tpu.matmul %78, %79, %cst_45 {dimension_numbers = #tpu.dot_dimension_numbers<[1], [0], [0], [1], [0, 0, 1, 1], [], []>} : vector<8x1152xbf16>, vector<1152x512xbf16>, vector<8x512xf32> -> vector<8x512xf32>
    %c0_46 = arith.constant 0 : index
    %c0_47 = arith.constant 0 : index
    %81 = vector.load %arg9[%c0_46, %c0_47] : memref<1x512xf32, #tpu.memory_space<vmem>>, vector<1x512xf32>
    %82 = vector.broadcast %81 : vector<1x512xf32> to vector<8x512xf32>
    %83 = arith.addf %80, %82 : vector<8x512xf32>
    %cst_48 = arith.constant 0.000000e+00 : f32
    %84 = vector.broadcast %cst_48 : f32 to vector<8x512xf32>
    %85 = arith.subf %84, %83 : vector<8x512xf32>
    %86 = math.exp %85 : vector<8x512xf32>
    %cst_49 = arith.constant 1.000000e+00 : f32
    %87 = vector.broadcast %cst_49 : f32 to vector<8x512xf32>
    %88 = arith.addf %87, %86 : vector<8x512xf32>
    %89 = tpu.reciprocal %88 {approx = true} : vector<8x512xf32> -> vector<8x512xf32>
    %90 = arith.truncf %89 : vector<8x512xf32> to vector<8x512xbf16>
    %c0_50 = arith.constant 0 : index
    %c0_51 = arith.constant 0 : index
    %91 = vector.load %arg10[%c0_50, %c0_51] : memref<8x512xbf16, #tpu.memory_space<vmem>>, vector<8x512xbf16>
    tpu.vector_store %arg10[%c0_50, %c0_51], %90 {strides = array<i32>} : memref<8x512xbf16, #tpu.memory_space<vmem>>, vector<8x512xbf16>,
    return
  }
  func.func @transform_0(%arg0: i32) -> (i32, i32) {
    %c0_i32 = arith.constant 0 : i32
    %c0_i32_0 = arith.constant 0 : i32
    return %arg0, %c0_i32 : i32, i32
  }
  func.func @transform_1(%arg0: i32) -> (i32, i32) {
    %c0_i32 = arith.constant 0 : i32
    %c0_i32_0 = arith.constant 0 : i32
    %c0_i32_1 = arith.constant 0 : i32
    return %c0_i32, %c0_i32_0 : i32, i32
  }
  func.func @transform_2(%arg0: i32) -> (i32, i32) {
    %c0_i32 = arith.constant 0 : i32
    %c0_i32_0 = arith.constant 0 : i32
    %c0_i32_1 = arith.constant 0 : i32
    return %c0_i32, %c0_i32_0 : i32, i32
  }
  func.func @transform_3(%arg0: i32) -> (i32, i32) {
    %c0_i32 = arith.constant 0 : i32
    %c0_i32_0 = arith.constant 0 : i32
    %c0_i32_1 = arith.constant 0 : i32
    return %c0_i32, %c0_i32_0 : i32, i32
  }
  func.func @transform_4(%arg0: i32) -> (i32, i32) {
    %c0_i32 = arith.constant 0 : i32
    %c0_i32_0 = arith.constant 0 : i32
    %c0_i32_1 = arith.constant 0 : i32
    return %c0_i32, %c0_i32_0 : i32, i32
  }
  func.func @transform_5(%arg0: i32) -> (i32, i32) {
    %c0_i32 = arith.constant 0 : i32
    %c0_i32_0 = arith.constant 0 : i32
    %c0_i32_1 = arith.constant 0 : i32
    return %c0_i32, %c0_i32_0 : i32, i32
  }
  func.func @transform_6(%arg0: i32) -> (i32, i32) {
    %c0_i32 = arith.constant 0 : i32
    %c0_i32_0 = arith.constant 0 : i32
    %c0_i32_1 = arith.constant 0 : i32
    return %c0_i32, %c0_i32_0 : i32, i32
  }
  func.func @transform_7(%arg0: i32) -> (i32, i32) {
    %c0_i32 = arith.constant 0 : i32
    %c0_i32_0 = arith.constant 0 : i32
    %c0_i32_1 = arith.constant 0 : i32
    return %c0_i32, %c0_i32_0 : i32, i32
  }
  func.func @transform_8(%arg0: i32) -> (i32, i32) {
    %c0_i32 = arith.constant 0 : i32
    %c0_i32_0 = arith.constant 0 : i32
    %c0_i32_1 = arith.constant 0 : i32
    return %c0_i32, %c0_i32_0 : i32, i32
  }
  func.func @transform_9(%arg0: i32) -> (i32, i32) {
    %c0_i32 = arith.constant 0 : i32
    %c0_i32_0 = arith.constant 0 : i32
    return %arg0, %c0_i32 : i32, i32
  }
}

</mosaic_0001>

<llo_original>
// kernel: forward.1
$region0: #{forward.1}
  #allocation0 [shape = 'u32[]', space=smem, size = 0x4, offset = 0x4, fixed_abs, tag = 'smem constant byte address 0x4 - core index']
  #allocation1 [shape = 'u32[144,128]{1,0:T(1,128)}', space=vmem, size = 0x12000, scoped, tag = 'internal scratch']
  %s0 = inlined_call_operand.vmem [shape: bf16[8,1024], index: 0, kind: input, shape index: {}]
  %s1 = inlined_call_operand.vmem [shape: bf16[256,256], index: 1, kind: input, shape index: {}]
  %s2 = inlined_call_operand.vmem [shape: f32[1,256], index: 2, kind: input, shape index: {}]
  %s3 = inlined_call_operand.vmem [shape: bf16[1792,128], index: 3, kind: input, shape index: {}]
  %s4 = inlined_call_operand.vmem [shape: f32[1,128], index: 4, kind: input, shape index: {}]
  %s5 = inlined_call_operand.vmem [shape: bf16[128,1152], index: 5, kind: input, shape index: {}]
  %s6 = inlined_call_operand.vmem [shape: f32[1,1152], index: 6, kind: input, shape index: {}]
  %s7 = inlined_call_operand.vmem [shape: bf16[1152,512], index: 7, kind: input, shape index: {}]
  %s8 = inlined_call_operand.vmem [shape: f32[1,512], index: 8, kind: input, shape index: {}]
  %s9 = inlined_call_operand.vmem [shape: bf16[8,512], index: 9, kind: output, shape index: {}]
  %s10 = sld [smem:[#allocation0]]
  $region46: #{forward.1} parent=0
    _
  %s12 = ssub.s32 1, %s10
  %s13 = scalar_select 0, %s12, %s10
  // Predicated region
  $region2: #{forward.1} parent=0 // pred_check
    _
  $region3: #{forward.1} parent=0 // pred_check_branch
    %15 = sbr.rel (0) target = $region5
  $region4: #{forward.1} parent=0 // pred_region
    _
  $region5: #{forward.1} parent=0 // pred_fallthru
    _
  // Predicated region
  $region6: #{forward.1} parent=0 // pred_check
    _
  $region7: #{forward.1} parent=0 // pred_check_branch
    %17 = sbr.rel (0) target = $region9
  $region8: #{forward.1} parent=0 // pred_region
    _
  $region9: #{forward.1} parent=0 // pred_fallthru
    _
  // Predicated region
  $region10: #{forward.1} parent=0 // pred_check
    _
  $region11: #{forward.1} parent=0 // pred_check_branch
    %19 = sbr.rel (0) target = $region13
  $region12: #{forward.1} parent=0 // pred_region
    _
  $region13: #{forward.1} parent=0 // pred_fallthru
    _
  // Predicated region
  $region14: #{forward.1} parent=0 // pred_check
    _
  $region15: #{forward.1} parent=0 // pred_check_branch
    %21 = sbr.rel (0) target = $region17
  $region16: #{forward.1} parent=0 // pred_region
    _
  $region17: #{forward.1} parent=0 // pred_fallthru
    _
  // Predicated region
  $region18: #{forward.1} parent=0 // pred_check
    _
  $region19: #{forward.1} parent=0 // pred_check_branch
    %23 = sbr.rel (0) target = $region21
  $region20: #{forward.1} parent=0 // pred_region
    _
  $region21: #{forward.1} parent=0 // pred_fallthru
    _
  // Predicated region
  $region22: #{forward.1} parent=0 // pred_check
    _
  $region23: #{forward.1} parent=0 // pred_check_branch
    %25 = sbr.rel (0) target = $region25
  $region24: #{forward.1} parent=0 // pred_region
    _
  $region25: #{forward.1} parent=0 // pred_fallthru
    _
  // Predicated region
  $region26: #{forward.1} parent=0 // pred_check
    _
  $region27: #{forward.1} parent=0 // pred_check_branch
    %27 = sbr.rel (0) target = $region29
  $region28: #{forward.1} parent=0 // pred_region
    _
  $region29: #{forward.1} parent=0 // pred_fallthru
    _
  // Predicated region
  $region30: #{forward.1} parent=0 // pred_check
    _
  $region31: #{forward.1} parent=0 // pred_check_branch
    %29 = sbr.rel (0) target = $region33
  $region32: #{forward.1} parent=0 // pred_region
    _
  $region33: #{forward.1} parent=0 // pred_fallthru
    _
  // Predicated region
  $region34: #{forward.1} parent=0 // pred_check
    _
  $region35: #{forward.1} parent=0 // pred_check_branch
    %31 = sbr.rel (0) target = $region37
  $region36: #{forward.1} parent=0 // pred_region
    _
  $region37: #{forward.1} parent=0 // pred_fallthru
    _
  %v33 = vld [vmem:[%s0] sm:$0xff]
  %v34 = vld [vmem:[%s0 + $0x8] sm:$0xff]
  %v35 = vld [vmem:[%s0 + $0x10] sm:$0xff]
  %v36 = vld [vmem:[%s0 + $0x18] sm:$0xff]
  %v37 = vld [vmem:[%s1] sm:$0xff]
  %v38 = vld [vmem:[%s1 + $0x8] sm:$0xff]
  %v39 = vld [vmem:[%s1 + $0x10] sm:$0xff]
  %v40 = vld [vmem:[%s1 + $0x18] sm:$0xff]
  %v41 = vld [vmem:[%s1 + $0x20] sm:$0xff]
  %v42 = vld [vmem:[%s1 + $0x28] sm:$0xff]
  %v43 = vld [vmem:[%s1 + $0x30] sm:$0xff]
  %v44 = vld [vmem:[%s1 + $0x38] sm:$0xff]
  %v45 = vld [vmem:[%s1 + $0x40] sm:$0xff]
  %v46 = vld [vmem:[%s1 + $0x48] sm:$0xff]
  %v47 = vld [vmem:[%s1 + $0x50] sm:$0xff]
  %v48 = vld [vmem:[%s1 + $0x58] sm:$0xff]
  %v49 = vld [vmem:[%s1 + $0x60] sm:$0xff]
  %v50 = vld [vmem:[%s1 + $0x68] sm:$0xff]
  %v51 = vld [vmem:[%s1 + $0x70] sm:$0xff]
  %v52 = vld [vmem:[%s1 + $0x78] sm:$0xff]
  %v53 = vld [vmem:[%s1 + $0x80] sm:$0xff]
  %v54 = vld [vmem:[%s1 + $0x88] sm:$0xff]
  %v55 = vld [vmem:[%s1 + $0x90] sm:$0xff]
  %v56 = vld [vmem:[%s1 + $0x98] sm:$0xff]
  %v57 = vld [vmem:[%s1 + $0xa0] sm:$0xff]
  %v58 = vld [vmem:[%s1 + $0xa8] sm:$0xff]
  %v59 = vld [vmem:[%s1 + $0xb0] sm:$0xff]
  %v60 = vld [vmem:[%s1 + $0xb8] sm:$0xff]
  %v61 = vld [vmem:[%s1 + $0xc0] sm:$0xff]
  %v62 = vld [vmem:[%s1 + $0xc8] sm:$0xff]
  %v63 = vld [vmem:[%s1 + $0xd0] sm:$0xff]
  %v64 = vld [vmem:[%s1 + $0xd8] sm:$0xff]
  %v65 = vld [vmem:[%s1 + $0xe0] sm:$0xff]
  %v66 = vld [vmem:[%s1 + $0xe8] sm:$0xff]
  %v67 = vld [vmem:[%s1 + $0xf0] sm:$0xff]
  %v68 = vld [vmem:[%s1 + $0xf8] sm:$0xff]
  %v69 = vld [vmem:[%s2] sm:$0x3]
  %v71 = vlaneseq
  %v72 = vshrl.u32 %v71, 7
  %v73 = vsub.s32 0, %v72
  %v74 = vrot.slane %v69, %v73
  %v75 = vlaneseq
  %v76 = vshrl.u32 %v75, 7
  %v77 = vsub.s32 1, %v76
  %v78 = vrot.slane %v69, %v77
  %v82 = vunpack.c.l.b16 %v33
  %v83 = vunpack.c.h.b16 %v33
  %v84 = vpack.c.b16 %v82, %v82
  %v85 = vpack.c.b16 %v83, %v83
  %v120 = vunpack.c.l.b16 %v37
  %v121 = vunpack.c.h.b16 %v37
  %v122 = vunpack.c.l.b16 %v38
  %v123 = vunpack.c.h.b16 %v38
  %v124 = vunpack.c.l.b16 %v39
  %v125 = vunpack.c.h.b16 %v39
  %v126 = vunpack.c.l.b16 %v40
  %v127 = vunpack.c.h.b16 %v40
  %v128 = vunpack.c.l.b16 %v41
  %v129 = vunpack.c.h.b16 %v41
  %v130 = vunpack.c.l.b16 %v42
  %v131 = vunpack.c.h.b16 %v42
  %v132 = vunpack.c.l.b16 %v43
  %v133 = vunpack.c.h.b16 %v43
  %v134 = vunpack.c.l.b16 %v44
  %v135 = vunpack.c.h.b16 %v44
  %v136 = vunpack.c.l.b16 %v45
  %v137 = vunpack.c.h.b16 %v45
  %v138 = vunpack.c.l.b16 %v46
  %v139 = vunpack.c.h.b16 %v46
  %v140 = vunpack.c.l.b16 %v47
  %v141 = vunpack.c.h.b16 %v47
  %v142 = vunpack.c.l.b16 %v48
  %v143 = vunpack.c.h.b16 %v48
  %v144 = vunpack.c.l.b16 %v49
  %v145 = vunpack.c.h.b16 %v49
  %v146 = vunpack.c.l.b16 %v50
  %v147 = vunpack.c.h.b16 %v50
  %v148 = vunpack.c.l.b16 %v51
  %v149 = vunpack.c.h.b16 %v51
  %v150 = vunpack.c.l.b16 %v52
  %v151 = vunpack.c.h.b16 %v52
  %v152 = vunpack.c.l.b16 %v53
  %v153 = vunpack.c.h.b16 %v53
  %v154 = vunpack.c.l.b16 %v54
  %v155 = vunpack.c.h.b16 %v54
  %v156 = vunpack.c.l.b16 %v55
  %v157 = vunpack.c.h.b16 %v55
  %v158 = vunpack.c.l.b16 %v56
  %v159 = vunpack.c.h.b16 %v56
  %v160 = vunpack.c.l.b16 %v57
  %v161 = vunpack.c.h.b16 %v57
  %v162 = vunpack.c.l.b16 %v58
  %v163 = vunpack.c.h.b16 %v58
  %v164 = vunpack.c.l.b16 %v59
  %v165 = vunpack.c.h.b16 %v59
  %v166 = vunpack.c.l.b16 %v60
  %v167 = vunpack.c.h.b16 %v60
  %v168 = vunpack.c.l.b16 %v61
  %v169 = vunpack.c.h.b16 %v61
  %v170 = vunpack.c.l.b16 %v62
  %v171 = vunpack.c.h.b16 %v62
  %v172 = vunpack.c.l.b16 %v63
  %v173 = vunpack.c.h.b16 %v63
  %v174 = vunpack.c.l.b16 %v64
  %v175 = vunpack.c.h.b16 %v64
  %v176 = vunpack.c.l.b16 %v65
  %v177 = vunpack.c.h.b16 %v65
  %v178 = vunpack.c.l.b16 %v66
  %v179 = vunpack.c.h.b16 %v66
  %v180 = vunpack.c.l.b16 %v67
  %v181 = vunpack.c.h.b16 %v67
  %v182 = vunpack.c.l.b16 %v68
  %v183 = vunpack.c.h.b16 %v68
  %v184 = vpack.c.b16 %v122, %v120
  %v185 = vpack.c.b16 %v123, %v121
  %v186 = vpack.c.b16 %v126, %v124
  %v187 = vpack.c.b16 %v127, %v125
  %v188 = vpack.c.b16 %v130, %v128
  %v189 = vpack.c.b16 %v131, %v129
  %v190 = vpack.c.b16 %v134, %v132
  %v191 = vpack.c.b16 %v135, %v133
  %v192 = vpack.c.b16 %v138, %v136
  %v193 = vpack.c.b16 %v139, %v137
  %v194 = vpack.c.b16 %v142, %v140
  %v195 = vpack.c.b16 %v143, %v141
  %v196 = vpack.c.b16 %v146, %v144
  %v197 = vpack.c.b16 %v147, %v145
  %v198 = vpack.c.b16 %v150, %v148
  %v199 = vpack.c.b16 %v151, %v149
  %v200 = vpack.c.b16 %v154, %v152
  %v201 = vpack.c.b16 %v155, %v153
  %v202 = vpack.c.b16 %v158, %v156
  %v203 = vpack.c.b16 %v159, %v157
  %v204 = vpack.c.b16 %v162, %v160
  %v205 = vpack.c.b16 %v163, %v161
  %v206 = vpack.c.b16 %v166, %v164
  %v207 = vpack.c.b16 %v167, %v165
  %v208 = vpack.c.b16 %v170, %v168
  %v209 = vpack.c.b16 %v171, %v169
  %v210 = vpack.c.b16 %v174, %v172
  %v211 = vpack.c.b16 %v175, %v173
  %v212 = vpack.c.b16 %v178, %v176
  %v213 = vpack.c.b16 %v179, %v177
  %v214 = vpack.c.b16 %v182, %v180
  %v215 = vpack.c.b16 %v183, %v181
  %248 = vmatprep.subr.bf16.mxu0 %v185
  %249 = vmatpush1.bf16.msra.mxu0 %v184
  %250 = vmatprep.subr.bf16.mxu0 %v187
  %251 = vmatpush1.bf16.msra.mxu0 %v186
  %252 = vmatprep.subr.bf16.mxu0 %v189
  %253 = vmatpush1.bf16.msra.mxu0 %v188
  %254 = vmatprep.subr.bf16.mxu0 %v191
  %255 = vmatpush1.bf16.msra.mxu0 %v190
  %256 = vmatprep.subr.bf16.mxu0 %v193
  %257 = vmatpush1.bf16.msra.mxu0 %v192
  %258 = vmatprep.subr.bf16.mxu0 %v195
  %259 = vmatpush1.bf16.msra.mxu0 %v194
  %260 = vmatprep.subr.bf16.mxu0 %v197
  %261 = vmatpush1.bf16.msra.mxu0 %v196
  %262 = vmatprep.subr.bf16.mxu0 %v199
  %263 = vmatpush1.bf16.msra.mxu0 %v198
  %264 = vmatprep.subr.bf16.mxu0 %v201
  %265 = vmatpush1.bf16.msra.mxu0 %v200
  %266 = vmatprep.subr.bf16.mxu0 %v203
  %267 = vmatpush1.bf16.msra.mxu0 %v202
  %268 = vmatprep.subr.bf16.mxu0 %v205
  %269 = vmatpush1.bf16.msra.mxu0 %v204
  %270 = vmatprep.subr.bf16.mxu0 %v207
  %271 = vmatpush1.bf16.msra.mxu0 %v206
  %272 = vmatprep.subr.bf16.mxu0 %v209
  %273 = vmatpush1.bf16.msra.mxu0 %v208
  %274 = vmatprep.subr.bf16.mxu0 %v211
  %275 = vmatpush1.bf16.msra.mxu0 %v210
  %276 = vmatprep.subr.bf16.mxu0 %v213
  %277 = vmatpush1.bf16.msra.mxu0 %v212
  %278 = vmatprep.subr.bf16.mxu0 %v215
  %279 = vmatpush1.bf16.msra.mxu0 %v214
  %280 = vmatprep.mubr.bf16.mxu0 %v85
  %281 = vmatmul.mubr.bf16.gmra.mrb[0].mxu0 %v84
  %v282 = vpop.f32.mrb[0].mxu0
  %v283 = vadd.f32 %v74, %v282
  %v284 = vpop.f32.mrb[0].mxu0
  %v285 = vadd.f32 %v78, %v284
  %v286 = vpop.f32.mrb[0].mxu0
  %v287 = vpop.f32.mrb[0].mxu0
  %288 = vdwg.mxu0
  %v289 = vmax.f32 %v283, 0.0
  %v290 = vmax.f32 %v285, 0.0
  %v291 = vpack.c.bf16 %v289, %v289
  %v292 = vpack.c.bf16 %v290, %v290
  %v294 = vunpack.c.l.b16 %v34
  %v295 = vpack.c.b16 %v294, %v294
  %297 = vmatprep.subr.bf16.mxu0 %v185
  %298 = vmatpush1.bf16.msra.mxu0 %v184
  %299 = vmatprep.subr.bf16.mxu0 %v187
  %300 = vmatpush1.bf16.msra.mxu0 %v186
  %301 = vmatprep.subr.bf16.mxu0 %v189
  %302 = vmatpush1.bf16.msra.mxu0 %v188
  %303 = vmatprep.subr.bf16.mxu0 %v191
  %304 = vmatpush1.bf16.msra.mxu0 %v190
  %305 = vmatprep.subr.bf16.mxu0 %v193
  %306 = vmatpush1.bf16.msra.mxu0 %v192
  %307 = vmatprep.subr.bf16.mxu0 %v195
  %308 = vmatpush1.bf16.msra.mxu0 %v194
  %309 = vmatprep.subr.bf16.mxu0 %v197
  %310 = vmatpush1.bf16.msra.mxu0 %v196
  %311 = vmatprep.subr.bf16.mxu0 %v199
  %312 = vmatpush1.bf16.msra.mxu0 %v198
  %313 = vmatprep.subr.bf16.mxu0 %v201
  %314 = vmatpush1.bf16.msra.mxu0 %v200
  %315 = vmatprep.subr.bf16.mxu0 %v203
  %316 = vmatpush1.bf16.msra.mxu0 %v202
  %317 = vmatprep.subr.bf16.mxu0 %v205
  %318 = vmatpush1.bf16.msra.mxu0 %v204
  %319 = vmatprep.subr.bf16.mxu0 %v207
  %320 = vmatpush1.bf16.msra.mxu0 %v206
  %321 = vmatprep.subr.bf16.mxu0 %v209
  %322 = vmatpush1.bf16.msra.mxu0 %v208
  %323 = vmatprep.subr.bf16.mxu0 %v211
  %324 = vmatpush1.bf16.msra.mxu0 %v210
  %325 = vmatprep.subr.bf16.mxu0 %v213
  %326 = vmatpush1.bf16.msra.mxu0 %v212
  %327 = vmatprep.subr.bf16.mxu0 %v215
  %328 = vmatpush1.bf16.msra.mxu0 %v214
  %329 = vmatprep.mubr.bf16.mxu0 %v295
  %330 = vmatmul.mubr.bf16.gmra.mrb[0].mxu0 %v85
  %v331 = vpop.f32.mrb[0].mxu0
  %v332 = vadd.f32 %v74, %v331
  %v333 = vpop.f32.mrb[0].mxu0
  %v334 = vadd.f32 %v78, %v333
  %v335 = vpop.f32.mrb[0].mxu0
  %v336 = vpop.f32.mrb[0].mxu0
  %337 = vdwg.mxu0
  %v338 = vmax.f32 %v332, 0.0
  %v339 = vmax.f32 %v334, 0.0
  %v340 = vpack.c.bf16 %v338, %v338
  %v341 = vpack.c.bf16 %v339, %v339
  %v342 = vunpack.c.h.b16 %v34
  %v343 = vpack.c.b16 %v342, %v342
  %345 = vmatprep.subr.bf16.mxu0 %v185
  %346 = vmatpush1.bf16.msra.mxu0 %v184
  %347 = vmatprep.subr.bf16.mxu0 %v187
  %348 = vmatpush1.bf16.msra.mxu0 %v186
  %349 = vmatprep.subr.bf16.mxu0 %v189
  %350 = vmatpush1.bf16.msra.mxu0 %v188
  %351 = vmatprep.subr.bf16.mxu0 %v191
  %352 = vmatpush1.bf16.msra.mxu0 %v190
  %353 = vmatprep.subr.bf16.mxu0 %v193
  %354 = vmatpush1.bf16.msra.mxu0 %v192
  %355 = vmatprep.subr.bf16.mxu0 %v195
  %356 = vmatpush1.bf16.msra.mxu0 %v194
  %357 = vmatprep.subr.bf16.mxu0 %v197
  %358 = vmatpush1.bf16.msra.mxu0 %v196
  %359 = vmatprep.subr.bf16.mxu0 %v199
  %360 = vmatpush1.bf16.msra.mxu0 %v198
  %361 = vmatprep.subr.bf16.mxu0 %v201
  %362 = vmatpush1.bf16.msra.mxu0 %v200
  %363 = vmatprep.subr.bf16.mxu0 %v203
  %364 = vmatpush1.bf16.msra.mxu0 %v202
  %365 = vmatprep.subr.bf16.mxu0 %v205
  %366 = vmatpush1.bf16.msra.mxu0 %v204
  %367 = vmatprep.subr.bf16.mxu0 %v207
  %368 = vmatpush1.bf16.msra.mxu0 %v206
  %369 = vmatprep.subr.bf16.mxu0 %v209
  %370 = vmatpush1.bf16.msra.mxu0 %v208
  %371 = vmatprep.subr.bf16.mxu0 %v211
  %372 = vmatpush1.bf16.msra.mxu0 %v210
  %373 = vmatprep.subr.bf16.mxu0 %v213
  %374 = vmatpush1.bf16.msra.mxu0 %v212
  %375 = vmatprep.subr.bf16.mxu0 %v215
  %376 = vmatpush1.bf16.msra.mxu0 %v214
  %377 = vmatprep.mubr.bf16.mxu0 %v343
  %378 = vmatmul.mubr.bf16.gmra.mrb[0].mxu0 %v295
  %v379 = vpop.f32.mrb[0].mxu0
  %v380 = vadd.f32 %v74, %v379
  %v381 = vpop.f32.mrb[0].mxu0
  %v382 = vadd.f32 %v78, %v381
  %v383 = vpop.f32.mrb[0].mxu0
  %v384 = vpop.f32.mrb[0].mxu0
  %385 = vdwg.mxu0
  %v386 = vmax.f32 %v380, 0.0
  %v387 = vmax.f32 %v382, 0.0
  %v388 = vpack.c.bf16 %v386, %v386
  %v389 = vpack.c.bf16 %v387, %v387
  %v391 = vunpack.c.l.b16 %v35
  %v392 = vpack.c.b16 %v391, %v391
  %394 = vmatprep.subr.bf16.mxu0 %v185
  %395 = vmatpush1.bf16.msra.mxu0 %v184
  %396 = vmatprep.subr.bf16.mxu0 %v187
  %397 = vmatpush1.bf16.msra.mxu0 %v186
  %398 = vmatprep.subr.bf16.mxu0 %v189
  %399 = vmatpush1.bf16.msra.mxu0 %v188
  %400 = vmatprep.subr.bf16.mxu0 %v191
  %401 = vmatpush1.bf16.msra.mxu0 %v190
  %402 = vmatprep.subr.bf16.mxu0 %v193
  %403 = vmatpush1.bf16.msra.mxu0 %v192
  %404 = vmatprep.subr.bf16.mxu0 %v195
  %405 = vmatpush1.bf16.msra.mxu0 %v194
  %406 = vmatprep.subr.bf16.mxu0 %v197
  %407 = vmatpush1.bf16.msra.mxu0 %v196
  %408 = vmatprep.subr.bf16.mxu0 %v199
  %409 = vmatpush1.bf16.msra.mxu0 %v198
  %410 = vmatprep.subr.bf16.mxu0 %v201
  %411 = vmatpush1.bf16.msra.mxu0 %v200
  %412 = vmatprep.subr.bf16.mxu0 %v203
  %413 = vmatpush1.bf16.msra.mxu0 %v202
  %414 = vmatprep.subr.bf16.mxu0 %v205
  %415 = vmatpush1.bf16.msra.mxu0 %v204
  %416 = vmatprep.subr.bf16.mxu0 %v207
  %417 = vmatpush1.bf16.msra.mxu0 %v206
  %418 = vmatprep.subr.bf16.mxu0 %v209
  %419 = vmatpush1.bf16.msra.mxu0 %v208
  %420 = vmatprep.subr.bf16.mxu0 %v211
  %421 = vmatpush1.bf16.msra.mxu0 %v210
  %422 = vmatprep.subr.bf16.mxu0 %v213
  %423 = vmatpush1.bf16.msra.mxu0 %v212
  %424 = vmatprep.subr.bf16.mxu0 %v215
  %425 = vmatpush1.bf16.msra.mxu0 %v214
  %426 = vmatprep.mubr.bf16.mxu0 %v392
  %427 = vmatmul.mubr.bf16.gmra.mrb[0].mxu0 %v343
  %v428 = vpop.f32.mrb[0].mxu0
  %v429 = vadd.f32 %v74, %v428
  %v430 = vpop.f32.mrb[0].mxu0
  %v431 = vadd.f32 %v78, %v430
  %v432 = vpop.f32.mrb[0].mxu0
  %v433 = vpop.f32.mrb[0].mxu0
  %434 = vdwg.mxu0
  %v435 = vmax.f32 %v429, 0.0
  %v436 = vmax.f32 %v431, 0.0
  %v437 = vpack.c.bf16 %v435, %v435
  %v438 = vpack.c.bf16 %v436, %v436
  %v439 = vunpack.c.h.b16 %v35
  %v440 = vpack.c.b16 %v439, %v439
  %442 = vmatprep.subr.bf16.mxu0 %v185
  %443 = vmatpush1.bf16.msra.mxu0 %v184
  %444 = vmatprep.subr.bf16.mxu0 %v187
  %445 = vmatpush1.bf16.msra.mxu0 %v186
  %446 = vmatprep.subr.bf16.mxu0 %v189
  %447 = vmatpush1.bf16.msra.mxu0 %v188
  %448 = vmatprep.subr.bf16.mxu0 %v191
  %449 = vmatpush1.bf16.msra.mxu0 %v190
  %450 = vmatprep.subr.bf16.mxu0 %v193
  %451 = vmatpush1.bf16.msra.mxu0 %v192
  %452 = vmatprep.subr.bf16.mxu0 %v195
  %453 = vmatpush1.bf16.msra.mxu0 %v194
  %454 = vmatprep.subr.bf16.mxu0 %v197
  %455 = vmatpush1.bf16.msra.mxu0 %v196
  %456 = vmatprep.subr.bf16.mxu0 %v199
  %457 = vmatpush1.bf16.msra.mxu0 %v198
  %458 = vmatprep.subr.bf16.mxu0 %v201
  %459 = vmatpush1.bf16.msra.mxu0 %v200
  %460 = vmatprep.subr.bf16.mxu0 %v203
  %461 = vmatpush1.bf16.msra.mxu0 %v202
  %462 = vmatprep.subr.bf16.mxu0 %v205
  %463 = vmatpush1.bf16.msra.mxu0 %v204
  %464 = vmatprep.subr.bf16.mxu0 %v207
  %465 = vmatpush1.bf16.msra.mxu0 %v206
  %466 = vmatprep.subr.bf16.mxu0 %v209
  %467 = vmatpush1.bf16.msra.mxu0 %v208
  %468 = vmatprep.subr.bf16.mxu0 %v211
  %469 = vmatpush1.bf16.msra.mxu0 %v210
  %470 = vmatprep.subr.bf16.mxu0 %v213
  %471 = vmatpush1.bf16.msra.mxu0 %v212
  %472 = vmatprep.subr.bf16.mxu0 %v215
  %473 = vmatpush1.bf16.msra.mxu0 %v214
  %474 = vmatprep.mubr.bf16.mxu0 %v440
  %475 = vmatmul.mubr.bf16.gmra.mrb[0].mxu0 %v392
  %v476 = vpop.f32.mrb[0].mxu0
  %v477 = vadd.f32 %v74, %v476
  %v478 = vpop.f32.mrb[0].mxu0
  %v479 = vadd.f32 %v78, %v478
  %v480 = vpop.f32.mrb[0].mxu0
  %v481 = vpop.f32.mrb[0].mxu0
  %482 = vdwg.mxu0
  %v483 = vmax.f32 %v477, 0.0
  %v484 = vmax.f32 %v479, 0.0
  %v485 = vpack.c.bf16 %v483, %v483
  %v486 = vpack.c.bf16 %v484, %v484
  %v488 = vunpack.c.l.b16 %v36
  %v489 = vpack.c.b16 %v488, %v488
  %491 = vmatprep.subr.bf16.mxu0 %v185
  %492 = vmatpush1.bf16.msra.mxu0 %v184
  %493 = vmatprep.subr.bf16.mxu0 %v187
  %494 = vmatpush1.bf16.msra.mxu0 %v186
  %495 = vmatprep.subr.bf16.mxu0 %v189
  %496 = vmatpush1.bf16.msra.mxu0 %v188
  %497 = vmatprep.subr.bf16.mxu0 %v191
  %498 = vmatpush1.bf16.msra.mxu0 %v190
  %499 = vmatprep.subr.bf16.mxu0 %v193
  %500 = vmatpush1.bf16.msra.mxu0 %v192
  %501 = vmatprep.subr.bf16.mxu0 %v195
  %502 = vmatpush1.bf16.msra.mxu0 %v194
  %503 = vmatprep.subr.bf16.mxu0 %v197
  %504 = vmatpush1.bf16.msra.mxu0 %v196
  %505 = vmatprep.subr.bf16.mxu0 %v199
  %506 = vmatpush1.bf16.msra.mxu0 %v198
  %507 = vmatprep.subr.bf16.mxu0 %v201
  %508 = vmatpush1.bf16.msra.mxu0 %v200
  %509 = vmatprep.subr.bf16.mxu0 %v203
  %510 = vmatpush1.bf16.msra.mxu0 %v202
  %511 = vmatprep.subr.bf16.mxu0 %v205
  %512 = vmatpush1.bf16.msra.mxu0 %v204
  %513 = vmatprep.subr.bf16.mxu0 %v207
  %514 = vmatpush1.bf16.msra.mxu0 %v206
  %515 = vmatprep.subr.bf16.mxu0 %v209
  %516 = vmatpush1.bf16.msra.mxu0 %v208
  %517 = vmatprep.subr.bf16.mxu0 %v211
  %518 = vmatpush1.bf16.msra.mxu0 %v210
  %519 = vmatprep.subr.bf16.mxu0 %v213
  %520 = vmatpush1.bf16.msra.mxu0 %v212
  %521 = vmatprep.subr.bf16.mxu0 %v215
  %522 = vmatpush1.bf16.msra.mxu0 %v214
  %523 = vmatprep.mubr.bf16.mxu0 %v489
  %524 = vmatmul.mubr.bf16.gmra.mrb[0].mxu0 %v440
  %v525 = vpop.f32.mrb[0].mxu0
  %v526 = vadd.f32 %v74, %v525
  %v527 = vpop.f32.mrb[0].mxu0
  %v528 = vadd.f32 %v78, %v527
  %v529 = vpop.f32.mrb[0].mxu0
  %v530 = vpop.f32.mrb[0].mxu0
  %531 = vdwg.mxu0
  %v532 = vmax.f32 %v526, 0.0
  %v533 = vmax.f32 %v528, 0.0
  %v534 = vpack.c.bf16 %v532, %v532
  %v535 = vpack.c.bf16 %v533, %v533
  %v536 = vunpack.c.h.b16 %v36
  %v537 = vpack.c.b16 %v536, %v536
  %539 = vmatprep.subr.bf16.mxu0 %v185
  %540 = vmatpush1.bf16.msra.mxu0 %v184
  %541 = vmatprep.subr.bf16.mxu0 %v187
  %542 = vmatpush1.bf16.msra.mxu0 %v186
  %543 = vmatprep.subr.bf16.mxu0 %v189
  %544 = vmatpush1.bf16.msra.mxu0 %v188
  %545 = vmatprep.subr.bf16.mxu0 %v191
  %546 = vmatpush1.bf16.msra.mxu0 %v190
  %547 = vmatprep.subr.bf16.mxu0 %v193
  %548 = vmatpush1.bf16.msra.mxu0 %v192
  %549 = vmatprep.subr.bf16.mxu0 %v195
  %550 = vmatpush1.bf16.msra.mxu0 %v194
  %551 = vmatprep.subr.bf16.mxu0 %v197
  %552 = vmatpush1.bf16.msra.mxu0 %v196
  %553 = vmatprep.subr.bf16.mxu0 %v199
  %554 = vmatpush1.bf16.msra.mxu0 %v198
  %555 = vmatprep.subr.bf16.mxu0 %v201
  %556 = vmatpush1.bf16.msra.mxu0 %v200
  %557 = vmatprep.subr.bf16.mxu0 %v203
  %558 = vmatpush1.bf16.msra.mxu0 %v202
  %559 = vmatprep.subr.bf16.mxu0 %v205
  %560 = vmatpush1.bf16.msra.mxu0 %v204
  %561 = vmatprep.subr.bf16.mxu0 %v207
  %562 = vmatpush1.bf16.msra.mxu0 %v206
  %563 = vmatprep.subr.bf16.mxu0 %v209
  %564 = vmatpush1.bf16.msra.mxu0 %v208
  %565 = vmatprep.subr.bf16.mxu0 %v211
  %566 = vmatpush1.bf16.msra.mxu0 %v210
  %567 = vmatprep.subr.bf16.mxu0 %v213
  %568 = vmatpush1.bf16.msra.mxu0 %v212
  %569 = vmatprep.subr.bf16.mxu0 %v215
  %570 = vmatpush1.bf16.msra.mxu0 %v214
  %571 = vmatprep.mubr.bf16.mxu0 %v537
  %572 = vmatmul.mubr.bf16.gmra.mrb[0].mxu0 %v489
  %v573 = vpop.f32.mrb[0].mxu0
  %v574 = vadd.f32 %v74, %v573
  %v575 = vpop.f32.mrb[0].mxu0
  %v576 = vadd.f32 %v78, %v575
  %v577 = vpop.f32.mrb[0].mxu0
  %v578 = vpop.f32.mrb[0].mxu0
  %579 = vdwg.mxu0
  %v580 = vmax.f32 %v574, 0.0
  %v581 = vmax.f32 %v576, 0.0
  %v582 = vpack.c.bf16 %v580, %v580
  %v583 = vpack.c.bf16 %v581, %v581
  %v584 = vld [vmem:[%s3] sm:$0xf]
  %v585 = vld [vmem:[%s3 + $0x4] sm:$0xf]
  %v586 = vld [vmem:[%s3 + $0x8] sm:$0xf]
  %v587 = vld [vmem:[%s3 + $0xc] sm:$0xf]
  %v588 = vld [vmem:[%s3 + $0x10] sm:$0xf]
  %v589 = vld [vmem:[%s3 + $0x14] sm:$0xf]
  %v590 = vld [vmem:[%s3 + $0x18] sm:$0xf]
  %v591 = vld [vmem:[%s3 + $0x1c] sm:$0xf]
  %v592 = vld [vmem:[%s3 + $0x20] sm:$0xf]
  %v593 = vld [vmem:[%s3 + $0x24] sm:$0xf]
  %v594 = vld [vmem:[%s3 + $0x28] sm:$0xf]
  %v595 = vld [vmem:[%s3 + $0x2c] sm:$0xf]
  %v596 = vld [vmem:[%s3 + $0x30] sm:$0xf]
  %v597 = vld [vmem:[%s3 + $0x34] sm:$0xf]
  %v598 = vld [vmem:[%s3 + $0x38] sm:$0xf]
  %v599 = vld [vmem:[%s3 + $0x3c] sm:$0xf]
  %v600 = vld [vmem:[%s3 + $0x40] sm:$0xf]
  %v601 = vld [vmem:[%s3 + $0x44] sm:$0xf]
  %v602 = vld [vmem:[%s3 + $0x48] sm:$0xf]
  %v603 = vld [vmem:[%s3 + $0x4c] sm:$0xf]
  %v604 = vld [vmem:[%s3 + $0x50] sm:$0xf]
  %v605 = vld [vmem:[%s3 + $0x54] sm:$0xf]
  %v606 = vld [vmem:[%s3 + $0x58] sm:$0xf]
  %v607 = vld [vmem:[%s3 + $0x5c] sm:$0xf]
  %v608 = vld [vmem:[%s3 + $0x60] sm:$0xf]
  %v609 = vld [vmem:[%s3 + $0x64] sm:$0xf]
  %v610 = vld [vmem:[%s3 + $0x68] sm:$0xf]
  %v611 = vld [vmem:[%s3 + $0x6c] sm:$0xf]
  %v612 = vld [vmem:[%s3 + $0x70] sm:$0xf]
  %v613 = vld [vmem:[%s3 + $0x74] sm:$0xf]
  %v614 = vld [vmem:[%s3 + $0x78] sm:$0xf]
  %v615 = vld [vmem:[%s3 + $0x7c] sm:$0xf]
  %v616 = vld [vmem:[%s3 + $0x80] sm:$0xf]
  %v617 = vld [vmem:[%s3 + $0x84] sm:$0xf]
  %v618 = vld [vmem:[%s3 + $0x88] sm:$0xf]
  %v619 = vld [vmem:[%s3 + $0x8c] sm:$0xf]
  %v620 = vld [vmem:[%s3 + $0x90] sm:$0xf]
  %v621 = vld [vmem:[%s3 + $0x94] sm:$0xf]
  %v622 = vld [vmem:[%s3 + $0x98] sm:$0xf]
  %v623 = vld [vmem:[%s3 + $0x9c] sm:$0xf]
  %v624 = vld [vmem:[%s3 + $0xa0] sm:$0xf]
  %v625 = vld [vmem:[%s3 + $0xa4] sm:$0xf]
  %v626 = vld [vmem:[%s3 + $0xa8] sm:$0xf]
  %v627 = vld [vmem:[%s3 + $0xac] sm:$0xf]
  %v628 = vld [vmem:[%s3 + $0xb0] sm:$0xf]
  %v629 = vld [vmem:[%s3 + $0xb4] sm:$0xf]
  %v630 = vld [vmem:[%s3 + $0xb8] sm:$0xf]
  %v631 = vld [vmem:[%s3 + $0xbc] sm:$0xf]
  %v632 = vld [vmem:[%s3 + $0xc0] sm:$0xf]
  %v633 = vld [vmem:[%s3 + $0xc4] sm:$0xf]
  %v634 = vld [vmem:[%s3 + $0xc8] sm:$0xf]
  %v635 = vld [vmem:[%s3 + $0xcc] sm:$0xf]
  %v636 = vld [vmem:[%s3 + $0xd0] sm:$0xf]
  %v637 = vld [vmem:[%s3 + $0xd4] sm:$0xf]
  %v638 = vld [vmem:[%s3 + $0xd8] sm:$0xf]
  %v639 = vld [vmem:[%s3 + $0xdc] sm:$0xf]
  %v640 = vld [vmem:[%s3 + $0xe0] sm:$0xf]
  %v641 = vld [vmem:[%s3 + $0xe4] sm:$0xf]
  %v642 = vld [vmem:[%s3 + $0xe8] sm:$0xf]
  %v643 = vld [vmem:[%s3 + $0xec] sm:$0xf]
  %v644 = vld [vmem:[%s3 + $0xf0] sm:$0xf]
  %v645 = vld [vmem:[%s3 + $0xf4] sm:$0xf]
  %v646 = vld [vmem:[%s3 + $0xf8] sm:$0xf]
  %v647 = vld [vmem:[%s3 + $0xfc] sm:$0xf]
  %v648 = vld [vmem:[%s3 + $0x100] sm:$0xf]
  %v649 = vld [vmem:[%s3 + $0x104] sm:$0xf]
  %v650 = vld [vmem:[%s3 + $0x108] sm:$0xf]
  %v651 = vld [vmem:[%s3 + $0x10c] sm:$0xf]
  %v652 = vld [vmem:[%s3 + $0x110] sm:$0xf]
  %v653 = vld [vmem:[%s3 + $0x114] sm:$0xf]
  %v654 = vld [vmem:[%s3 + $0x118] sm:$0xf]
  %v655 = vld [vmem:[%s3 + $0x11c] sm:$0xf]
  %v656 = vld [vmem:[%s3 + $0x120] sm:$0xf]
  %v657 = vld [vmem:[%s3 + $0x124] sm:$0xf]
  %v658 = vld [vmem:[%s3 + $0x128] sm:$0xf]
  %v659 = vld [vmem:[%s3 + $0x12c] sm:$0xf]
  %v660 = vld [vmem:[%s3 + $0x130] sm:$0xf]
  %v661 = vld [vmem:[%s3 + $0x134] sm:$0xf]
  %v662 = vld [vmem:[%s3 + $0x138] sm:$0xf]
  %v663 = vld [vmem:[%s3 + $0x13c] sm:$0xf]
  %v664 = vld [vmem:[%s3 + $0x140] sm:$0xf]
  %v665 = vld [vmem:[%s3 + $0x144] sm:$0xf]
  %v666 = vld [vmem:[%s3 + $0x148] sm:$0xf]
  %v667 = vld [vmem:[%s3 + $0x14c] sm:$0xf]
  %v668 = vld [vmem:[%s3 + $0x150] sm:$0xf]
  %v669 = vld [vmem:[%s3 + $0x154] sm:$0xf]
  %v670 = vld [vmem:[%s3 + $0x158] sm:$0xf]
  %v671 = vld [vmem:[%s3 + $0x15c] sm:$0xf]
  %v672 = vld [vmem:[%s3 + $0x160] sm:$0xf]
  %v673 = vld [vmem:[%s3 + $0x164] sm:$0xf]
  %v674 = vld [vmem:[%s3 + $0x168] sm:$0xf]
  %v675 = vld [vmem:[%s3 + $0x16c] sm:$0xf]
  %v676 = vld [vmem:[%s3 + $0x170] sm:$0xf]
  %v677 = vld [vmem:[%s3 + $0x174] sm:$0xf]
  %v678 = vld [vmem:[%s3 + $0x178] sm:$0xf]
  %v679 = vld [vmem:[%s3 + $0x17c] sm:$0xf]
  %v680 = vld [vmem:[%s3 + $0x180] sm:$0xf]
  %v681 = vld [vmem:[%s3 + $0x184] sm:$0xf]
  %v682 = vld [vmem:[%s3 + $0x188] sm:$0xf]
  %v683 = vld [vmem:[%s3 + $0x18c] sm:$0xf]
  %v684 = vld [vmem:[%s3 + $0x190] sm:$0xf]
  %v685 = vld [vmem:[%s3 + $0x194] sm:$0xf]
  %v686 = vld [vmem:[%s3 + $0x198] sm:$0xf]
  %v687 = vld [vmem:[%s3 + $0x19c] sm:$0xf]
  %v688 = vld [vmem:[%s3 + $0x1a0] sm:$0xf]
  %v689 = vld [vmem:[%s3 + $0x1a4] sm:$0xf]
  %v690 = vld [vmem:[%s3 + $0x1a8] sm:$0xf]
  %v691 = vld [vmem:[%s3 + $0x1ac] sm:$0xf]
  %v692 = vld [vmem:[%s3 + $0x1b0] sm:$0xf]
  %v693 = vld [vmem:[%s3 + $0x1b4] sm:$0xf]
  %v694 = vld [vmem:[%s3 + $0x1b8] sm:$0xf]
  %v695 = vld [vmem:[%s3 + $0x1bc] sm:$0xf]
  %v696 = vld [vmem:[%s3 + $0x1c0] sm:$0xf]
  %v697 = vld [vmem:[%s3 + $0x1c4] sm:$0xf]
  %v698 = vld [vmem:[%s3 + $0x1c8] sm:$0xf]
  %v699 = vld [vmem:[%s3 + $0x1cc] sm:$0xf]
  %v700 = vld [vmem:[%s3 + $0x1d0] sm:$0xf]
  %v701 = vld [vmem:[%s3 + $0x1d4] sm:$0xf]
  %v702 = vld [vmem:[%s3 + $0x1d8] sm:$0xf]
  %v703 = vld [vmem:[%s3 + $0x1dc] sm:$0xf]
  %v704 = vld [vmem:[%s3 + $0x1e0] sm:$0xf]
  %v705 = vld [vmem:[%s3 + $0x1e4] sm:$0xf]
  %v706 = vld [vmem:[%s3 + $0x1e8] sm:$0xf]
  %v707 = vld [vmem:[%s3 + $0x1ec] sm:$0xf]
  %v708 = vld [vmem:[%s3 + $0x1f0] sm:$0xf]
  %v709 = vld [vmem:[%s3 + $0x1f4] sm:$0xf]
  %v710 = vld [vmem:[%s3 + $0x1f8] sm:$0xf]
  %v711 = vld [vmem:[%s3 + $0x1fc] sm:$0xf]
  %v712 = vld [vmem:[%s3 + $0x200] sm:$0xf]
  %v713 = vld [vmem:[%s3 + $0x204] sm:$0xf]
  %v714 = vld [vmem:[%s3 + $0x208] sm:$0xf]
  %v715 = vld [vmem:[%s3 + $0x20c] sm:$0xf]
  %v716 = vld [vmem:[%s3 + $0x210] sm:$0xf]
  %v717 = vld [vmem:[%s3 + $0x214] sm:$0xf]
  %v718 = vld [vmem:[%s3 + $0x218] sm:$0xf]
  %v719 = vld [vmem:[%s3 + $0x21c] sm:$0xf]
  %v720 = vld [vmem:[%s3 + $0x220] sm:$0xf]
  %v721 = vld [vmem:[%s3 + $0x224] sm:$0xf]
  %v722 = vld [vmem:[%s3 + $0x228] sm:$0xf]
  %v723 = vld [vmem:[%s3 + $0x22c] sm:$0xf]
  %v724 = vld [vmem:[%s3 + $0x230] sm:$0xf]
  %v725 = vld [vmem:[%s3 + $0x234] sm:$0xf]
  %v726 = vld [vmem:[%s3 + $0x238] sm:$0xf]
  %v727 = vld [vmem:[%s3 + $0x23c] sm:$0xf]
  %v728 = vld [vmem:[%s3 + $0x240] sm:$0xf]
  %v729 = vld [vmem:[%s3 + $0x244] sm:$0xf]
  %v730 = vld [vmem:[%s3 + $0x248] sm:$0xf]
  %v731 = vld [vmem:[%s3 + $0x24c] sm:$0xf]
  %v732 = vld [vmem:[%s3 + $0x250] sm:$0xf]
  %v733 = vld [vmem:[%s3 + $0x254] sm:$0xf]
  %v734 = vld [vmem:[%s3 + $0x258] sm:$0xf]
  %v735 = vld [vmem:[%s3 + $0x25c] sm:$0xf]
  %v736 = vld [vmem:[%s3 + $0x260] sm:$0xf]
  %v737 = vld [vmem:[%s3 + $0x264] sm:$0xf]
  %v738 = vld [vmem:[%s3 + $0x268] sm:$0xf]
  %v739 = vld [vmem:[%s3 + $0x26c] sm:$0xf]
  %v740 = vld [vmem:[%s3 + $0x270] sm:$0xf]
  %v741 = vld [vmem:[%s3 + $0x274] sm:$0xf]
  %v742 = vld [vmem:[%s3 + $0x278] sm:$0xf]
  %v743 = vld [vmem:[%s3 + $0x27c] sm:$0xf]
  %v744 = vld [vmem:[%s3 + $0x280] sm:$0xf]
  %v745 = vld [vmem:[%s3 + $0x284] sm:$0xf]
  %v746 = vld [vmem:[%s3 + $0x288] sm:$0xf]
  %v747 = vld [vmem:[%s3 + $0x28c] sm:$0xf]
  %v748 = vld [vmem:[%s3 + $0x290] sm:$0xf]
  %v749 = vld [vmem:[%s3 + $0x294] sm:$0xf]
  %v750 = vld [vmem:[%s3 + $0x298] sm:$0xf]
  %v751 = vld [vmem:[%s3 + $0x29c] sm:$0xf]
  %v752 = vld [vmem:[%s3 + $0x2a0] sm:$0xf]
  %v753 = vld [vmem:[%s3 + $0x2a4] sm:$0xf]
  %v754 = vld [vmem:[%s3 + $0x2a8] sm:$0xf]
  %v755 = vld [vmem:[%s3 + $0x2ac] sm:$0xf]
  %v756 = vld [vmem:[%s3 + $0x2b0] sm:$0xf]
  %v757 = vld [vmem:[%s3 + $0x2b4] sm:$0xf]
  %v758 = vld [vmem:[%s3 + $0x2b8] sm:$0xf]
  %v759 = vld [vmem:[%s3 + $0x2bc] sm:$0xf]
  %v760 = vld [vmem:[%s3 + $0x2c0] sm:$0xf]
  %v761 = vld [vmem:[%s3 + $0x2c4] sm:$0xf]
  %v762 = vld [vmem:[%s3 + $0x2c8] sm:$0xf]
  %v763 = vld [vmem:[%s3 + $0x2cc] sm:$0xf]
  %v764 = vld [vmem:[%s3 + $0x2d0] sm:$0xf]
  %v765 = vld [vmem:[%s3 + $0x2d4] sm:$0xf]
  %v766 = vld [vmem:[%s3 + $0x2d8] sm:$0xf]
  %v767 = vld [vmem:[%s3 + $0x2dc] sm:$0xf]
  %v768 = vld [vmem:[%s3 + $0x2e0] sm:$0xf]
  %v769 = vld [vmem:[%s3 + $0x2e4] sm:$0xf]
  %v770 = vld [vmem:[%s3 + $0x2e8] sm:$0xf]
  %v771 = vld [vmem:[%s3 + $0x2ec] sm:$0xf]
  %v772 = vld [vmem:[%s3 + $0x2f0] sm:$0xf]
  %v773 = vld [vmem:[%s3 + $0x2f4] sm:$0xf]
  %v774 = vld [vmem:[%s3 + $0x2f8] sm:$0xf]
  %v775 = vld [vmem:[%s3 + $0x2fc] sm:$0xf]
  %v776 = vld [vmem:[%s3 + $0x300] sm:$0xf]
  %v777 = vld [vmem:[%s3 + $0x304] sm:$0xf]
  %v778 = vld [vmem:[%s3 + $0x308] sm:$0xf]
  %v779 = vld [vmem:[%s3 + $0x30c] sm:$0xf]
  %v780 = vld [vmem:[%s3 + $0x310] sm:$0xf]
  %v781 = vld [vmem:[%s3 + $0x314] sm:$0xf]
  %v782 = vld [vmem:[%s3 + $0x318] sm:$0xf]
  %v783 = vld [vmem:[%s3 + $0x31c] sm:$0xf]
  %v784 = vld [vmem:[%s3 + $0x320] sm:$0xf]
  %v785 = vld [vmem:[%s3 + $0x324] sm:$0xf]
  %v786 = vld [vmem:[%s3 + $0x328] sm:$0xf]
  %v787 = vld [vmem:[%s3 + $0x32c] sm:$0xf]
  %v788 = vld [vmem:[%s3 + $0x330] sm:$0xf]
  %v789 = vld [vmem:[%s3 + $0x334] sm:$0xf]
  %v790 = vld [vmem:[%s3 + $0x338] sm:$0xf]
  %v791 = vld [vmem:[%s3 + $0x33c] sm:$0xf]
  %v792 = vld [vmem:[%s3 + $0x340] sm:$0xf]
  %v793 = vld [vmem:[%s3 + $0x344] sm:$0xf]
  %v794 = vld [vmem:[%s3 + $0x348] sm:$0xf]
  %v795 = vld [vmem:[%s3 + $0x34c] sm:$0xf]
  %v796 = vld [vmem:[%s3 + $0x350] sm:$0xf]
  %v797 = vld [vmem:[%s3 + $0x354] sm:$0xf]
  %v798 = vld [vmem:[%s3 + $0x358] sm:$0xf]
  %v799 = vld [vmem:[%s3 + $0x35c] sm:$0xf]
  %v800 = vld [vmem:[%s3 + $0x360] sm:$0xf]
  %v801 = vld [vmem:[%s3 + $0x364] sm:$0xf]
  %v802 = vld [vmem:[%s3 + $0x368] sm:$0xf]
  %v803 = vld [vmem:[%s3 + $0x36c] sm:$0xf]
  %v804 = vld [vmem:[%s3 + $0x370] sm:$0xf]
  %v805 = vld [vmem:[%s3 + $0x374] sm:$0xf]
  %v806 = vld [vmem:[%s3 + $0x378] sm:$0xf]
  %v807 = vld [vmem:[%s3 + $0x37c] sm:$0xf]
  %v808 = vld [vmem:[%s4] sm:$0x1]
  %v810 = vlaneseq
  %v811 = vshrl.u32 %v810, 7
  %v812 = vsub.s32 0, %v811
  %v813 = vrot.slane %v808, %v812
  %v1039 = vunpack.c.l.b16 %v584
  %v1040 = vunpack.c.l.b16 %v585
  %v1041 = vunpack.c.l.b16 %v586
  %v1042 = vunpack.c.l.b16 %v587
  %v1043 = vunpack.c.l.b16 %v588
  %v1044 = vunpack.c.l.b16 %v589
  %v1045 = vunpack.c.l.b16 %v590
  %v1046 = vunpack.c.l.b16 %v591
  %v1047 = vunpack.c.l.b16 %v592
  %v1048 = vunpack.c.l.b16 %v593
  %v1049 = vunpack.c.l.b16 %v594
  %v1050 = vunpack.c.l.b16 %v595
  %v1051 = vunpack.c.l.b16 %v596
  %v1052 = vunpack.c.l.b16 %v597
  %v1053 = vunpack.c.l.b16 %v598
  %v1054 = vunpack.c.l.b16 %v599
  %v1055 = vunpack.c.l.b16 %v600
  %v1056 = vunpack.c.l.b16 %v601
  %v1057 = vunpack.c.l.b16 %v602
  %v1058 = vunpack.c.l.b16 %v603
  %v1059 = vunpack.c.l.b16 %v604
  %v1060 = vunpack.c.l.b16 %v605
  %v1061 = vunpack.c.l.b16 %v606
  %v1062 = vunpack.c.l.b16 %v607
  %v1063 = vunpack.c.l.b16 %v608
  %v1064 = vunpack.c.l.b16 %v609
  %v1065 = vunpack.c.l.b16 %v610
  %v1066 = vunpack.c.l.b16 %v611
  %v1067 = vunpack.c.l.b16 %v612
  %v1068 = vunpack.c.l.b16 %v613
  %v1069 = vunpack.c.l.b16 %v614
  %v1070 = vunpack.c.l.b16 %v615
  %v1071 = vunpack.c.l.b16 %v616
  %v1072 = vunpack.c.l.b16 %v617
  %v1073 = vunpack.c.l.b16 %v618
  %v1074 = vunpack.c.l.b16 %v619
  %v1075 = vunpack.c.l.b16 %v620
  %v1076 = vunpack.c.l.b16 %v621
  %v1077 = vunpack.c.l.b16 %v622
  %v1078 = vunpack.c.l.b16 %v623
  %v1079 = vunpack.c.l.b16 %v624
  %v1080 = vunpack.c.l.b16 %v625
  %v1081 = vunpack.c.l.b16 %v626
  %v1082 = vunpack.c.l.b16 %v627
  %v1083 = vunpack.c.l.b16 %v628
  %v1084 = vunpack.c.l.b16 %v629
  %v1085 = vunpack.c.l.b16 %v630
  %v1086 = vunpack.c.l.b16 %v631
  %v1087 = vunpack.c.l.b16 %v632
  %v1088 = vunpack.c.l.b16 %v633
  %v1089 = vunpack.c.l.b16 %v634
  %v1090 = vunpack.c.l.b16 %v635
  %v1091 = vunpack.c.l.b16 %v636
  %v1092 = vunpack.c.l.b16 %v637
  %v1093 = vunpack.c.l.b16 %v638
  %v1094 = vunpack.c.l.b16 %v639
  %v1095 = vunpack.c.l.b16 %v640
  %v1096 = vunpack.c.l.b16 %v641
  %v1097 = vunpack.c.l.b16 %v642
  %v1098 = vunpack.c.l.b16 %v643
  %v1099 = vunpack.c.l.b16 %v644
  %v1100 = vunpack.c.l.b16 %v645
  %v1101 = vunpack.c.l.b16 %v646
  %v1102 = vunpack.c.l.b16 %v647
  %v1103 = vunpack.c.l.b16 %v648
  %v1104 = vunpack.c.l.b16 %v649
  %v1105 = vunpack.c.l.b16 %v650
  %v1106 = vunpack.c.l.b16 %v651
  %v1107 = vunpack.c.l.b16 %v652
  %v1108 = vunpack.c.l.b16 %v653
  %v1109 = vunpack.c.l.b16 %v654
  %v1110 = vunpack.c.l.b16 %v655
  %v1111 = vunpack.c.l.b16 %v656
  %v1112 = vunpack.c.l.b16 %v657
  %v1113 = vunpack.c.l.b16 %v658
  %v1114 = vunpack.c.l.b16 %v659
  %v1115 = vunpack.c.l.b16 %v660
  %v1116 = vunpack.c.l.b16 %v661
  %v1117 = vunpack.c.l.b16 %v662
  %v1118 = vunpack.c.l.b16 %v663
  %v1119 = vunpack.c.l.b16 %v664
  %v1120 = vunpack.c.l.b16 %v665
  %v1121 = vunpack.c.l.b16 %v666
  %v1122 = vunpack.c.l.b16 %v667
  %v1123 = vunpack.c.l.b16 %v668
  %v1124 = vunpack.c.l.b16 %v669
  %v1125 = vunpack.c.l.b16 %v670
  %v1126 = vunpack.c.l.b16 %v671
  %v1127 = vunpack.c.l.b16 %v672
  %v1128 = vunpack.c.l.b16 %v673
  %v1129 = vunpack.c.l.b16 %v674
  %v1130 = vunpack.c.l.b16 %v675
  %v1131 = vunpack.c.l.b16 %v676
  %v1132 = vunpack.c.l.b16 %v677
  %v1133 = vunpack.c.l.b16 %v678
  %v1134 = vunpack.c.l.b16 %v679
  %v1135 = vunpack.c.l.b16 %v680
  %v1136 = vunpack.c.l.b16 %v681
  %v1137 = vunpack.c.l.b16 %v682
  %v1138 = vunpack.c.l.b16 %v683
  %v1139 = vunpack.c.l.b16 %v684
  %v1140 = vunpack.c.l.b16 %v685
  %v1141 = vunpack.c.l.b16 %v686
  %v1142 = vunpack.c.l.b16 %v687
  %v1143 = vunpack.c.l.b16 %v688
  %v1144 = vunpack.c.l.b16 %v689
  %v1145 = vunpack.c.l.b16 %v690
  %v1146 = vunpack.c.l.b16 %v691
  %v1147 = vunpack.c.l.b16 %v692
  %v1148 = vunpack.c.l.b16 %v693
  %v1149 = vunpack.c.l.b16 %v694
  %v1150 = vunpack.c.l.b16 %v695
  %v1151 = vunpack.c.l.b16 %v696
  %v1152 = vunpack.c.l.b16 %v697
  %v1153 = vunpack.c.l.b16 %v698
  %v1154 = vunpack.c.l.b16 %v699
  %v1155 = vunpack.c.l.b16 %v700
  %v1156 = vunpack.c.l.b16 %v701
  %v1157 = vunpack.c.l.b16 %v702
  %v1158 = vunpack.c.l.b16 %v703
  %v1159 = vunpack.c.l.b16 %v704
  %v1160 = vunpack.c.l.b16 %v705
  %v1161 = vunpack.c.l.b16 %v706
  %v1162 = vunpack.c.l.b16 %v707
  %v1163 = vunpack.c.l.b16 %v708
  %v1164 = vunpack.c.l.b16 %v709
  %v1165 = vunpack.c.l.b16 %v710
  %v1166 = vunpack.c.l.b16 %v711
  %v1167 = vunpack.c.l.b16 %v712
  %v1168 = vunpack.c.l.b16 %v713
  %v1169 = vunpack.c.l.b16 %v714
  %v1170 = vunpack.c.l.b16 %v715
  %v1171 = vunpack.c.l.b16 %v716
  %v1172 = vunpack.c.l.b16 %v717
  %v1173 = vunpack.c.l.b16 %v718
  %v1174 = vunpack.c.l.b16 %v719
  %v1175 = vunpack.c.l.b16 %v720
  %v1176 = vunpack.c.l.b16 %v721
  %v1177 = vunpack.c.l.b16 %v722
  %v1178 = vunpack.c.l.b16 %v723
  %v1179 = vunpack.c.l.b16 %v724
  %v1180 = vunpack.c.l.b16 %v725
  %v1181 = vunpack.c.l.b16 %v726
  %v1182 = vunpack.c.l.b16 %v727
  %v1183 = vunpack.c.l.b16 %v728
  %v1184 = vunpack.c.l.b16 %v729
  %v1185 = vunpack.c.l.b16 %v730
  %v1186 = vunpack.c.l.b16 %v731
  %v1187 = vunpack.c.l.b16 %v732
  %v1188 = vunpack.c.l.b16 %v733
  %v1189 = vunpack.c.l.b16 %v734
  %v1190 = vunpack.c.l.b16 %v735
  %v1191 = vunpack.c.l.b16 %v736
  %v1192 = vunpack.c.l.b16 %v737
  %v1193 = vunpack.c.l.b16 %v738
  %v1194 = vunpack.c.l.b16 %v739
  %v1195 = vunpack.c.l.b16 %v740
  %v1196 = vunpack.c.l.b16 %v741
  %v1197 = vunpack.c.l.b16 %v742
  %v1198 = vunpack.c.l.b16 %v743
  %v1199 = vunpack.c.l.b16 %v744
  %v1200 = vunpack.c.l.b16 %v745
  %v1201 = vunpack.c.l.b16 %v746
  %v1202 = vunpack.c.l.b16 %v747
  %v1203 = vunpack.c.l.b16 %v748
  %v1204 = vunpack.c.l.b16 %v749
  %v1205 = vunpack.c.l.b16 %v750
  %v1206 = vunpack.c.l.b16 %v751
  %v1207 = vunpack.c.l.b16 %v752
  %v1208 = vunpack.c.l.b16 %v753
  %v1209 = vunpack.c.l.b16 %v754
  %v1210 = vunpack.c.l.b16 %v755
  %v1211 = vunpack.c.l.b16 %v756
  %v1212 = vunpack.c.l.b16 %v757
  %v1213 = vunpack.c.l.b16 %v758
  %v1214 = vunpack.c.l.b16 %v759
  %v1215 = vunpack.c.l.b16 %v760
  %v1216 = vunpack.c.l.b16 %v761
  %v1217 = vunpack.c.l.b16 %v762
  %v1218 = vunpack.c.l.b16 %v763
  %v1219 = vunpack.c.l.b16 %v764
  %v1220 = vunpack.c.l.b16 %v765
  %v1221 = vunpack.c.l.b16 %v766
  %v1222 = vunpack.c.l.b16 %v767
  %v1223 = vunpack.c.l.b16 %v768
  %v1224 = vunpack.c.l.b16 %v769
  %v1225 = vunpack.c.l.b16 %v770
  %v1226 = vunpack.c.l.b16 %v771
  %v1227 = vunpack.c.l.b16 %v772
  %v1228 = vunpack.c.l.b16 %v773
  %v1229 = vunpack.c.l.b16 %v774
  %v1230 = vunpack.c.l.b16 %v775
  %v1231 = vunpack.c.l.b16 %v776
  %v1232 = vunpack.c.l.b16 %v777
  %v1233 = vunpack.c.l.b16 %v778
  %v1234 = vunpack.c.l.b16 %v779
  %v1235 = vunpack.c.l.b16 %v780
  %v1236 = vunpack.c.l.b16 %v781
  %v1237 = vunpack.c.l.b16 %v782
  %v1238 = vunpack.c.l.b16 %v783
  %v1239 = vunpack.c.l.b16 %v784
  %v1240 = vunpack.c.l.b16 %v785
  %v1241 = vunpack.c.l.b16 %v786
  %v1242 = vunpack.c.l.b16 %v787
  %v1243 = vunpack.c.l.b16 %v788
  %v1244 = vunpack.c.l.b16 %v789
  %v1245 = vunpack.c.l.b16 %v790
  %v1246 = vunpack.c.l.b16 %v791
  %v1247 = vunpack.c.l.b16 %v792
  %v1248 = vunpack.c.l.b16 %v793
  %v1249 = vunpack.c.l.b16 %v794
  %v1250 = vunpack.c.l.b16 %v795
  %v1251 = vunpack.c.l.b16 %v796
  %v1252 = vunpack.c.l.b16 %v797
  %v1253 = vunpack.c.l.b16 %v798
  %v1254 = vunpack.c.l.b16 %v799
  %v1255 = vunpack.c.l.b16 %v800
  %v1256 = vunpack.c.l.b16 %v801
  %v1257 = vunpack.c.l.b16 %v802
  %v1258 = vunpack.c.l.b16 %v803
  %v1259 = vunpack.c.l.b16 %v804
  %v1260 = vunpack.c.l.b16 %v805
  %v1261 = vunpack.c.l.b16 %v806
  %v1262 = vunpack.c.l.b16 %v807
  %v1263 = vpack.c.b16 %v1040, %v1039
  %v1264 = vpack.c.b16 %v1042, %v1041
  %v1265 = vpack.c.b16 %v1044, %v1043
  %v1266 = vpack.c.b16 %v1046, %v1045
  %v1267 = vpack.c.b16 %v1048, %v1047
  %v1268 = vpack.c.b16 %v1050, %v1049
  %v1269 = vpack.c.b16 %v1052, %v1051
  %v1270 = vpack.c.b16 %v1054, %v1053
  %v1271 = vpack.c.b16 %v1056, %v1055
  %v1272 = vpack.c.b16 %v1058, %v1057
  %v1273 = vpack.c.b16 %v1060, %v1059
  %v1274 = vpack.c.b16 %v1062, %v1061
  %v1275 = vpack.c.b16 %v1064, %v1063
  %v1276 = vpack.c.b16 %v1066, %v1065
  %v1277 = vpack.c.b16 %v1068, %v1067
  %v1278 = vpack.c.b16 %v1070, %v1069
  %v1279 = vpack.c.b16 %v1072, %v1071
  %v1280 = vpack.c.b16 %v1074, %v1073
  %v1281 = vpack.c.b16 %v1076, %v1075
  %v1282 = vpack.c.b16 %v1078, %v1077
  %v1283 = vpack.c.b16 %v1080, %v1079
  %v1284 = vpack.c.b16 %v1082, %v1081
  %v1285 = vpack.c.b16 %v1084, %v1083
  %v1286 = vpack.c.b16 %v1086, %v1085
  %v1287 = vpack.c.b16 %v1088, %v1087
  %v1288 = vpack.c.b16 %v1090, %v1089
  %v1289 = vpack.c.b16 %v1092, %v1091
  %v1290 = vpack.c.b16 %v1094, %v1093
  %v1291 = vpack.c.b16 %v1096, %v1095
  %v1292 = vpack.c.b16 %v1098, %v1097
  %v1293 = vpack.c.b16 %v1100, %v1099
  %v1294 = vpack.c.b16 %v1102, %v1101
  %v1295 = vpack.c.b16 %v1104, %v1103
  %v1296 = vpack.c.b16 %v1106, %v1105
  %v1297 = vpack.c.b16 %v1108, %v1107
  %v1298 = vpack.c.b16 %v1110, %v1109
  %v1299 = vpack.c.b16 %v1112, %v1111
  %v1300 = vpack.c.b16 %v1114, %v1113
  %v1301 = vpack.c.b16 %v1116, %v1115
  %v1302 = vpack.c.b16 %v1118, %v1117
  %v1303 = vpack.c.b16 %v1120, %v1119
  %v1304 = vpack.c.b16 %v1122, %v1121
  %v1305 = vpack.c.b16 %v1124, %v1123
  %v1306 = vpack.c.b16 %v1126, %v1125
  %v1307 = vpack.c.b16 %v1128, %v1127
  %v1308 = vpack.c.b16 %v1130, %v1129
  %v1309 = vpack.c.b16 %v1132, %v1131
  %v1310 = vpack.c.b16 %v1134, %v1133
  %v1311 = vpack.c.b16 %v1136, %v1135
  %v1312 = vpack.c.b16 %v1138, %v1137
  %v1313 = vpack.c.b16 %v1140, %v1139
  %v1314 = vpack.c.b16 %v1142, %v1141
  %v1315 = vpack.c.b16 %v1144, %v1143
  %v1316 = vpack.c.b16 %v1146, %v1145
  %v1317 = vpack.c.b16 %v1148, %v1147
  %v1318 = vpack.c.b16 %v1150, %v1149
  %v1319 = vpack.c.b16 %v1152, %v1151
  %v1320 = vpack.c.b16 %v1154, %v1153
  %v1321 = vpack.c.b16 %v1156, %v1155
  %v1322 = vpack.c.b16 %v1158, %v1157
  %v1323 = vpack.c.b16 %v1160, %v1159
  %v1324 = vpack.c.b16 %v1162, %v1161
  %v1325 = vpack.c.b16 %v1164, %v1163
  %v1326 = vpack.c.b16 %v1166, %v1165
  %v1327 = vpack.c.b16 %v1168, %v1167
  %v1328 = vpack.c.b16 %v1170, %v1169
  %v1329 = vpack.c.b16 %v1172, %v1171
  %v1330 = vpack.c.b16 %v1174, %v1173
  %v1331 = vpack.c.b16 %v1176, %v1175
  %v1332 = vpack.c.b16 %v1178, %v1177
  %v1333 = vpack.c.b16 %v1180, %v1179
  %v1334 = vpack.c.b16 %v1182, %v1181
  %v1335 = vpack.c.b16 %v1184, %v1183
  %v1336 = vpack.c.b16 %v1186, %v1185
  %v1337 = vpack.c.b16 %v1188, %v1187
  %v1338 = vpack.c.b16 %v1190, %v1189
  %v1339 = vpack.c.b16 %v1192, %v1191
  %v1340 = vpack.c.b16 %v1194, %v1193
  %v1341 = vpack.c.b16 %v1196, %v1195
  %v1342 = vpack.c.b16 %v1198, %v1197
  %v1343 = vpack.c.b16 %v1200, %v1199
  %v1344 = vpack.c.b16 %v1202, %v1201
  %v1345 = vpack.c.b16 %v1204, %v1203
  %v1346 = vpack.c.b16 %v1206, %v1205
  %v1347 = vpack.c.b16 %v1208, %v1207
  %v1348 = vpack.c.b16 %v1210, %v1209
  %v1349 = vpack.c.b16 %v1212, %v1211
  %v1350 = vpack.c.b16 %v1214, %v1213
  %v1351 = vpack.c.b16 %v1216, %v1215
  %v1352 = vpack.c.b16 %v1218, %v1217
  %v1353 = vpack.c.b16 %v1220, %v1219
  %v1354 = vpack.c.b16 %v1222, %v1221
  %v1355 = vpack.c.b16 %v1224, %v1223
  %v1356 = vpack.c.b16 %v1226, %v1225
  %v1357 = vpack.c.b16 %v1228, %v1227
  %v1358 = vpack.c.b16 %v1230, %v1229
  %v1359 = vpack.c.b16 %v1232, %v1231
  %v1360 = vpack.c.b16 %v1234, %v1233
  %v1361 = vpack.c.b16 %v1236, %v1235
  %v1362 = vpack.c.b16 %v1238, %v1237
  %v1363 = vpack.c.b16 %v1240, %v1239
  %v1364 = vpack.c.b16 %v1242, %v1241
  %v1365 = vpack.c.b16 %v1244, %v1243
  %v1366 = vpack.c.b16 %v1246, %v1245
  %v1367 = vpack.c.b16 %v1248, %v1247
  %v1368 = vpack.c.b16 %v1250, %v1249
  %v1369 = vpack.c.b16 %v1252, %v1251
  %v1370 = vpack.c.b16 %v1254, %v1253
  %v1371 = vpack.c.b16 %v1256, %v1255
  %v1372 = vpack.c.b16 %v1258, %v1257
  %v1373 = vpack.c.b16 %v1260, %v1259
  %v1374 = vpack.c.b16 %v1262, %v1261
  %1487 = vmatprep.subr.bf16.mxu0 0
  %1488 = vmatpush1.bf16.msra.mxu0 %v1263
  %1489 = vmatprep.subr.bf16.mxu0 0
  %1490 = vmatpush1.bf16.msra.mxu0 %v1264
  %1491 = vmatprep.subr.bf16.mxu0 0
  %1492 = vmatpush1.bf16.msra.mxu0 %v1265
  %1493 = vmatprep.subr.bf16.mxu0 0
  %1494 = vmatpush1.bf16.msra.mxu0 %v1266
  %1495 = vmatprep.subr.bf16.mxu0 0
  %1496 = vmatpush1.bf16.msra.mxu0 %v1267
  %1497 = vmatprep.subr.bf16.mxu0 0
  %1498 = vmatpush1.bf16.msra.mxu0 %v1268
  %1499 = vmatprep.subr.bf16.mxu0 0
  %1500 = vmatpush1.bf16.msra.mxu0 %v1269
  %1501 = vmatprep.subr.bf16.mxu0 0
  %1502 = vmatpush1.bf16.msra.mxu0 %v1270
  %1503 = vmatprep.subr.bf16.mxu0 0
  %1504 = vmatpush1.bf16.msra.mxu0 %v1271
  %1505 = vmatprep.subr.bf16.mxu0 0
  %1506 = vmatpush1.bf16.msra.mxu0 %v1272
  %1507 = vmatprep.subr.bf16.mxu0 0
  %1508 = vmatpush1.bf16.msra.mxu0 %v1273
  %1509 = vmatprep.subr.bf16.mxu0 0
  %1510 = vmatpush1.bf16.msra.mxu0 %v1274
  %1511 = vmatprep.subr.bf16.mxu0 0
  %1512 = vmatpush1.bf16.msra.mxu0 %v1275
  %1513 = vmatprep.subr.bf16.mxu0 0
  %1514 = vmatpush1.bf16.msra.mxu0 %v1276
  %1515 = vmatprep.subr.bf16.mxu0 0
  %1516 = vmatpush1.bf16.msra.mxu0 %v1277
  %1517 = vmatprep.subr.bf16.mxu0 0
  %1518 = vmatpush1.bf16.msra.mxu0 %v1278
  %1519 = vmatprep.mubr.bf16.mxu0 %v292
  %1520 = vmatmul.mubr.bf16.gmra.mrb[0].mxu0 %v291
  %v1521 = vpop.f32.mrb[0].mxu0
  %v1522 = vadd.f32 %v813, %v1521
  %v1523 = vpop.f32.mrb[0].mxu0
  %v1524 = vpop.f32.mrb[0].mxu0
  %v1525 = vpop.f32.mrb[0].mxu0
  %1526 = vdwg.mxu0
  %1527 = vmatprep.subr.bf16.mxu0 0
  %1528 = vmatpush1.bf16.msra.mxu0 %v1279
  %1529 = vmatprep.subr.bf16.mxu0 0
  %1530 = vmatpush1.bf16.msra.mxu0 %v1280
  %1531 = vmatprep.subr.bf16.mxu0 0
  %1532 = vmatpush1.bf16.msra.mxu0 %v1281
  %1533 = vmatprep.subr.bf16.mxu0 0
  %1534 = vmatpush1.bf16.msra.mxu0 %v1282
  %1535 = vmatprep.subr.bf16.mxu0 0
  %1536 = vmatpush1.bf16.msra.mxu0 %v1283
  %1537 = vmatprep.subr.bf16.mxu0 0
  %1538 = vmatpush1.bf16.msra.mxu0 %v1284
  %1539 = vmatprep.subr.bf16.mxu0 0
  %1540 = vmatpush1.bf16.msra.mxu0 %v1285
  %1541 = vmatprep.subr.bf16.mxu0 0
  %1542 = vmatpush1.bf16.msra.mxu0 %v1286
  %1543 = vmatprep.subr.bf16.mxu0 0
  %1544 = vmatpush1.bf16.msra.mxu0 %v1287
  %1545 = vmatprep.subr.bf16.mxu0 0
  %1546 = vmatpush1.bf16.msra.mxu0 %v1288
  %1547 = vmatprep.subr.bf16.mxu0 0
  %1548 = vmatpush1.bf16.msra.mxu0 %v1289
  %1549 = vmatprep.subr.bf16.mxu0 0
  %1550 = vmatpush1.bf16.msra.mxu0 %v1290
  %1551 = vmatprep.subr.bf16.mxu0 0
  %1552 = vmatpush1.bf16.msra.mxu0 %v1291
  %1553 = vmatprep.subr.bf16.mxu0 0
  %1554 = vmatpush1.bf16.msra.mxu0 %v1292
  %1555 = vmatprep.subr.bf16.mxu0 0
  %1556 = vmatpush1.bf16.msra.mxu0 %v1293
  %1557 = vmatprep.subr.bf16.mxu0 0
  %1558 = vmatpush1.bf16.msra.mxu0 %v1294
  %1559 = vmatprep.mubr.bf16.mxu0 %v341
  %1560 = vmatmul.mubr.bf16.gmra.mrb[0].mxu0 %v340
  %v1561 = vpop.f32.mrb[0].mxu0
  %v1562 = vadd.f32 %v1522, %v1561
  %v1563 = vpop.f32.mrb[0].mxu0
  %v1564 = vpop.f32.mrb[0].mxu0
  %v1565 = vpop.f32.mrb[0].mxu0
  %1566 = vdwg.mxu0
  %1567 = vmatprep.subr.bf16.mxu0 0
  %1568 = vmatpush1.bf16.msra.mxu0 %v1295
  %1569 = vmatprep.subr.bf16.mxu0 0
  %1570 = vmatpush1.bf16.msra.mxu0 %v1296
  %1571 = vmatprep.subr.bf16.mxu0 0
  %1572 = vmatpush1.bf16.msra.mxu0 %v1297
  %1573 = vmatprep.subr.bf16.mxu0 0
  %1574 = vmatpush1.bf16.msra.mxu0 %v1298
  %1575 = vmatprep.subr.bf16.mxu0 0
  %1576 = vmatpush1.bf16.msra.mxu0 %v1299
  %1577 = vmatprep.subr.bf16.mxu0 0
  %1578 = vmatpush1.bf16.msra.mxu0 %v1300
  %1579 = vmatprep.subr.bf16.mxu0 0
  %1580 = vmatpush1.bf16.msra.mxu0 %v1301
  %1581 = vmatprep.subr.bf16.mxu0 0
  %1582 = vmatpush1.bf16.msra.mxu0 %v1302
  %1583 = vmatprep.subr.bf16.mxu0 0
  %1584 = vmatpush1.bf16.msra.mxu0 %v1303
  %1585 = vmatprep.subr.bf16.mxu0 0
  %1586 = vmatpush1.bf16.msra.mxu0 %v1304
  %1587 = vmatprep.subr.bf16.mxu0 0
  %1588 = vmatpush1.bf16.msra.mxu0 %v1305
  %1589 = vmatprep.subr.bf16.mxu0 0
  %1590 = vmatpush1.bf16.msra.mxu0 %v1306
  %1591 = vmatprep.subr.bf16.mxu0 0
  %1592 = vmatpush1.bf16.msra.mxu0 %v1307
  %1593 = vmatprep.subr.bf16.mxu0 0
  %1594 = vmatpush1.bf16.msra.mxu0 %v1308
  %1595 = vmatprep.subr.bf16.mxu0 0
  %1596 = vmatpush1.bf16.msra.mxu0 %v1309
  %1597 = vmatprep.subr.bf16.mxu0 0
  %1598 = vmatpush1.bf16.msra.mxu0 %v1310
  %1599 = vmatprep.mubr.bf16.mxu0 %v389
  %1600 = vmatmul.mubr.bf16.gmra.mrb[0].mxu0 %v388
  %v1601 = vpop.f32.mrb[0].mxu0
  %v1602 = vadd.f32 %v1562, %v1601
  %v1603 = vpop.f32.mrb[0].mxu0
  %v1604 = vpop.f32.mrb[0].mxu0
  %v1605 = vpop.f32.mrb[0].mxu0
  %1606 = vdwg.mxu0
  %1607 = vmatprep.subr.bf16.mxu0 0
  %1608 = vmatpush1.bf16.msra.mxu0 %v1311
  %1609 = vmatprep.subr.bf16.mxu0 0
  %1610 = vmatpush1.bf16.msra.mxu0 %v1312
  %1611 = vmatprep.subr.bf16.mxu0 0
  %1612 = vmatpush1.bf16.msra.mxu0 %v1313
  %1613 = vmatprep.subr.bf16.mxu0 0
  %1614 = vmatpush1.bf16.msra.mxu0 %v1314
  %1615 = vmatprep.subr.bf16.mxu0 0
  %1616 = vmatpush1.bf16.msra.mxu0 %v1315
  %1617 = vmatprep.subr.bf16.mxu0 0
  %1618 = vmatpush1.bf16.msra.mxu0 %v1316
  %1619 = vmatprep.subr.bf16.mxu0 0
  %1620 = vmatpush1.bf16.msra.mxu0 %v1317
  %1621 = vmatprep.subr.bf16.mxu0 0
  %1622 = vmatpush1.bf16.msra.mxu0 %v1318
  %1623 = vmatprep.subr.bf16.mxu0 0
  %1624 = vmatpush1.bf16.msra.mxu0 %v1319
  %1625 = vmatprep.subr.bf16.mxu0 0
  %1626 = vmatpush1.bf16.msra.mxu0 %v1320
  %1627 = vmatprep.subr.bf16.mxu0 0
  %1628 = vmatpush1.bf16.msra.mxu0 %v1321
  %1629 = vmatprep.subr.bf16.mxu0 0
  %1630 = vmatpush1.bf16.msra.mxu0 %v1322
  %1631 = vmatprep.subr.bf16.mxu0 0
  %1632 = vmatpush1.bf16.msra.mxu0 %v1323
  %1633 = vmatprep.subr.bf16.mxu0 0
  %1634 = vmatpush1.bf16.msra.mxu0 %v1324
  %1635 = vmatprep.subr.bf16.mxu0 0
  %1636 = vmatpush1.bf16.msra.mxu0 %v1325
  %1637 = vmatprep.subr.bf16.mxu0 0
  %1638 = vmatpush1.bf16.msra.mxu0 %v1326
  %1639 = vmatprep.mubr.bf16.mxu0 %v438
  %1640 = vmatmul.mubr.bf16.gmra.mrb[0].mxu0 %v437
  %v1641 = vpop.f32.mrb[0].mxu0
  %v1642 = vadd.f32 %v1602, %v1641
  %v1643 = vpop.f32.mrb[0].mxu0
  %v1644 = vpop.f32.mrb[0].mxu0
  %v1645 = vpop.f32.mrb[0].mxu0
  %1646 = vdwg.mxu0
  %1647 = vmatprep.subr.bf16.mxu0 0
  %1648 = vmatpush1.bf16.msra.mxu0 %v1327
  %1649 = vmatprep.subr.bf16.mxu0 0
  %1650 = vmatpush1.bf16.msra.mxu0 %v1328
  %1651 = vmatprep.subr.bf16.mxu0 0
  %1652 = vmatpush1.bf16.msra.mxu0 %v1329
  %1653 = vmatprep.subr.bf16.mxu0 0
  %1654 = vmatpush1.bf16.msra.mxu0 %v1330
  %1655 = vmatprep.subr.bf16.mxu0 0
  %1656 = vmatpush1.bf16.msra.mxu0 %v1331
  %1657 = vmatprep.subr.bf16.mxu0 0
  %1658 = vmatpush1.bf16.msra.mxu0 %v1332
  %1659 = vmatprep.subr.bf16.mxu0 0
  %1660 = vmatpush1.bf16.msra.mxu0 %v1333
  %1661 = vmatprep.subr.bf16.mxu0 0
  %1662 = vmatpush1.bf16.msra.mxu0 %v1334
  %1663 = vmatprep.subr.bf16.mxu0 0
  %1664 = vmatpush1.bf16.msra.mxu0 %v1335
  %1665 = vmatprep.subr.bf16.mxu0 0
  %1666 = vmatpush1.bf16.msra.mxu0 %v1336
  %1667 = vmatprep.subr.bf16.mxu0 0
  %1668 = vmatpush1.bf16.msra.mxu0 %v1337
  %1669 = vmatprep.subr.bf16.mxu0 0
  %1670 = vmatpush1.bf16.msra.mxu0 %v1338
  %1671 = vmatprep.subr.bf16.mxu0 0
  %1672 = vmatpush1.bf16.msra.mxu0 %v1339
  %1673 = vmatprep.subr.bf16.mxu0 0
  %1674 = vmatpush1.bf16.msra.mxu0 %v1340
  %1675 = vmatprep.subr.bf16.mxu0 0
  %1676 = vmatpush1.bf16.msra.mxu0 %v1341
  %1677 = vmatprep.subr.bf16.mxu0 0
  %1678 = vmatpush1.bf16.msra.mxu0 %v1342
  %1679 = vmatprep.mubr.bf16.mxu0 %v486
  %1680 = vmatmul.mubr.bf16.gmra.mrb[0].mxu0 %v485
  %v1681 = vpop.f32.mrb[0].mxu0
  %v1682 = vadd.f32 %v1642, %v1681
  %v1683 = vpop.f32.mrb[0].mxu0
  %v1684 = vpop.f32.mrb[0].mxu0
  %v1685 = vpop.f32.mrb[0].mxu0
  %1686 = vdwg.mxu0
  %1687 = vmatprep.subr.bf16.mxu0 0
  %1688 = vmatpush1.bf16.msra.mxu0 %v1343
  %1689 = vmatprep.subr.bf16.mxu0 0
  %1690 = vmatpush1.bf16.msra.mxu0 %v1344
  %1691 = vmatprep.subr.bf16.mxu0 0
  %1692 = vmatpush1.bf16.msra.mxu0 %v1345
  %1693 = vmatprep.subr.bf16.mxu0 0
  %1694 = vmatpush1.bf16.msra.mxu0 %v1346
  %1695 = vmatprep.subr.bf16.mxu0 0
  %1696 = vmatpush1.bf16.msra.mxu0 %v1347
  %1697 = vmatprep.subr.bf16.mxu0 0
  %1698 = vmatpush1.bf16.msra.mxu0 %v1348
  %1699 = vmatprep.subr.bf16.mxu0 0
  %1700 = vmatpush1.bf16.msra.mxu0 %v1349
  %1701 = vmatprep.subr.bf16.mxu0 0
  %1702 = vmatpush1.bf16.msra.mxu0 %v1350
  %1703 = vmatprep.subr.bf16.mxu0 0
  %1704 = vmatpush1.bf16.msra.mxu0 %v1351
  %1705 = vmatprep.subr.bf16.mxu0 0
  %1706 = vmatpush1.bf16.msra.mxu0 %v1352
  %1707 = vmatprep.subr.bf16.mxu0 0
  %1708 = vmatpush1.bf16.msra.mxu0 %v1353
  %1709 = vmatprep.subr.bf16.mxu0 0
  %1710 = vmatpush1.bf16.msra.mxu0 %v1354
  %1711 = vmatprep.subr.bf16.mxu0 0
  %1712 = vmatpush1.bf16.msra.mxu0 %v1355
  %1713 = vmatprep.subr.bf16.mxu0 0
  %1714 = vmatpush1.bf16.msra.mxu0 %v1356
  %1715 = vmatprep.subr.bf16.mxu0 0
  %1716 = vmatpush1.bf16.msra.mxu0 %v1357
  %1717 = vmatprep.subr.bf16.mxu0 0
  %1718 = vmatpush1.bf16.msra.mxu0 %v1358
  %1719 = vmatprep.mubr.bf16.mxu0 %v535
  %1720 = vmatmul.mubr.bf16.gmra.mrb[0].mxu0 %v534
  %v1721 = vpop.f32.mrb[0].mxu0
  %v1722 = vadd.f32 %v1682, %v1721
  %v1723 = vpop.f32.mrb[0].mxu0
  %v1724 = vpop.f32.mrb[0].mxu0
  %v1725 = vpop.f32.mrb[0].mxu0
  %1726 = vdwg.mxu0
  %1727 = vmatprep.subr.bf16.mxu0 0
  %1728 = vmatpush1.bf16.msra.mxu0 %v1359
  %1729 = vmatprep.subr.bf16.mxu0 0
  %1730 = vmatpush1.bf16.msra.mxu0 %v1360
  %1731 = vmatprep.subr.bf16.mxu0 0
  %1732 = vmatpush1.bf16.msra.mxu0 %v1361
  %1733 = vmatprep.subr.bf16.mxu0 0
  %1734 = vmatpush1.bf16.msra.mxu0 %v1362
  %1735 = vmatprep.subr.bf16.mxu0 0
  %1736 = vmatpush1.bf16.msra.mxu0 %v1363
  %1737 = vmatprep.subr.bf16.mxu0 0
  %1738 = vmatpush1.bf16.msra.mxu0 %v1364
  %1739 = vmatprep.subr.bf16.mxu0 0
  %1740 = vmatpush1.bf16.msra.mxu0 %v1365
  %1741 = vmatprep.subr.bf16.mxu0 0
  %1742 = vmatpush1.bf16.msra.mxu0 %v1366
  %1743 = vmatprep.subr.bf16.mxu0 0
  %1744 = vmatpush1.bf16.msra.mxu0 %v1367
  %1745 = vmatprep.subr.bf16.mxu0 0
  %1746 = vmatpush1.bf16.msra.mxu0 %v1368
  %1747 = vmatprep.subr.bf16.mxu0 0
  %1748 = vmatpush1.bf16.msra.mxu0 %v1369
  %1749 = vmatprep.subr.bf16.mxu0 0
  %1750 = vmatpush1.bf16.msra.mxu0 %v1370
  %1751 = vmatprep.subr.bf16.mxu0 0
  %1752 = vmatpush1.bf16.msra.mxu0 %v1371
  %1753 = vmatprep.subr.bf16.mxu0 0
  %1754 = vmatpush1.bf16.msra.mxu0 %v1372
  %1755 = vmatprep.subr.bf16.mxu0 0
  %1756 = vmatpush1.bf16.msra.mxu0 %v1373
  %1757 = vmatprep.subr.bf16.mxu0 0
  %1758 = vmatpush1.bf16.msra.mxu0 %v1374
  %1759 = vmatprep.mubr.bf16.mxu0 %v583
  %1760 = vmatmul.mubr.bf16.gmra.mrb[0].mxu0 %v582
  %v1761 = vpop.f32.mrb[0].mxu0
  %v1762 = vadd.f32 %v1722, %v1761
  %v1763 = vpop.f32.mrb[0].mxu0
  %v1764 = vpop.f32.mrb[0].mxu0
  %v1765 = vpop.f32.mrb[0].mxu0
  %1766 = vdwg.mxu0
  %v1767 = vsub.f32 0.0, %v1762
  %v1768 = vmul.f32 %v1767, 1.442695
  %v1769 = vpow.pop %v1768
  %v1770 = vadd.f32 %v1769, 1.0
  %v1771 = vrcp.pop %v1770
  %v1772 = vpack.c.bf16 %v1771, %v1771
  %v1773 = vld [vmem:[%s5] sm:$0xff]
  %v1774 = vld [vmem:[%s5 + $0x8] sm:$0xff]
  %v1775 = vld [vmem:[%s5 + $0x10] sm:$0xff]
  %v1776 = vld [vmem:[%s5 + $0x18] sm:$0xff]
  %v1777 = vld [vmem:[%s5 + $0x20] sm:$0xf]
  %v1778 = vld [vmem:[%s5 + $0x24] sm:$0xff]
  %v1779 = vld [vmem:[%s5 + $0x2c] sm:$0xff]
  %v1780 = vld [vmem:[%s5 + $0x34] sm:$0xff]
  %v1781 = vld [vmem:[%s5 + $0x3c] sm:$0xff]
  %v1782 = vld [vmem:[%s5 + $0x44] sm:$0xf]
  %v1783 = vld [vmem:[%s5 + $0x48] sm:$0xff]
  %v1784 = vld [vmem:[%s5 + $0x50] sm:$0xff]
  %v1785 = vld [vmem:[%s5 + $0x58] sm:$0xff]
  %v1786 = vld [vmem:[%s5 + $0x60] sm:$0xff]
  %v1787 = vld [vmem:[%s5 + $0x68] sm:$0xf]
  %v1788 = vld [vmem:[%s5 + $0x6c] sm:$0xff]
  %v1789 = vld [vmem:[%s5 + $0x74] sm:$0xff]
  %v1790 = vld [vmem:[%s5 + $0x7c] sm:$0xff]
  %v1791 = vld [vmem:[%s5 + $0x84] sm:$0xff]
  %v1792 = vld [vmem:[%s5 + $0x8c] sm:$0xf]
  %v1793 = vld [vmem:[%s5 + $0x90] sm:$0xff]
  %v1794 = vld [vmem:[%s5 + $0x98] sm:$0xff]
  %v1795 = vld [vmem:[%s5 + $0xa0] sm:$0xff]
  %v1796 = vld [vmem:[%s5 + $0xa8] sm:$0xff]
  %v1797 = vld [vmem:[%s5 + $0xb0] sm:$0xf]
  %v1798 = vld [vmem:[%s5 + $0xb4] sm:$0xff]
  %v1799 = vld [vmem:[%s5 + $0xbc] sm:$0xff]
  %v1800 = vld [vmem:[%s5 + $0xc4] sm:$0xff]
  %v1801 = vld [vmem:[%s5 + $0xcc] sm:$0xff]
  %v1802 = vld [vmem:[%s5 + $0xd4] sm:$0xf]
  %v1803 = vld [vmem:[%s5 + $0xd8] sm:$0xff]
  %v1804 = vld [vmem:[%s5 + $0xe0] sm:$0xff]
  %v1805 = vld [vmem:[%s5 + $0xe8] sm:$0xff]
  %v1806 = vld [vmem:[%s5 + $0xf0] sm:$0xff]
  %v1807 = vld [vmem:[%s5 + $0xf8] sm:$0xf]
  %v1808 = vld [vmem:[%s5 + $0xfc] sm:$0xff]
  %v1809 = vld [vmem:[%s5 + $0x104] sm:$0xff]
  %v1810 = vld [vmem:[%s5 + $0x10c] sm:$0xff]
  %v1811 = vld [vmem:[%s5 + $0x114] sm:$0xff]
  %v1812 = vld [vmem:[%s5 + $0x11c] sm:$0xf]
  %v1813 = vld [vmem:[%s5 + $0x120] sm:$0xff]
  %v1814 = vld [vmem:[%s5 + $0x128] sm:$0xff]
  %v1815 = vld [vmem:[%s5 + $0x130] sm:$0xff]
  %v1816 = vld [vmem:[%s5 + $0x138] sm:$0xff]
  %v1817 = vld [vmem:[%s5 + $0x140] sm:$0xf]
  %v1818 = vld [vmem:[%s5 + $0x144] sm:$0xff]
  %v1819 = vld [vmem:[%s5 + $0x14c] sm:$0xff]
  %v1820 = vld [vmem:[%s5 + $0x154] sm:$0xff]
  %v1821 = vld [vmem:[%s5 + $0x15c] sm:$0xff]
  %v1822 = vld [vmem:[%s5 + $0x164] sm:$0xf]
  %v1823 = vld [vmem:[%s5 + $0x168] sm:$0xff]
  %v1824 = vld [vmem:[%s5 + $0x170] sm:$0xff]
  %v1825 = vld [vmem:[%s5 + $0x178] sm:$0xff]
  %v1826 = vld [vmem:[%s5 + $0x180] sm:$0xff]
  %v1827 = vld [vmem:[%s5 + $0x188] sm:$0xf]
  %v1828 = vld [vmem:[%s5 + $0x18c] sm:$0xff]
  %v1829 = vld [vmem:[%s5 + $0x194] sm:$0xff]
  %v1830 = vld [vmem:[%s5 + $0x19c] sm:$0xff]
  %v1831 = vld [vmem:[%s5 + $0x1a4] sm:$0xff]
  %v1832 = vld [vmem:[%s5 + $0x1ac] sm:$0xf]
  %v1833 = vld [vmem:[%s5 + $0x1b0] sm:$0xff]
  %v1834 = vld [vmem:[%s5 + $0x1b8] sm:$0xff]
  %v1835 = vld [vmem:[%s5 + $0x1c0] sm:$0xff]
  %v1836 = vld [vmem:[%s5 + $0x1c8] sm:$0xff]
  %v1837 = vld [vmem:[%s5 + $0x1d0] sm:$0xf]
  %v1838 = vld [vmem:[%s5 + $0x1d4] sm:$0xff]
  %v1839 = vld [vmem:[%s5 + $0x1dc] sm:$0xff]
  %v1840 = vld [vmem:[%s5 + $0x1e4] sm:$0xff]
  %v1841 = vld [vmem:[%s5 + $0x1ec] sm:$0xff]
  %v1842 = vld [vmem:[%s5 + $0x1f4] sm:$0xf]
  %v1843 = vld [vmem:[%s5 + $0x1f8] sm:$0xff]
  %v1844 = vld [vmem:[%s5 + $0x200] sm:$0xff]
  %v1845 = vld [vmem:[%s5 + $0x208] sm:$0xff]
  %v1846 = vld [vmem:[%s5 + $0x210] sm:$0xff]
  %v1847 = vld [vmem:[%s5 + $0x218] sm:$0xf]
  %v1848 = vld [vmem:[%s5 + $0x21c] sm:$0xff]
  %v1849 = vld [vmem:[%s5 + $0x224] sm:$0xff]
  %v1850 = vld [vmem:[%s5 + $0x22c] sm:$0xff]
  %v1851 = vld [vmem:[%s5 + $0x234] sm:$0xff]
  %v1852 = vld [vmem:[%s5 + $0x23c] sm:$0xf]
  %v1853 = vld [vmem:[%s6] sm:$0xff]
  %v1854 = vld [vmem:[%s6 + $0x8] sm:$0x1]
  %v1857 = vlaneseq
  %v1858 = vshrl.u32 %v1857, 7
  %v1859 = vsub.s32 0, %v1858
  %v1860 = vrot.slane %v1853, %v1859
  %v1861 = vlaneseq
  %v1862 = vshrl.u32 %v1861, 7
  %v1863 = vsub.s32 1, %v1862
  %v1864 = vrot.slane %v1853, %v1863
  %v1865 = vlaneseq
  %v1866 = vshrl.u32 %v1865, 7
  %v1867 = vsub.s32 2, %v1866
  %v1868 = vrot.slane %v1853, %v1867
  %v1869 = vlaneseq
  %v1870 = vshrl.u32 %v1869, 7
  %v1871 = vsub.s32 3, %v1870
  %v1872 = vrot.slane %v1853, %v1871
  %v1873 = vlaneseq
  %v1874 = vshrl.u32 %v1873, 7
  %v1875 = vsub.s32 4, %v1874
  %v1876 = vrot.slane %v1853, %v1875
  %v1877 = vlaneseq
  %v1878 = vshrl.u32 %v1877, 7
  %v1879 = vsub.s32 5, %v1878
  %v1880 = vrot.slane %v1853, %v1879
  %v1881 = vlaneseq
  %v1882 = vshrl.u32 %v1881, 7
  %v1883 = vsub.s32 6, %v1882
  %v1884 = vrot.slane %v1853, %v1883
  %v1885 = vlaneseq
  %v1886 = vshrl.u32 %v1885, 7
  %v1887 = vsub.s32 7, %v1886
  %v1888 = vrot.slane %v1853, %v1887
  %v1889 = vlaneseq
  %v1890 = vshrl.u32 %v1889, 7
  %v1891 = vsub.s32 0, %v1890
  %v1892 = vrot.slane %v1854, %v1891
  %v1982 = vunpack.c.l.b16 %v1773
  %v1983 = vunpack.c.h.b16 %v1773
  %v1984 = vunpack.c.l.b16 %v1774
  %v1985 = vunpack.c.h.b16 %v1774
  %v1986 = vunpack.c.l.b16 %v1775
  %v1987 = vunpack.c.h.b16 %v1775
  %v1988 = vunpack.c.l.b16 %v1776
  %v1989 = vunpack.c.h.b16 %v1776
  %v1990 = vunpack.c.l.b16 %v1777
  %v1991 = vunpack.c.l.b16 %v1778
  %v1992 = vunpack.c.h.b16 %v1778
  %v1993 = vunpack.c.l.b16 %v1779
  %v1994 = vunpack.c.h.b16 %v1779
  %v1995 = vunpack.c.l.b16 %v1780
  %v1996 = vunpack.c.h.b16 %v1780
  %v1997 = vunpack.c.l.b16 %v1781
  %v1998 = vunpack.c.h.b16 %v1781
  %v1999 = vunpack.c.l.b16 %v1782
  %v2000 = vunpack.c.l.b16 %v1783
  %v2001 = vunpack.c.h.b16 %v1783
  %v2002 = vunpack.c.l.b16 %v1784
  %v2003 = vunpack.c.h.b16 %v1784
  %v2004 = vunpack.c.l.b16 %v1785
  %v2005 = vunpack.c.h.b16 %v1785
  %v2006 = vunpack.c.l.b16 %v1786
  %v2007 = vunpack.c.h.b16 %v1786
  %v2008 = vunpack.c.l.b16 %v1787
  %v2009 = vunpack.c.l.b16 %v1788
  %v2010 = vunpack.c.h.b16 %v1788
  %v2011 = vunpack.c.l.b16 %v1789
  %v2012 = vunpack.c.h.b16 %v1789
  %v2013 = vunpack.c.l.b16 %v1790
  %v2014 = vunpack.c.h.b16 %v1790
  %v2015 = vunpack.c.l.b16 %v1791
  %v2016 = vunpack.c.h.b16 %v1791
  %v2017 = vunpack.c.l.b16 %v1792
  %v2018 = vunpack.c.l.b16 %v1793
  %v2019 = vunpack.c.h.b16 %v1793
  %v2020 = vunpack.c.l.b16 %v1794
  %v2021 = vunpack.c.h.b16 %v1794
  %v2022 = vunpack.c.l.b16 %v1795
  %v2023 = vunpack.c.h.b16 %v1795
  %v2024 = vunpack.c.l.b16 %v1796
  %v2025 = vunpack.c.h.b16 %v1796
  %v2026 = vunpack.c.l.b16 %v1797
  %v2027 = vunpack.c.l.b16 %v1798
  %v2028 = vunpack.c.h.b16 %v1798
  %v2029 = vunpack.c.l.b16 %v1799
  %v2030 = vunpack.c.h.b16 %v1799
  %v2031 = vunpack.c.l.b16 %v1800
  %v2032 = vunpack.c.h.b16 %v1800
  %v2033 = vunpack.c.l.b16 %v1801
  %v2034 = vunpack.c.h.b16 %v1801
  %v2035 = vunpack.c.l.b16 %v1802
  %v2036 = vunpack.c.l.b16 %v1803
  %v2037 = vunpack.c.h.b16 %v1803
  %v2038 = vunpack.c.l.b16 %v1804
  %v2039 = vunpack.c.h.b16 %v1804
  %v2040 = vunpack.c.l.b16 %v1805
  %v2041 = vunpack.c.h.b16 %v1805
  %v2042 = vunpack.c.l.b16 %v1806
  %v2043 = vunpack.c.h.b16 %v1806
  %v2044 = vunpack.c.l.b16 %v1807
  %v2045 = vunpack.c.l.b16 %v1808
  %v2046 = vunpack.c.h.b16 %v1808
  %v2047 = vunpack.c.l.b16 %v1809
  %v2048 = vunpack.c.h.b16 %v1809
  %v2049 = vunpack.c.l.b16 %v1810
  %v2050 = vunpack.c.h.b16 %v1810
  %v2051 = vunpack.c.l.b16 %v1811
  %v2052 = vunpack.c.h.b16 %v1811
  %v2053 = vunpack.c.l.b16 %v1812
  %v2054 = vunpack.c.l.b16 %v1813
  %v2055 = vunpack.c.h.b16 %v1813
  %v2056 = vunpack.c.l.b16 %v1814
  %v2057 = vunpack.c.h.b16 %v1814
  %v2058 = vunpack.c.l.b16 %v1815
  %v2059 = vunpack.c.h.b16 %v1815
  %v2060 = vunpack.c.l.b16 %v1816
  %v2061 = vunpack.c.h.b16 %v1816
  %v2062 = vunpack.c.l.b16 %v1817
  %v2063 = vunpack.c.l.b16 %v1818
  %v2064 = vunpack.c.h.b16 %v1818
  %v2065 = vunpack.c.l.b16 %v1819
  %v2066 = vunpack.c.h.b16 %v1819
  %v2067 = vunpack.c.l.b16 %v1820
  %v2068 = vunpack.c.h.b16 %v1820
  %v2069 = vunpack.c.l.b16 %v1821
  %v2070 = vunpack.c.h.b16 %v1821
  %v2071 = vunpack.c.l.b16 %v1822
  %v2072 = vunpack.c.l.b16 %v1823
  %v2073 = vunpack.c.h.b16 %v1823
  %v2074 = vunpack.c.l.b16 %v1824
  %v2075 = vunpack.c.h.b16 %v1824
  %v2076 = vunpack.c.l.b16 %v1825
  %v2077 = vunpack.c.h.b16 %v1825
  %v2078 = vunpack.c.l.b16 %v1826
  %v2079 = vunpack.c.h.b16 %v1826
  %v2080 = vunpack.c.l.b16 %v1827
  %v2081 = vunpack.c.l.b16 %v1828
  %v2082 = vunpack.c.h.b16 %v1828
  %v2083 = vunpack.c.l.b16 %v1829
  %v2084 = vunpack.c.h.b16 %v1829
  %v2085 = vunpack.c.l.b16 %v1830
  %v2086 = vunpack.c.h.b16 %v1830
  %v2087 = vunpack.c.l.b16 %v1831
  %v2088 = vunpack.c.h.b16 %v1831
  %v2089 = vunpack.c.l.b16 %v1832
  %v2090 = vunpack.c.l.b16 %v1833
  %v2091 = vunpack.c.h.b16 %v1833
  %v2092 = vunpack.c.l.b16 %v1834
  %v2093 = vunpack.c.h.b16 %v1834
  %v2094 = vunpack.c.l.b16 %v1835
  %v2095 = vunpack.c.h.b16 %v1835
  %v2096 = vunpack.c.l.b16 %v1836
  %v2097 = vunpack.c.h.b16 %v1836
  %v2098 = vunpack.c.l.b16 %v1837
  %v2099 = vunpack.c.l.b16 %v1838
  %v2100 = vunpack.c.h.b16 %v1838
  %v2101 = vunpack.c.l.b16 %v1839
  %v2102 = vunpack.c.h.b16 %v1839
  %v2103 = vunpack.c.l.b16 %v1840
  %v2104 = vunpack.c.h.b16 %v1840
  %v2105 = vunpack.c.l.b16 %v1841
  %v2106 = vunpack.c.h.b16 %v1841
  %v2107 = vunpack.c.l.b16 %v1842
  %v2108 = vunpack.c.l.b16 %v1843
  %v2109 = vunpack.c.h.b16 %v1843
  %v2110 = vunpack.c.l.b16 %v1844
  %v2111 = vunpack.c.h.b16 %v1844
  %v2112 = vunpack.c.l.b16 %v1845
  %v2113 = vunpack.c.h.b16 %v1845
  %v2114 = vunpack.c.l.b16 %v1846
  %v2115 = vunpack.c.h.b16 %v1846
  %v2116 = vunpack.c.l.b16 %v1847
  %v2117 = vunpack.c.l.b16 %v1848
  %v2118 = vunpack.c.h.b16 %v1848
  %v2119 = vunpack.c.l.b16 %v1849
  %v2120 = vunpack.c.h.b16 %v1849
  %v2121 = vunpack.c.l.b16 %v1850
  %v2122 = vunpack.c.h.b16 %v1850
  %v2123 = vunpack.c.l.b16 %v1851
  %v2124 = vunpack.c.h.b16 %v1851
  %v2125 = vunpack.c.l.b16 %v1852
  %v2126 = vpack.c.b16 %v1991, %v1982
  %v2127 = vpack.c.b16 %v1992, %v1983
  %v2128 = vpack.c.b16 %v1993, %v1984
  %v2129 = vpack.c.b16 %v1994, %v1985
  %v2130 = vpack.c.b16 %v1995, %v1986
  %v2131 = vpack.c.b16 %v1996, %v1987
  %v2132 = vpack.c.b16 %v1997, %v1988
  %v2133 = vpack.c.b16 %v1998, %v1989
  %v2134 = vpack.c.b16 %v1999, %v1990
  %v2135 = vpack.c.b16 %v2009, %v2000
  %v2136 = vpack.c.b16 %v2010, %v2001
  %v2137 = vpack.c.b16 %v2011, %v2002
  %v2138 = vpack.c.b16 %v2012, %v2003
  %v2139 = vpack.c.b16 %v2013, %v2004
  %v2140 = vpack.c.b16 %v2014, %v2005
  %v2141 = vpack.c.b16 %v2015, %v2006
  %v2142 = vpack.c.b16 %v2016, %v2007
  %v2143 = vpack.c.b16 %v2017, %v2008
  %v2144 = vpack.c.b16 %v2027, %v2018
  %v2145 = vpack.c.b16 %v2028, %v2019
  %v2146 = vpack.c.b16 %v2029, %v2020
  %v2147 = vpack.c.b16 %v2030, %v2021
  %v2148 = vpack.c.b16 %v2031, %v2022
  %v2149 = vpack.c.b16 %v2032, %v2023
  %v2150 = vpack.c.b16 %v2033, %v2024
  %v2151 = vpack.c.b16 %v2034, %v2025
  %v2152 = vpack.c.b16 %v2035, %v2026
  %v2153 = vpack.c.b16 %v2045, %v2036
  %v2154 = vpack.c.b16 %v2046, %v2037
  %v2155 = vpack.c.b16 %v2047, %v2038
  %v2156 = vpack.c.b16 %v2048, %v2039
  %v2157 = vpack.c.b16 %v2049, %v2040
  %v2158 = vpack.c.b16 %v2050, %v2041
  %v2159 = vpack.c.b16 %v2051, %v2042
  %v2160 = vpack.c.b16 %v2052, %v2043
  %v2161 = vpack.c.b16 %v2053, %v2044
  %v2162 = vpack.c.b16 %v2063, %v2054
  %v2163 = vpack.c.b16 %v2064, %v2055
  %v2164 = vpack.c.b16 %v2065, %v2056
  %v2165 = vpack.c.b16 %v2066, %v2057
  %v2166 = vpack.c.b16 %v2067, %v2058
  %v2167 = vpack.c.b16 %v2068, %v2059
  %v2168 = vpack.c.b16 %v2069, %v2060
  %v2169 = vpack.c.b16 %v2070, %v2061
  %v2170 = vpack.c.b16 %v2071, %v2062
  %v2171 = vpack.c.b16 %v2081, %v2072
  %v2172 = vpack.c.b16 %v2082, %v2073
  %v2173 = vpack.c.b16 %v2083, %v2074
  %v2174 = vpack.c.b16 %v2084, %v2075
  %v2175 = vpack.c.b16 %v2085, %v2076
  %v2176 = vpack.c.b16 %v2086, %v2077
  %v2177 = vpack.c.b16 %v2087, %v2078
  %v2178 = vpack.c.b16 %v2088, %v2079
  %v2179 = vpack.c.b16 %v2089, %v2080
  %v2180 = vpack.c.b16 %v2099, %v2090
  %v2181 = vpack.c.b16 %v2100, %v2091
  %v2182 = vpack.c.b16 %v2101, %v2092
  %v2183 = vpack.c.b16 %v2102, %v2093
  %v2184 = vpack.c.b16 %v2103, %v2094
  %v2185 = vpack.c.b16 %v2104, %v2095
  %v2186 = vpack.c.b16 %v2105, %v2096
  %v2187 = vpack.c.b16 %v2106, %v2097
  %v2188 = vpack.c.b16 %v2107, %v2098
  %v2189 = vpack.c.b16 %v2117, %v2108
  %v2190 = vpack.c.b16 %v2118, %v2109
  %v2191 = vpack.c.b16 %v2119, %v2110
  %v2192 = vpack.c.b16 %v2120, %v2111
  %v2193 = vpack.c.b16 %v2121, %v2112
  %v2194 = vpack.c.b16 %v2122, %v2113
  %v2195 = vpack.c.b16 %v2123, %v2114
  %v2196 = vpack.c.b16 %v2124, %v2115
  %v2197 = vpack.c.b16 %v2125, %v2116
  %2270 = vmatprep.subr.bf16.mxu0 %v2127
  %2271 = vmatpush1.bf16.msra.mxu0 %v2126
  %2272 = vmatprep.subr.bf16.mxu0 %v2136
  %2273 = vmatpush1.bf16.msra.mxu0 %v2135
  %2274 = vmatprep.subr.bf16.mxu0 %v2145
  %2275 = vmatpush1.bf16.msra.mxu0 %v2144
  %2276 = vmatprep.subr.bf16.mxu0 %v2154
  %2277 = vmatpush1.bf16.msra.mxu0 %v2153
  %2278 = vmatprep.subr.bf16.mxu0 %v2163
  %2279 = vmatpush1.bf16.msra.mxu0 %v2162
  %2280 = vmatprep.subr.bf16.mxu0 %v2172
  %2281 = vmatpush1.bf16.msra.mxu0 %v2171
  %2282 = vmatprep.subr.bf16.mxu0 %v2181
  %2283 = vmatpush1.bf16.msra.mxu0 %v2180
  %2284 = vmatprep.subr.bf16.mxu0 %v2190
  %2285 = vmatpush1.bf16.msra.mxu0 %v2189
  %2286 = vmatprep.subr.bf16.mxu0 0
  %2287 = vmatpush1.bf16.msra.mxu0 0
  %2288 = vmatprep.subr.bf16.mxu0 0
  %2289 = vmatpush1.bf16.msra.mxu0 0
  %2290 = vmatprep.subr.bf16.mxu0 0
  %2291 = vmatpush1.bf16.msra.mxu0 0
  %2292 = vmatprep.subr.bf16.mxu0 0
  %2293 = vmatpush1.bf16.msra.mxu0 0
  %2294 = vmatprep.subr.bf16.mxu0 0
  %2295 = vmatpush1.bf16.msra.mxu0 0
  %2296 = vmatprep.subr.bf16.mxu0 0
  %2297 = vmatpush1.bf16.msra.mxu0 0
  %2298 = vmatprep.subr.bf16.mxu0 0
  %2299 = vmatpush1.bf16.msra.mxu0 0
  %2300 = vmatprep.subr.bf16.mxu0 0
  %2301 = vmatpush1.bf16.msra.mxu0 0
  %2302 = vmatprep.mubr.bf16.mxu0 0
  %2303 = vmatmul.mubr.bf16.gmra.mrb[0].mxu0 %v1772
  %v2304 = vpop.f32.mrb[0].mxu0
  %v2305 = vadd.f32 %v1860, %v2304
  %v2306 = vpop.f32.mrb[0].mxu0
  %v2307 = vadd.f32 %v1864, %v2306
  %v2308 = vpop.f32.mrb[0].mxu0
  %v2309 = vpop.f32.mrb[0].mxu0
  %2310 = vdwg.mxu0
  %2311 = vmatprep.subr.bf16.mxu0 %v2129
  %2312 = vmatpush1.bf16.msra.mxu0 %v2128
  %2313 = vmatprep.subr.bf16.mxu0 %v2138
  %2314 = vmatpush1.bf16.msra.mxu0 %v2137
  %2315 = vmatprep.subr.bf16.mxu0 %v2147
  %2316 = vmatpush1.bf16.msra.mxu0 %v2146
  %2317 = vmatprep.subr.bf16.mxu0 %v2156
  %2318 = vmatpush1.bf16.msra.mxu0 %v2155
  %2319 = vmatprep.subr.bf16.mxu0 %v2165
  %2320 = vmatpush1.bf16.msra.mxu0 %v2164
  %2321 = vmatprep.subr.bf16.mxu0 %v2174
  %2322 = vmatpush1.bf16.msra.mxu0 %v2173
  %2323 = vmatprep.subr.bf16.mxu0 %v2183
  %2324 = vmatpush1.bf16.msra.mxu0 %v2182
  %2325 = vmatprep.subr.bf16.mxu0 %v2192
  %2326 = vmatpush1.bf16.msra.mxu0 %v2191
  %2327 = vmatprep.subr.bf16.mxu0 0
  %2328 = vmatpush1.bf16.msra.mxu0 0
  %2329 = vmatprep.subr.bf16.mxu0 0
  %2330 = vmatpush1.bf16.msra.mxu0 0
  %2331 = vmatprep.subr.bf16.mxu0 0
  %2332 = vmatpush1.bf16.msra.mxu0 0
  %2333 = vmatprep.subr.bf16.mxu0 0
  %2334 = vmatpush1.bf16.msra.mxu0 0
  %2335 = vmatprep.subr.bf16.mxu0 0
  %2336 = vmatpush1.bf16.msra.mxu0 0
  %2337 = vmatprep.subr.bf16.mxu0 0
  %2338 = vmatpush1.bf16.msra.mxu0 0
  %2339 = vmatprep.subr.bf16.mxu0 0
  %2340 = vmatpush1.bf16.msra.mxu0 0
  %2341 = vmatprep.subr.bf16.mxu0 0
  %2342 = vmatpush1.bf16.msra.mxu0 0
  %2343 = vmatprep.mubr.bf16.mxu0 0
  %2344 = vmatmul.mubr.bf16.gmra.mrb[0].mxu0 %v1772
  %v2345 = vpop.f32.mrb[0].mxu0
  %v2346 = vadd.f32 %v1868, %v2345
  %v2347 = vpop.f32.mrb[0].mxu0
  %v2348 = vadd.f32 %v1872, %v2347
  %v2349 = vpop.f32.mrb[0].mxu0
  %v2350 = vpop.f32.mrb[0].mxu0
  %2351 = vdwg.mxu0
  %2352 = vmatprep.subr.bf16.mxu0 %v2131
  %2353 = vmatpush1.bf16.msra.mxu0 %v2130
  %2354 = vmatprep.subr.bf16.mxu0 %v2140
  %2355 = vmatpush1.bf16.msra.mxu0 %v2139
  %2356 = vmatprep.subr.bf16.mxu0 %v2149
  %2357 = vmatpush1.bf16.msra.mxu0 %v2148
  %2358 = vmatprep.subr.bf16.mxu0 %v2158
  %2359 = vmatpush1.bf16.msra.mxu0 %v2157
  %2360 = vmatprep.subr.bf16.mxu0 %v2167
  %2361 = vmatpush1.bf16.msra.mxu0 %v2166
  %2362 = vmatprep.subr.bf16.mxu0 %v2176
  %2363 = vmatpush1.bf16.msra.mxu0 %v2175
  %2364 = vmatprep.subr.bf16.mxu0 %v2185
  %2365 = vmatpush1.bf16.msra.mxu0 %v2184
  %2366 = vmatprep.subr.bf16.mxu0 %v2194
  %2367 = vmatpush1.bf16.msra.mxu0 %v2193
  %2368 = vmatprep.subr.bf16.mxu0 0
  %2369 = vmatpush1.bf16.msra.mxu0 0
  %2370 = vmatprep.subr.bf16.mxu0 0
  %2371 = vmatpush1.bf16.msra.mxu0 0
  %2372 = vmatprep.subr.bf16.mxu0 0
  %2373 = vmatpush1.bf16.msra.mxu0 0
  %2374 = vmatprep.subr.bf16.mxu0 0
  %2375 = vmatpush1.bf16.msra.mxu0 0
  %2376 = vmatprep.subr.bf16.mxu0 0
  %2377 = vmatpush1.bf16.msra.mxu0 0
  %2378 = vmatprep.subr.bf16.mxu0 0
  %2379 = vmatpush1.bf16.msra.mxu0 0
  %2380 = vmatprep.subr.bf16.mxu0 0
  %2381 = vmatpush1.bf16.msra.mxu0 0
  %2382 = vmatprep.subr.bf16.mxu0 0
  %2383 = vmatpush1.bf16.msra.mxu0 0
  %2384 = vmatprep.mubr.bf16.mxu0 0
  %2385 = vmatmul.mubr.bf16.gmra.mrb[0].mxu0 %v1772
  %v2386 = vpop.f32.mrb[0].mxu0
  %v2387 = vadd.f32 %v1876, %v2386
  %v2388 = vpop.f32.mrb[0].mxu0
  %v2389 = vadd.f32 %v1880, %v2388
  %v2390 = vpop.f32.mrb[0].mxu0
  %v2391 = vpop.f32.mrb[0].mxu0
  %2392 = vdwg.mxu0
  %2393 = vmatprep.subr.bf16.mxu0 %v2133
  %2394 = vmatpush1.bf16.msra.mxu0 %v2132
  %2395 = vmatprep.subr.bf16.mxu0 %v2142
  %2396 = vmatpush1.bf16.msra.mxu0 %v2141
  %2397 = vmatprep.subr.bf16.mxu0 %v2151
  %2398 = vmatpush1.bf16.msra.mxu0 %v2150
  %2399 = vmatprep.subr.bf16.mxu0 %v2160
  %2400 = vmatpush1.bf16.msra.mxu0 %v2159
  %2401 = vmatprep.subr.bf16.mxu0 %v2169
  %2402 = vmatpush1.bf16.msra.mxu0 %v2168
  %2403 = vmatprep.subr.bf16.mxu0 %v2178
  %2404 = vmatpush1.bf16.msra.mxu0 %v2177
  %2405 = vmatprep.subr.bf16.mxu0 %v2187
  %2406 = vmatpush1.bf16.msra.mxu0 %v2186
  %2407 = vmatprep.subr.bf16.mxu0 %v2196
  %2408 = vmatpush1.bf16.msra.mxu0 %v2195
  %2409 = vmatprep.subr.bf16.mxu0 0
  %2410 = vmatpush1.bf16.msra.mxu0 0
  %2411 = vmatprep.subr.bf16.mxu0 0
  %2412 = vmatpush1.bf16.msra.mxu0 0
  %2413 = vmatprep.subr.bf16.mxu0 0
  %2414 = vmatpush1.bf16.msra.mxu0 0
  %2415 = vmatprep.subr.bf16.mxu0 0
  %2416 = vmatpush1.bf16.msra.mxu0 0
  %2417 = vmatprep.subr.bf16.mxu0 0
  %2418 = vmatpush1.bf16.msra.mxu0 0
  %2419 = vmatprep.subr.bf16.mxu0 0
  %2420 = vmatpush1.bf16.msra.mxu0 0
  %2421 = vmatprep.subr.bf16.mxu0 0
  %2422 = vmatpush1.bf16.msra.mxu0 0
  %2423 = vmatprep.subr.bf16.mxu0 0
  %2424 = vmatpush1.bf16.msra.mxu0 0
  %2425 = vmatprep.mubr.bf16.mxu0 0
  %2426 = vmatmul.mubr.bf16.gmra.mrb[0].mxu0 %v1772
  %v2427 = vpop.f32.mrb[0].mxu0
  %v2428 = vadd.f32 %v1884, %v2427
  %v2429 = vpop.f32.mrb[0].mxu0
  %v2430 = vadd.f32 %v1888, %v2429
  %v2431 = vpop.f32.mrb[0].mxu0
  %v2432 = vpop.f32.mrb[0].mxu0
  %2433 = vdwg.mxu0
  %2434 = vmatprep.subr.bf16.mxu0 0
  %2435 = vmatpush1.bf16.msra.mxu0 %v2134
  %2436 = vmatprep.subr.bf16.mxu0 0
  %2437 = vmatpush1.bf16.msra.mxu0 %v2143
  %2438 = vmatprep.subr.bf16.mxu0 0
  %2439 = vmatpush1.bf16.msra.mxu0 %v2152
  %2440 = vmatprep.subr.bf16.mxu0 0
  %2441 = vmatpush1.bf16.msra.mxu0 %v2161
  %2442 = vmatprep.subr.bf16.mxu0 0
  %2443 = vmatpush1.bf16.msra.mxu0 %v2170
  %2444 = vmatprep.subr.bf16.mxu0 0
  %2445 = vmatpush1.bf16.msra.mxu0 %v2179
  %2446 = vmatprep.subr.bf16.mxu0 0
  %2447 = vmatpush1.bf16.msra.mxu0 %v2188
  %2448 = vmatprep.subr.bf16.mxu0 0
  %2449 = vmatpush1.bf16.msra.mxu0 %v2197
  %2450 = vmatprep.subr.bf16.mxu0 0
  %2451 = vmatpush1.bf16.msra.mxu0 0
  %2452 = vmatprep.subr.bf16.mxu0 0
  %2453 = vmatpush1.bf16.msra.mxu0 0
  %2454 = vmatprep.subr.bf16.mxu0 0
  %2455 = vmatpush1.bf16.msra.mxu0 0
  %2456 = vmatprep.subr.bf16.mxu0 0
  %2457 = vmatpush1.bf16.msra.mxu0 0
  %2458 = vmatprep.subr.bf16.mxu0 0
  %2459 = vmatpush1.bf16.msra.mxu0 0
  %2460 = vmatprep.subr.bf16.mxu0 0
  %2461 = vmatpush1.bf16.msra.mxu0 0
  %2462 = vmatprep.subr.bf16.mxu0 0
  %2463 = vmatpush1.bf16.msra.mxu0 0
  %2464 = vmatprep.subr.bf16.mxu0 0
  %2465 = vmatpush1.bf16.msra.mxu0 0
  %2466 = vmatprep.mubr.bf16.mxu0 0
  %2467 = vmatmul.mubr.bf16.gmra.mrb[0].mxu0 %v1772
  %v2468 = vpop.f32.mrb[0].mxu0
  %v2469 = vadd.f32 %v1892, %v2468
  %v2470 = vpop.f32.mrb[0].mxu0
  %v2471 = vpop.f32.mrb[0].mxu0
  %v2472 = vpop.f32.mrb[0].mxu0
  %2473 = vdwg.mxu0
  %v2474 = vmax.f32 %v2305, 0.0
  %v2475 = vmax.f32 %v2307, 0.0
  %v2476 = vmax.f32 %v2346, 0.0
  %v2477 = vmax.f32 %v2348, 0.0
  %v2478 = vmax.f32 %v2387, 0.0
  %v2479 = vmax.f32 %v2389, 0.0
  %v2480 = vmax.f32 %v2428, 0.0
  %v2481 = vmax.f32 %v2430, 0.0
  %v2482 = vmax.f32 %v2469, 0.0
  %v2483 = vpack.c.bf16 %v2474, %v2474
  %v2484 = vpack.c.bf16 %v2475, %v2475
  %v2485 = vpack.c.bf16 %v2476, %v2476
  %v2486 = vpack.c.bf16 %v2477, %v2477
  %v2487 = vpack.c.bf16 %v2478, %v2478
  %v2488 = vpack.c.bf16 %v2479, %v2479
  %v2489 = vpack.c.bf16 %v2480, %v2480
  %v2490 = vpack.c.bf16 %v2481, %v2481
  %v2491 = vpack.c.bf16 %v2482, %v2482
  %v2492 = vld [vmem:[%s7] sm:$0xff]
  %v2493 = vld [vmem:[%s7 + $0x8] sm:$0xff]
  %v2494 = vld [vmem:[%s7 + $0x10] sm:$0xff]
  %v2495 = vld [vmem:[%s7 + $0x18] sm:$0xff]
  %v2496 = vld [vmem:[%s7 + $0x20] sm:$0xff]
  %v2497 = vld [vmem:[%s7 + $0x28] sm:$0xff]
  %v2498 = vld [vmem:[%s7 + $0x30] sm:$0xff]
  %v2499 = vld [vmem:[%s7 + $0x38] sm:$0xff]
  %v2500 = vld [vmem:[%s7 + $0x40] sm:$0xff]
  %v2501 = vld [vmem:[%s7 + $0x48] sm:$0xff]
  %v2502 = vld [vmem:[%s7 + $0x50] sm:$0xff]
  %v2503 = vld [vmem:[%s7 + $0x58] sm:$0xff]
  %v2504 = vld [vmem:[%s7 + $0x60] sm:$0xff]
  %v2505 = vld [vmem:[%s7 + $0x68] sm:$0xff]
  %v2506 = vld [vmem:[%s7 + $0x70] sm:$0xff]
  %v2507 = vld [vmem:[%s7 + $0x78] sm:$0xff]
  %v2508 = vld [vmem:[%s7 + $0x80] sm:$0xff]
  %v2509 = vld [vmem:[%s7 + $0x88] sm:$0xff]
  %v2510 = vld [vmem:[%s7 + $0x90] sm:$0xff]
  %v2511 = vld [vmem:[%s7 + $0x98] sm:$0xff]
  %v2512 = vld [vmem:[%s7 + $0xa0] sm:$0xff]
  %v2513 = vld [vmem:[%s7 + $0xa8] sm:$0xff]
  %v2514 = vld [vmem:[%s7 + $0xb0] sm:$0xff]
  %v2515 = vld [vmem:[%s7 + $0xb8] sm:$0xff]
  %v2516 = vld [vmem:[%s7 + $0xc0] sm:$0xff]
  %v2517 = vld [vmem:[%s7 + $0xc8] sm:$0xff]
  %v2518 = vld [vmem:[%s7 + $0xd0] sm:$0xff]
  %v2519 = vld [vmem:[%s7 + $0xd8] sm:$0xff]
  %v2520 = vld [vmem:[%s7 + $0xe0] sm:$0xff]
  %v2521 = vld [vmem:[%s7 + $0xe8] sm:$0xff]
  %v2522 = vld [vmem:[%s7 + $0xf0] sm:$0xff]
  %v2523 = vld [vmem:[%s7 + $0xf8] sm:$0xff]
  %v2524 = vld [vmem:[%s7 + $0x100] sm:$0xff]
  %v2525 = vld [vmem:[%s7 + $0x108] sm:$0xff]
  %v2526 = vld [vmem:[%s7 + $0x110] sm:$0xff]
  %v2527 = vld [vmem:[%s7 + $0x118] sm:$0xff]
  %v2528 = vld [vmem:[%s7 + $0x120] sm:$0xff]
  %v2529 = vld [vmem:[%s7 + $0x128] sm:$0xff]
  %v2530 = vld [vmem:[%s7 + $0x130] sm:$0xff]
  %v2531 = vld [vmem:[%s7 + $0x138] sm:$0xff]
  %v2532 = vld [vmem:[%s7 + $0x140] sm:$0xff]
  %v2533 = vld [vmem:[%s7 + $0x148] sm:$0xff]
  %v2534 = vld [vmem:[%s7 + $0x150] sm:$0xff]
  %v2535 = vld [vmem:[%s7 + $0x158] sm:$0xff]
  %v2536 = vld [vmem:[%s7 + $0x160] sm:$0xff]
  %v2537 = vld [vmem:[%s7 + $0x168] sm:$0xff]
  %v2538 = vld [vmem:[%s7 + $0x170] sm:$0xff]
  %v2539 = vld [vmem:[%s7 + $0x178] sm:$0xff]
  %v2540 = vld [vmem:[%s7 + $0x180] sm:$0xff]
  %v2541 = vld [vmem:[%s7 + $0x188] sm:$0xff]
  %v2542 = vld [vmem:[%s7 + $0x190] sm:$0xff]
  %v2543 = vld [vmem:[%s7 + $0x198] sm:$0xff]
  %v2544 = vld [vmem:[%s7 + $0x1a0] sm:$0xff]
  %v2545 = vld [vmem:[%s7 + $0x1a8] sm:$0xff]
  %v2546 = vld [vmem:[%s7 + $0x1b0] sm:$0xff]
  %v2547 = vld [vmem:[%s7 + $0x1b8] sm:$0xff]
  %v2548 = vld [vmem:[%s7 + $0x1c0] sm:$0xff]
  %v2549 = vld [vmem:[%s7 + $0x1c8] sm:$0xff]
  %v2550 = vld [vmem:[%s7 + $0x1d0] sm:$0xff]
  %v2551 = vld [vmem:[%s7 + $0x1d8] sm:$0xff]
  %v2552 = vld [vmem:[%s7 + $0x1e0] sm:$0xff]
  %v2553 = vld [vmem:[%s7 + $0x1e8] sm:$0xff]
  %v2554 = vld [vmem:[%s7 + $0x1f0] sm:$0xff]
  %v2555 = vld [vmem:[%s7 + $0x1f8] sm:$0xff]
  %v2556 = vld [vmem:[%s7 + $0x200] sm:$0xff]
  %v2557 = vld [vmem:[%s7 + $0x208] sm:$0xff]
  %v2558 = vld [vmem:[%s7 + $0x210] sm:$0xff]
  %v2559 = vld [vmem:[%s7 + $0x218] sm:$0xff]
  %v2560 = vld [vmem:[%s7 + $0x220] sm:$0xff]
  %v2561 = vld [vmem:[%s7 + $0x228] sm:$0xff]
  %v2562 = vld [vmem:[%s7 + $0x230] sm:$0xff]
  %v2563 = vld [vmem:[%s7 + $0x238] sm:$0xff]
  %v2564 = vld [vmem:[%s7 + $0x240] sm:$0xff]
  %v2565 = vld [vmem:[%s7 + $0x248] sm:$0xff]
  %v2566 = vld [vmem:[%s7 + $0x250] sm:$0xff]
  %v2567 = vld [vmem:[%s7 + $0x258] sm:$0xff]
  %v2568 = vld [vmem:[%s7 + $0x260] sm:$0xff]
  %v2569 = vld [vmem:[%s7 + $0x268] sm:$0xff]
  %v2570 = vld [vmem:[%s7 + $0x270] sm:$0xff]
  %v2571 = vld [vmem:[%s7 + $0x278] sm:$0xff]
  %v2572 = vld [vmem:[%s7 + $0x280] sm:$0xff]
  %v2573 = vld [vmem:[%s7 + $0x288] sm:$0xff]
  %v2574 = vld [vmem:[%s7 + $0x290] sm:$0xff]
  %v2575 = vld [vmem:[%s7 + $0x298] sm:$0xff]
  %v2576 = vld [vmem:[%s7 + $0x2a0] sm:$0xff]
  %v2577 = vld [vmem:[%s7 + $0x2a8] sm:$0xff]
  %v2578 = vld [vmem:[%s7 + $0x2b0] sm:$0xff]
  %v2579 = vld [vmem:[%s7 + $0x2b8] sm:$0xff]
  %v2580 = vld [vmem:[%s7 + $0x2c0] sm:$0xff]
  %v2581 = vld [vmem:[%s7 + $0x2c8] sm:$0xff]
  %v2582 = vld [vmem:[%s7 + $0x2d0] sm:$0xff]
  %v2583 = vld [vmem:[%s7 + $0x2d8] sm:$0xff]
  %v2584 = vld [vmem:[%s7 + $0x2e0] sm:$0xff]
  %v2585 = vld [vmem:[%s7 + $0x2e8] sm:$0xff]
  %v2586 = vld [vmem:[%s7 + $0x2f0] sm:$0xff]
  %v2587 = vld [vmem:[%s7 + $0x2f8] sm:$0xff]
  %v2588 = vld [vmem:[%s7 + $0x300] sm:$0xff]
  %v2589 = vld [vmem:[%s7 + $0x308] sm:$0xff]
  %v2590 = vld [vmem:[%s7 + $0x310] sm:$0xff]
  %v2591 = vld [vmem:[%s7 + $0x318] sm:$0xff]
  %v2592 = vld [vmem:[%s7 + $0x320] sm:$0xff]
  %v2593 = vld [vmem:[%s7 + $0x328] sm:$0xff]
  %v2594 = vld [vmem:[%s7 + $0x330] sm:$0xff]
  %v2595 = vld [vmem:[%s7 + $0x338] sm:$0xff]
  %v2596 = vld [vmem:[%s7 + $0x340] sm:$0xff]
  %v2597 = vld [vmem:[%s7 + $0x348] sm:$0xff]
  %v2598 = vld [vmem:[%s7 + $0x350] sm:$0xff]
  %v2599 = vld [vmem:[%s7 + $0x358] sm:$0xff]
  %v2600 = vld [vmem:[%s7 + $0x360] sm:$0xff]
  %v2601 = vld [vmem:[%s7 + $0x368] sm:$0xff]
  %v2602 = vld [vmem:[%s7 + $0x370] sm:$0xff]
  %v2603 = vld [vmem:[%s7 + $0x378] sm:$0xff]
  %v2604 = vld [vmem:[%s7 + $0x380] sm:$0xff]
  %v2605 = vld [vmem:[%s7 + $0x388] sm:$0xff]
  %v2606 = vld [vmem:[%s7 + $0x390] sm:$0xff]
  %v2607 = vld [vmem:[%s7 + $0x398] sm:$0xff]
  %v2608 = vld [vmem:[%s7 + $0x3a0] sm:$0xff]
  %v2609 = vld [vmem:[%s7 + $0x3a8] sm:$0xff]
  %v2610 = vld [vmem:[%s7 + $0x3b0] sm:$0xff]
  %v2611 = vld [vmem:[%s7 + $0x3b8] sm:$0xff]
  %v2612 = vld [vmem:[%s7 + $0x3c0] sm:$0xff]
  %v2613 = vld [vmem:[%s7 + $0x3c8] sm:$0xff]
  %v2614 = vld [vmem:[%s7 + $0x3d0] sm:$0xff]
  %v2615 = vld [vmem:[%s7 + $0x3d8] sm:$0xff]
  %v2616 = vld [vmem:[%s7 + $0x3e0] sm:$0xff]
  %v2617 = vld [vmem:[%s7 + $0x3e8] sm:$0xff]
  %v2618 = vld [vmem:[%s7 + $0x3f0] sm:$0xff]
  %v2619 = vld [vmem:[%s7 + $0x3f8] sm:$0xff]
  %v2620 = vld [vmem:[%s7 + $0x400] sm:$0xff]
  %v2621 = vld [vmem:[%s7 + $0x408] sm:$0xff]
  %v2622 = vld [vmem:[%s7 + $0x410] sm:$0xff]
  %v2623 = vld [vmem:[%s7 + $0x418] sm:$0xff]
  %v2624 = vld [vmem:[%s7 + $0x420] sm:$0xff]
  %v2625 = vld [vmem:[%s7 + $0x428] sm:$0xff]
  %v2626 = vld [vmem:[%s7 + $0x430] sm:$0xff]
  %v2627 = vld [vmem:[%s7 + $0x438] sm:$0xff]
  %v2628 = vld [vmem:[%s7 + $0x440] sm:$0xff]
  %v2629 = vld [vmem:[%s7 + $0x448] sm:$0xff]
  %v2630 = vld [vmem:[%s7 + $0x450] sm:$0xff]
  %v2631 = vld [vmem:[%s7 + $0x458] sm:$0xff]
  %v2632 = vld [vmem:[%s7 + $0x460] sm:$0xff]
  %v2633 = vld [vmem:[%s7 + $0x468] sm:$0xff]
  %v2634 = vld [vmem:[%s7 + $0x470] sm:$0xff]
  %v2635 = vld [vmem:[%s7 + $0x478] sm:$0xff]
  %v2636 = vld [vmem:[%s7 + $0x480] sm:$0xff]
  %v2637 = vld [vmem:[%s7 + $0x488] sm:$0xff]
  %v2638 = vld [vmem:[%s7 + $0x490] sm:$0xff]
  %v2639 = vld [vmem:[%s7 + $0x498] sm:$0xff]
  %v2640 = vld [vmem:[%s7 + $0x4a0] sm:$0xff]
  %v2641 = vld [vmem:[%s7 + $0x4a8] sm:$0xff]
  %v2642 = vld [vmem:[%s7 + $0x4b0] sm:$0xff]
  %v2643 = vld [vmem:[%s7 + $0x4b8] sm:$0xff]
  %v2644 = vld [vmem:[%s7 + $0x4c0] sm:$0xff]
  %v2645 = vld [vmem:[%s7 + $0x4c8] sm:$0xff]
  %v2646 = vld [vmem:[%s7 + $0x4d0] sm:$0xff]
  %v2647 = vld [vmem:[%s7 + $0x4d8] sm:$0xff]
  %v2648 = vld [vmem:[%s7 + $0x4e0] sm:$0xff]
  %v2649 = vld [vmem:[%s7 + $0x4e8] sm:$0xff]
  %v2650 = vld [vmem:[%s7 + $0x4f0] sm:$0xff]
  %v2651 = vld [vmem:[%s7 + $0x4f8] sm:$0xff]
  %v2652 = vld [vmem:[%s7 + $0x500] sm:$0xff]
  %v2653 = vld [vmem:[%s7 + $0x508] sm:$0xff]
  %v2654 = vld [vmem:[%s7 + $0x510] sm:$0xff]
  %v2655 = vld [vmem:[%s7 + $0x518] sm:$0xff]
  %v2656 = vld [vmem:[%s7 + $0x520] sm:$0xff]
  %v2657 = vld [vmem:[%s7 + $0x528] sm:$0xff]
  %v2658 = vld [vmem:[%s7 + $0x530] sm:$0xff]
  %v2659 = vld [vmem:[%s7 + $0x538] sm:$0xff]
  %v2660 = vld [vmem:[%s7 + $0x540] sm:$0xff]
  %v2661 = vld [vmem:[%s7 + $0x548] sm:$0xff]
  %v2662 = vld [vmem:[%s7 + $0x550] sm:$0xff]
  %v2663 = vld [vmem:[%s7 + $0x558] sm:$0xff]
  %v2664 = vld [vmem:[%s7 + $0x560] sm:$0xff]
  %v2665 = vld [vmem:[%s7 + $0x568] sm:$0xff]
  %v2666 = vld [vmem:[%s7 + $0x570] sm:$0xff]
  %v2667 = vld [vmem:[%s7 + $0x578] sm:$0xff]
  %v2668 = vld [vmem:[%s7 + $0x580] sm:$0xff]
  %v2669 = vld [vmem:[%s7 + $0x588] sm:$0xff]
  %v2670 = vld [vmem:[%s7 + $0x590] sm:$0xff]
  %v2671 = vld [vmem:[%s7 + $0x598] sm:$0xff]
  %v2672 = vld [vmem:[%s7 + $0x5a0] sm:$0xff]
  %v2673 = vld [vmem:[%s7 + $0x5a8] sm:$0xff]
  %v2674 = vld [vmem:[%s7 + $0x5b0] sm:$0xff]
  %v2675 = vld [vmem:[%s7 + $0x5b8] sm:$0xff]
  %v2676 = vld [vmem:[%s7 + $0x5c0] sm:$0xff]
  %v2677 = vld [vmem:[%s7 + $0x5c8] sm:$0xff]
  %v2678 = vld [vmem:[%s7 + $0x5d0] sm:$0xff]
  %v2679 = vld [vmem:[%s7 + $0x5d8] sm:$0xff]
  %v2680 = vld [vmem:[%s7 + $0x5e0] sm:$0xff]
  %v2681 = vld [vmem:[%s7 + $0x5e8] sm:$0xff]
  %v2682 = vld [vmem:[%s7 + $0x5f0] sm:$0xff]
  %v2683 = vld [vmem:[%s7 + $0x5f8] sm:$0xff]
  %v2684 = vld [vmem:[%s7 + $0x600] sm:$0xff]
  %v2685 = vld [vmem:[%s7 + $0x608] sm:$0xff]
  %v2686 = vld [vmem:[%s7 + $0x610] sm:$0xff]
  %v2687 = vld [vmem:[%s7 + $0x618] sm:$0xff]
  %v2688 = vld [vmem:[%s7 + $0x620] sm:$0xff]
  %v2689 = vld [vmem:[%s7 + $0x628] sm:$0xff]
  %v2690 = vld [vmem:[%s7 + $0x630] sm:$0xff]
  %v2691 = vld [vmem:[%s7 + $0x638] sm:$0xff]
  %v2692 = vld [vmem:[%s7 + $0x640] sm:$0xff]
  %v2693 = vld [vmem:[%s7 + $0x648] sm:$0xff]
  %v2694 = vld [vmem:[%s7 + $0x650] sm:$0xff]
  %v2695 = vld [vmem:[%s7 + $0x658] sm:$0xff]
  %v2696 = vld [vmem:[%s7 + $0x660] sm:$0xff]
  %v2697 = vld [vmem:[%s7 + $0x668] sm:$0xff]
  %v2698 = vld [vmem:[%s7 + $0x670] sm:$0xff]
  %v2699 = vld [vmem:[%s7 + $0x678] sm:$0xff]
  %v2700 = vld [vmem:[%s7 + $0x680] sm:$0xff]
  %v2701 = vld [vmem:[%s7 + $0x688] sm:$0xff]
  %v2702 = vld [vmem:[%s7 + $0x690] sm:$0xff]
  %v2703 = vld [vmem:[%s7 + $0x698] sm:$0xff]
  %v2704 = vld [vmem:[%s7 + $0x6a0] sm:$0xff]
  %v2705 = vld [vmem:[%s7 + $0x6a8] sm:$0xff]
  %v2706 = vld [vmem:[%s7 + $0x6b0] sm:$0xff]
  %v2707 = vld [vmem:[%s7 + $0x6b8] sm:$0xff]
  %v2708 = vld [vmem:[%s7 + $0x6c0] sm:$0xff]
  %v2709 = vld [vmem:[%s7 + $0x6c8] sm:$0xff]
  %v2710 = vld [vmem:[%s7 + $0x6d0] sm:$0xff]
  %v2711 = vld [vmem:[%s7 + $0x6d8] sm:$0xff]
  %v2712 = vld [vmem:[%s7 + $0x6e0] sm:$0xff]
  %v2713 = vld [vmem:[%s7 + $0x6e8] sm:$0xff]
  %v2714 = vld [vmem:[%s7 + $0x6f0] sm:$0xff]
  %v2715 = vld [vmem:[%s7 + $0x6f8] sm:$0xff]
  %v2716 = vld [vmem:[%s7 + $0x700] sm:$0xff]
  %v2717 = vld [vmem:[%s7 + $0x708] sm:$0xff]
  %v2718 = vld [vmem:[%s7 + $0x710] sm:$0xff]
  %v2719 = vld [vmem:[%s7 + $0x718] sm:$0xff]
  %v2720 = vld [vmem:[%s7 + $0x720] sm:$0xff]
  %v2721 = vld [vmem:[%s7 + $0x728] sm:$0xff]
  %v2722 = vld [vmem:[%s7 + $0x730] sm:$0xff]
  %v2723 = vld [vmem:[%s7 + $0x738] sm:$0xff]
  %v2724 = vld [vmem:[%s7 + $0x740] sm:$0xff]
  %v2725 = vld [vmem:[%s7 + $0x748] sm:$0xff]
  %v2726 = vld [vmem:[%s7 + $0x750] sm:$0xff]
  %v2727 = vld [vmem:[%s7 + $0x758] sm:$0xff]
  %v2728 = vld [vmem:[%s7 + $0x760] sm:$0xff]
  %v2729 = vld [vmem:[%s7 + $0x768] sm:$0xff]
  %v2730 = vld [vmem:[%s7 + $0x770] sm:$0xff]
  %v2731 = vld [vmem:[%s7 + $0x778] sm:$0xff]
  %v2732 = vld [vmem:[%s7 + $0x780] sm:$0xff]
  %v2733 = vld [vmem:[%s7 + $0x788] sm:$0xff]
  %v2734 = vld [vmem:[%s7 + $0x790] sm:$0xff]
  %v2735 = vld [vmem:[%s7 + $0x798] sm:$0xff]
  %v2736 = vld [vmem:[%s7 + $0x7a0] sm:$0xff]
  %v2737 = vld [vmem:[%s7 + $0x7a8] sm:$0xff]
  %v2738 = vld [vmem:[%s7 + $0x7b0] sm:$0xff]
  %v2739 = vld [vmem:[%s7 + $0x7b8] sm:$0xff]
  %v2740 = vld [vmem:[%s7 + $0x7c0] sm:$0xff]
  %v2741 = vld [vmem:[%s7 + $0x7c8] sm:$0xff]
  %v2742 = vld [vmem:[%s7 + $0x7d0] sm:$0xff]
  %v2743 = vld [vmem:[%s7 + $0x7d8] sm:$0xff]
  %v2744 = vld [vmem:[%s7 + $0x7e0] sm:$0xff]
  %v2745 = vld [vmem:[%s7 + $0x7e8] sm:$0xff]
  %v2746 = vld [vmem:[%s7 + $0x7f0] sm:$0xff]
  %v2747 = vld [vmem:[%s7 + $0x7f8] sm:$0xff]
  %v2748 = vld [vmem:[%s7 + $0x800] sm:$0xff]
  %v2749 = vld [vmem:[%s7 + $0x808] sm:$0xff]
  %v2750 = vld [vmem:[%s7 + $0x810] sm:$0xff]
  %v2751 = vld [vmem:[%s7 + $0x818] sm:$0xff]
  %v2752 = vld [vmem:[%s7 + $0x820] sm:$0xff]
  %v2753 = vld [vmem:[%s7 + $0x828] sm:$0xff]
  %v2754 = vld [vmem:[%s7 + $0x830] sm:$0xff]
  %v2755 = vld [vmem:[%s7 + $0x838] sm:$0xff]
  %v2756 = vld [vmem:[%s7 + $0x840] sm:$0xff]
  %v2757 = vld [vmem:[%s7 + $0x848] sm:$0xff]
  %v2758 = vld [vmem:[%s7 + $0x850] sm:$0xff]
  %v2759 = vld [vmem:[%s7 + $0x858] sm:$0xff]
  %v2760 = vld [vmem:[%s7 + $0x860] sm:$0xff]
  %v2761 = vld [vmem:[%s7 + $0x868] sm:$0xff]
  %v2762 = vld [vmem:[%s7 + $0x870] sm:$0xff]
  %v2763 = vld [vmem:[%s7 + $0x878] sm:$0xff]
  %v2764 = vld [vmem:[%s7 + $0x880] sm:$0xff]
  %v2765 = vld [vmem:[%s7 + $0x888] sm:$0xff]
  %v2766 = vld [vmem:[%s7 + $0x890] sm:$0xff]
  %v2767 = vld [vmem:[%s7 + $0x898] sm:$0xff]
  %v2768 = vld [vmem:[%s7 + $0x8a0] sm:$0xff]
  %v2769 = vld [vmem:[%s7 + $0x8a8] sm:$0xff]
  %v2770 = vld [vmem:[%s7 + $0x8b0] sm:$0xff]
  %v2771 = vld [vmem:[%s7 + $0x8b8] sm:$0xff]
  %v2772 = vld [vmem:[%s7 + $0x8c0] sm:$0xff]
  %v2773 = vld [vmem:[%s7 + $0x8c8] sm:$0xff]
  %v2774 = vld [vmem:[%s7 + $0x8d0] sm:$0xff]
  %v2775 = vld [vmem:[%s7 + $0x8d8] sm:$0xff]
  %v2776 = vld [vmem:[%s7 + $0x8e0] sm:$0xff]
  %v2777 = vld [vmem:[%s7 + $0x8e8] sm:$0xff]
  %v2778 = vld [vmem:[%s7 + $0x8f0] sm:$0xff]
  %v2779 = vld [vmem:[%s7 + $0x8f8] sm:$0xff]
  %v2780 = vld [vmem:[%s8] sm:$0xf]
  %v2782 = vlaneseq
  %v2783 = vshrl.u32 %v2782, 7
  %v2784 = vsub.s32 0, %v2783
  %v2785 = vrot.slane %v2780, %v2784
  %v2786 = vlaneseq
  %v2787 = vshrl.u32 %v2786, 7
  %v2788 = vsub.s32 1, %v2787
  %v2789 = vrot.slane %v2780, %v2788
  %v2790 = vlaneseq
  %v2791 = vshrl.u32 %v2790, 7
  %v2792 = vsub.s32 2, %v2791
  %v2793 = vrot.slane %v2780, %v2792
  %v2794 = vlaneseq
  %v2795 = vshrl.u32 %v2794, 7
  %v2796 = vsub.s32 3, %v2795
  %v2797 = vrot.slane %v2780, %v2796
  %v3090 = vunpack.c.l.b16 %v2492
  %v3091 = vunpack.c.h.b16 %v2492
  %v3092 = vunpack.c.l.b16 %v2493
  %v3093 = vunpack.c.h.b16 %v2493
  %v3094 = vunpack.c.l.b16 %v2494
  %v3095 = vunpack.c.h.b16 %v2494
  %v3096 = vunpack.c.l.b16 %v2495
  %v3097 = vunpack.c.h.b16 %v2495
  %v3098 = vunpack.c.l.b16 %v2496
  %v3099 = vunpack.c.h.b16 %v2496
  %v3100 = vunpack.c.l.b16 %v2497
  %v3101 = vunpack.c.h.b16 %v2497
  %v3102 = vunpack.c.l.b16 %v2498
  %v3103 = vunpack.c.h.b16 %v2498
  %v3104 = vunpack.c.l.b16 %v2499
  %v3105 = vunpack.c.h.b16 %v2499
  %v3106 = vunpack.c.l.b16 %v2500
  %v3107 = vunpack.c.h.b16 %v2500
  %v3108 = vunpack.c.l.b16 %v2501
  %v3109 = vunpack.c.h.b16 %v2501
  %v3110 = vunpack.c.l.b16 %v2502
  %v3111 = vunpack.c.h.b16 %v2502
  %v3112 = vunpack.c.l.b16 %v2503
  %v3113 = vunpack.c.h.b16 %v2503
  %v3114 = vunpack.c.l.b16 %v2504
  %v3115 = vunpack.c.h.b16 %v2504
  %v3116 = vunpack.c.l.b16 %v2505
  %v3117 = vunpack.c.h.b16 %v2505
  %v3118 = vunpack.c.l.b16 %v2506
  %v3119 = vunpack.c.h.b16 %v2506
  %v3120 = vunpack.c.l.b16 %v2507
  %v3121 = vunpack.c.h.b16 %v2507
  %v3122 = vunpack.c.l.b16 %v2508
  %v3123 = vunpack.c.h.b16 %v2508
  %v3124 = vunpack.c.l.b16 %v2509
  %v3125 = vunpack.c.h.b16 %v2509
  %v3126 = vunpack.c.l.b16 %v2510
  %v3127 = vunpack.c.h.b16 %v2510
  %v3128 = vunpack.c.l.b16 %v2511
  %v3129 = vunpack.c.h.b16 %v2511
  %v3130 = vunpack.c.l.b16 %v2512
  %v3131 = vunpack.c.h.b16 %v2512
  %v3132 = vunpack.c.l.b16 %v2513
  %v3133 = vunpack.c.h.b16 %v2513
  %v3134 = vunpack.c.l.b16 %v2514
  %v3135 = vunpack.c.h.b16 %v2514
  %v3136 = vunpack.c.l.b16 %v2515
  %v3137 = vunpack.c.h.b16 %v2515
  %v3138 = vunpack.c.l.b16 %v2516
  %v3139 = vunpack.c.h.b16 %v2516
  %v3140 = vunpack.c.l.b16 %v2517
  %v3141 = vunpack.c.h.b16 %v2517
  %v3142 = vunpack.c.l.b16 %v2518
  %v3143 = vunpack.c.h.b16 %v2518
  %v3144 = vunpack.c.l.b16 %v2519
  %v3145 = vunpack.c.h.b16 %v2519
  %v3146 = vunpack.c.l.b16 %v2520
  %v3147 = vunpack.c.h.b16 %v2520
  %v3148 = vunpack.c.l.b16 %v2521
  %v3149 = vunpack.c.h.b16 %v2521
  %v3150 = vunpack.c.l.b16 %v2522
  %v3151 = vunpack.c.h.b16 %v2522
  %v3152 = vunpack.c.l.b16 %v2523
  %v3153 = vunpack.c.h.b16 %v2523
  %v3154 = vunpack.c.l.b16 %v2524
  %v3155 = vunpack.c.h.b16 %v2524
  %v3156 = vunpack.c.l.b16 %v2525
  %v3157 = vunpack.c.h.b16 %v2525
  %v3158 = vunpack.c.l.b16 %v2526
  %v3159 = vunpack.c.h.b16 %v2526
  %v3160 = vunpack.c.l.b16 %v2527
  %v3161 = vunpack.c.h.b16 %v2527
  %v3162 = vunpack.c.l.b16 %v2528
  %v3163 = vunpack.c.h.b16 %v2528
  %v3164 = vunpack.c.l.b16 %v2529
  %v3165 = vunpack.c.h.b16 %v2529
  %v3166 = vunpack.c.l.b16 %v2530
  %v3167 = vunpack.c.h.b16 %v2530
  %v3168 = vunpack.c.l.b16 %v2531
  %v3169 = vunpack.c.h.b16 %v2531
  %v3170 = vunpack.c.l.b16 %v2532
  %v3171 = vunpack.c.h.b16 %v2532
  %v3172 = vunpack.c.l.b16 %v2533
  %v3173 = vunpack.c.h.b16 %v2533
  %v3174 = vunpack.c.l.b16 %v2534
  %v3175 = vunpack.c.h.b16 %v2534
  %v3176 = vunpack.c.l.b16 %v2535
  %v3177 = vunpack.c.h.b16 %v2535
  %v3178 = vunpack.c.l.b16 %v2536
  %v3179 = vunpack.c.h.b16 %v2536
  %v3180 = vunpack.c.l.b16 %v2537
  %v3181 = vunpack.c.h.b16 %v2537
  %v3182 = vunpack.c.l.b16 %v2538
  %v3183 = vunpack.c.h.b16 %v2538
  %v3184 = vunpack.c.l.b16 %v2539
  %v3185 = vunpack.c.h.b16 %v2539
  %v3186 = vunpack.c.l.b16 %v2540
  %v3187 = vunpack.c.h.b16 %v2540
  %v3188 = vunpack.c.l.b16 %v2541
  %v3189 = vunpack.c.h.b16 %v2541
  %v3190 = vunpack.c.l.b16 %v2542
  %v3191 = vunpack.c.h.b16 %v2542
  %v3192 = vunpack.c.l.b16 %v2543
  %v3193 = vunpack.c.h.b16 %v2543
  %v3194 = vunpack.c.l.b16 %v2544
  %v3195 = vunpack.c.h.b16 %v2544
  %v3196 = vunpack.c.l.b16 %v2545
  %v3197 = vunpack.c.h.b16 %v2545
  %v3198 = vunpack.c.l.b16 %v2546
  %v3199 = vunpack.c.h.b16 %v2546
  %v3200 = vunpack.c.l.b16 %v2547
  %v3201 = vunpack.c.h.b16 %v2547
  %v3202 = vunpack.c.l.b16 %v2548
  %v3203 = vunpack.c.h.b16 %v2548
  %v3204 = vunpack.c.l.b16 %v2549
  %v3205 = vunpack.c.h.b16 %v2549
  %v3206 = vunpack.c.l.b16 %v2550
  %v3207 = vunpack.c.h.b16 %v2550
  %v3208 = vunpack.c.l.b16 %v2551
  %v3209 = vunpack.c.h.b16 %v2551
  %v3210 = vunpack.c.l.b16 %v2552
  %v3211 = vunpack.c.h.b16 %v2552
  %v3212 = vunpack.c.l.b16 %v2553
  %v3213 = vunpack.c.h.b16 %v2553
  %v3214 = vunpack.c.l.b16 %v2554
  %v3215 = vunpack.c.h.b16 %v2554
  %v3216 = vunpack.c.l.b16 %v2555
  %v3217 = vunpack.c.h.b16 %v2555
  %v3218 = vunpack.c.l.b16 %v2556
  %v3219 = vunpack.c.h.b16 %v2556
  %v3220 = vunpack.c.l.b16 %v2557
  %v3221 = vunpack.c.h.b16 %v2557
  %v3222 = vunpack.c.l.b16 %v2558
  %v3223 = vunpack.c.h.b16 %v2558
  %v3224 = vunpack.c.l.b16 %v2559
  %v3225 = vunpack.c.h.b16 %v2559
  %v3226 = vunpack.c.l.b16 %v2560
  %v3227 = vunpack.c.h.b16 %v2560
  %v3228 = vunpack.c.l.b16 %v2561
  %v3229 = vunpack.c.h.b16 %v2561
  %v3230 = vunpack.c.l.b16 %v2562
  %v3231 = vunpack.c.h.b16 %v2562
  %v3232 = vunpack.c.l.b16 %v2563
  %v3233 = vunpack.c.h.b16 %v2563
  %v3234 = vunpack.c.l.b16 %v2564
  %v3235 = vunpack.c.h.b16 %v2564
  %v3236 = vunpack.c.l.b16 %v2565
  %v3237 = vunpack.c.h.b16 %v2565
  %v3238 = vunpack.c.l.b16 %v2566
  %v3239 = vunpack.c.h.b16 %v2566
  %v3240 = vunpack.c.l.b16 %v2567
  %v3241 = vunpack.c.h.b16 %v2567
  %v3242 = vunpack.c.l.b16 %v2568
  %v3243 = vunpack.c.h.b16 %v2568
  %v3244 = vunpack.c.l.b16 %v2569
  %v3245 = vunpack.c.h.b16 %v2569
  %v3246 = vunpack.c.l.b16 %v2570
  %v3247 = vunpack.c.h.b16 %v2570
  %v3248 = vunpack.c.l.b16 %v2571
  %v3249 = vunpack.c.h.b16 %v2571
  %v3250 = vunpack.c.l.b16 %v2572
  %v3251 = vunpack.c.h.b16 %v2572
  %v3252 = vunpack.c.l.b16 %v2573
  %v3253 = vunpack.c.h.b16 %v2573
  %v3254 = vunpack.c.l.b16 %v2574
  %v3255 = vunpack.c.h.b16 %v2574
  %v3256 = vunpack.c.l.b16 %v2575
  %v3257 = vunpack.c.h.b16 %v2575
  %v3258 = vunpack.c.l.b16 %v2576
  %v3259 = vunpack.c.h.b16 %v2576
  %v3260 = vunpack.c.l.b16 %v2577
  %v3261 = vunpack.c.h.b16 %v2577
  %v3262 = vunpack.c.l.b16 %v2578
  %v3263 = vunpack.c.h.b16 %v2578
  %v3264 = vunpack.c.l.b16 %v2579
  %v3265 = vunpack.c.h.b16 %v2579
  %v3266 = vunpack.c.l.b16 %v2580
  %v3267 = vunpack.c.h.b16 %v2580
  %v3268 = vunpack.c.l.b16 %v2581
  %v3269 = vunpack.c.h.b16 %v2581
  %v3270 = vunpack.c.l.b16 %v2582
  %v3271 = vunpack.c.h.b16 %v2582
  %v3272 = vunpack.c.l.b16 %v2583
  %v3273 = vunpack.c.h.b16 %v2583
  %v3274 = vunpack.c.l.b16 %v2584
  %v3275 = vunpack.c.h.b16 %v2584
  %v3276 = vunpack.c.l.b16 %v2585
  %v3277 = vunpack.c.h.b16 %v2585
  %v3278 = vunpack.c.l.b16 %v2586
  %v3279 = vunpack.c.h.b16 %v2586
  %v3280 = vunpack.c.l.b16 %v2587
  %v3281 = vunpack.c.h.b16 %v2587
  %v3282 = vunpack.c.l.b16 %v2588
  %v3283 = vunpack.c.h.b16 %v2588
  %v3284 = vunpack.c.l.b16 %v2589
  %v3285 = vunpack.c.h.b16 %v2589
  %v3286 = vunpack.c.l.b16 %v2590
  %v3287 = vunpack.c.h.b16 %v2590
  %v3288 = vunpack.c.l.b16 %v2591
  %v3289 = vunpack.c.h.b16 %v2591
  %v3290 = vunpack.c.l.b16 %v2592
  %v3291 = vunpack.c.h.b16 %v2592
  %v3292 = vunpack.c.l.b16 %v2593
  %v3293 = vunpack.c.h.b16 %v2593
  %v3294 = vunpack.c.l.b16 %v2594
  %v3295 = vunpack.c.h.b16 %v2594
  %v3296 = vunpack.c.l.b16 %v2595
  %v3297 = vunpack.c.h.b16 %v2595
  %v3298 = vunpack.c.l.b16 %v2596
  %v3299 = vunpack.c.h.b16 %v2596
  %v3300 = vunpack.c.l.b16 %v2597
  %v3301 = vunpack.c.h.b16 %v2597
  %v3302 = vunpack.c.l.b16 %v2598
  %v3303 = vunpack.c.h.b16 %v2598
  %v3304 = vunpack.c.l.b16 %v2599
  %v3305 = vunpack.c.h.b16 %v2599
  %v3306 = vunpack.c.l.b16 %v2600
  %v3307 = vunpack.c.h.b16 %v2600
  %v3308 = vunpack.c.l.b16 %v2601
  %v3309 = vunpack.c.h.b16 %v2601
  %v3310 = vunpack.c.l.b16 %v2602
  %v3311 = vunpack.c.h.b16 %v2602
  %v3312 = vunpack.c.l.b16 %v2603
  %v3313 = vunpack.c.h.b16 %v2603
  %v3314 = vunpack.c.l.b16 %v2604
  %v3315 = vunpack.c.h.b16 %v2604
  %v3316 = vunpack.c.l.b16 %v2605
  %v3317 = vunpack.c.h.b16 %v2605
  %v3318 = vunpack.c.l.b16 %v2606
  %v3319 = vunpack.c.h.b16 %v2606
  %v3320 = vunpack.c.l.b16 %v2607
  %v3321 = vunpack.c.h.b16 %v2607
  %v3322 = vunpack.c.l.b16 %v2608
  %v3323 = vunpack.c.h.b16 %v2608
  %v3324 = vunpack.c.l.b16 %v2609
  %v3325 = vunpack.c.h.b16 %v2609
  %v3326 = vunpack.c.l.b16 %v2610
  %v3327 = vunpack.c.h.b16 %v2610
  %v3328 = vunpack.c.l.b16 %v2611
  %v3329 = vunpack.c.h.b16 %v2611
  %v3330 = vunpack.c.l.b16 %v2612
  %v3331 = vunpack.c.h.b16 %v2612
  %v3332 = vunpack.c.l.b16 %v2613
  %v3333 = vunpack.c.h.b16 %v2613
  %v3334 = vunpack.c.l.b16 %v2614
  %v3335 = vunpack.c.h.b16 %v2614
  %v3336 = vunpack.c.l.b16 %v2615
  %v3337 = vunpack.c.h.b16 %v2615
  %v3338 = vunpack.c.l.b16 %v2616
  %v3339 = vunpack.c.h.b16 %v2616
  %v3340 = vunpack.c.l.b16 %v2617
  %v3341 = vunpack.c.h.b16 %v2617
  %v3342 = vunpack.c.l.b16 %v2618
  %v3343 = vunpack.c.h.b16 %v2618
  %v3344 = vunpack.c.l.b16 %v2619
  %v3345 = vunpack.c.h.b16 %v2619
  %v3346 = vunpack.c.l.b16 %v2620
  %v3347 = vunpack.c.h.b16 %v2620
  %v3348 = vunpack.c.l.b16 %v2621
  %v3349 = vunpack.c.h.b16 %v2621
  %v3350 = vunpack.c.l.b16 %v2622
  %v3351 = vunpack.c.h.b16 %v2622
  %v3352 = vunpack.c.l.b16 %v2623
  %v3353 = vunpack.c.h.b16 %v2623
  %v3354 = vunpack.c.l.b16 %v2624
  %v3355 = vunpack.c.h.b16 %v2624
  %v3356 = vunpack.c.l.b16 %v2625
  %v3357 = vunpack.c.h.b16 %v2625
  %v3358 = vunpack.c.l.b16 %v2626
  %v3359 = vunpack.c.h.b16 %v2626
  %v3360 = vunpack.c.l.b16 %v2627
  %v3361 = vunpack.c.h.b16 %v2627
  %v3362 = vunpack.c.l.b16 %v2628
  %v3363 = vunpack.c.h.b16 %v2628
  %v3364 = vunpack.c.l.b16 %v2629
  %v3365 = vunpack.c.h.b16 %v2629
  %v3366 = vunpack.c.l.b16 %v2630
  %v3367 = vunpack.c.h.b16 %v2630
  %v3368 = vunpack.c.l.b16 %v2631
  %v3369 = vunpack.c.h.b16 %v2631
  %v3370 = vunpack.c.l.b16 %v2632
  %v3371 = vunpack.c.h.b16 %v2632
  %v3372 = vunpack.c.l.b16 %v2633
  %v3373 = vunpack.c.h.b16 %v2633
  %v3374 = vunpack.c.l.b16 %v2634
  %v3375 = vunpack.c.h.b16 %v2634
  %v3376 = vunpack.c.l.b16 %v2635
  %v3377 = vunpack.c.h.b16 %v2635
  %v3378 = vunpack.c.l.b16 %v2636
  %v3379 = vunpack.c.h.b16 %v2636
  %v3380 = vunpack.c.l.b16 %v2637
  %v3381 = vunpack.c.h.b16 %v2637
  %v3382 = vunpack.c.l.b16 %v2638
  %v3383 = vunpack.c.h.b16 %v2638
  %v3384 = vunpack.c.l.b16 %v2639
  %v3385 = vunpack.c.h.b16 %v2639
  %v3386 = vunpack.c.l.b16 %v2640
  %v3387 = vunpack.c.h.b16 %v2640
  %v3388 = vunpack.c.l.b16 %v2641
  %v3389 = vunpack.c.h.b16 %v2641
  %v3390 = vunpack.c.l.b16 %v2642
  %v3391 = vunpack.c.h.b16 %v2642
  %v3392 = vunpack.c.l.b16 %v2643
  %v3393 = vunpack.c.h.b16 %v2643
  %v3394 = vunpack.c.l.b16 %v2644
  %v3395 = vunpack.c.h.b16 %v2644
  %v3396 = vunpack.c.l.b16 %v2645
  %v3397 = vunpack.c.h.b16 %v2645
  %v3398 = vunpack.c.l.b16 %v2646
  %v3399 = vunpack.c.h.b16 %v2646
  %v3400 = vunpack.c.l.b16 %v2647
  %v3401 = vunpack.c.h.b16 %v2647
  %v3402 = vunpack.c.l.b16 %v2648
  %v3403 = vunpack.c.h.b16 %v2648
  %v3404 = vunpack.c.l.b16 %v2649
  %v3405 = vunpack.c.h.b16 %v2649
  %v3406 = vunpack.c.l.b16 %v2650
  %v3407 = vunpack.c.h.b16 %v2650
  %v3408 = vunpack.c.l.b16 %v2651
  %v3409 = vunpack.c.h.b16 %v2651
  %v3410 = vunpack.c.l.b16 %v2652
  %v3411 = vunpack.c.h.b16 %v2652
  %v3412 = vunpack.c.l.b16 %v2653
  %v3413 = vunpack.c.h.b16 %v2653
  %v3414 = vunpack.c.l.b16 %v2654
  %v3415 = vunpack.c.h.b16 %v2654
  %v3416 = vunpack.c.l.b16 %v2655
  %v3417 = vunpack.c.h.b16 %v2655
  %v3418 = vunpack.c.l.b16 %v2656
  %v3419 = vunpack.c.h.b16 %v2656
  %v3420 = vunpack.c.l.b16 %v2657
  %v3421 = vunpack.c.h.b16 %v2657
  %v3422 = vunpack.c.l.b16 %v2658
  %v3423 = vunpack.c.h.b16 %v2658
  %v3424 = vunpack.c.l.b16 %v2659
  %v3425 = vunpack.c.h.b16 %v2659
  %v3426 = vunpack.c.l.b16 %v2660
  %v3427 = vunpack.c.h.b16 %v2660
  %v3428 = vunpack.c.l.b16 %v2661
  %v3429 = vunpack.c.h.b16 %v2661
  %v3430 = vunpack.c.l.b16 %v2662
  %v3431 = vunpack.c.h.b16 %v2662
  %v3432 = vunpack.c.l.b16 %v2663
  %v3433 = vunpack.c.h.b16 %v2663
  %v3434 = vunpack.c.l.b16 %v2664
  %v3435 = vunpack.c.h.b16 %v2664
  %v3436 = vunpack.c.l.b16 %v2665
  %v3437 = vunpack.c.h.b16 %v2665
  %v3438 = vunpack.c.l.b16 %v2666
  %v3439 = vunpack.c.h.b16 %v2666
  %v3440 = vunpack.c.l.b16 %v2667
  %v3441 = vunpack.c.h.b16 %v2667
  %v3442 = vunpack.c.l.b16 %v2668
  %v3443 = vunpack.c.h.b16 %v2668
  %v3444 = vunpack.c.l.b16 %v2669
  %v3445 = vunpack.c.h.b16 %v2669
  %v3446 = vunpack.c.l.b16 %v2670
  %v3447 = vunpack.c.h.b16 %v2670
  %v3448 = vunpack.c.l.b16 %v2671
  %v3449 = vunpack.c.h.b16 %v2671
  %v3450 = vunpack.c.l.b16 %v2672
  %v3451 = vunpack.c.h.b16 %v2672
  %v3452 = vunpack.c.l.b16 %v2673
  %v3453 = vunpack.c.h.b16 %v2673
  %v3454 = vunpack.c.l.b16 %v2674
  %v3455 = vunpack.c.h.b16 %v2674
  %v3456 = vunpack.c.l.b16 %v2675
  %v3457 = vunpack.c.h.b16 %v2675
  %v3458 = vunpack.c.l.b16 %v2676
  %v3459 = vunpack.c.h.b16 %v2676
  %v3460 = vunpack.c.l.b16 %v2677
  %v3461 = vunpack.c.h.b16 %v2677
  %v3462 = vunpack.c.l.b16 %v2678
  %v3463 = vunpack.c.h.b16 %v2678
  %v3464 = vunpack.c.l.b16 %v2679
  %v3465 = vunpack.c.h.b16 %v2679
  %v3466 = vunpack.c.l.b16 %v2680
  %v3467 = vunpack.c.h.b16 %v2680
  %v3468 = vunpack.c.l.b16 %v2681
  %v3469 = vunpack.c.h.b16 %v2681
  %v3470 = vunpack.c.l.b16 %v2682
  %v3471 = vunpack.c.h.b16 %v2682
  %v3472 = vunpack.c.l.b16 %v2683
  %v3473 = vunpack.c.h.b16 %v2683
  %v3474 = vunpack.c.l.b16 %v2684
  %v3475 = vunpack.c.h.b16 %v2684
  %v3476 = vunpack.c.l.b16 %v2685
  %v3477 = vunpack.c.h.b16 %v2685
  %v3478 = vunpack.c.l.b16 %v2686
  %v3479 = vunpack.c.h.b16 %v2686
  %v3480 = vunpack.c.l.b16 %v2687
  %v3481 = vunpack.c.h.b16 %v2687
  %v3482 = vunpack.c.l.b16 %v2688
  %v3483 = vunpack.c.h.b16 %v2688
  %v3484 = vunpack.c.l.b16 %v2689
  %v3485 = vunpack.c.h.b16 %v2689
  %v3486 = vunpack.c.l.b16 %v2690
  %v3487 = vunpack.c.h.b16 %v2690
  %v3488 = vunpack.c.l.b16 %v2691
  %v3489 = vunpack.c.h.b16 %v2691
  %v3490 = vunpack.c.l.b16 %v2692
  %v3491 = vunpack.c.h.b16 %v2692
  %v3492 = vunpack.c.l.b16 %v2693
  %v3493 = vunpack.c.h.b16 %v2693
  %v3494 = vunpack.c.l.b16 %v2694
  %v3495 = vunpack.c.h.b16 %v2694
  %v3496 = vunpack.c.l.b16 %v2695
  %v3497 = vunpack.c.h.b16 %v2695
  %v3498 = vunpack.c.l.b16 %v2696
  %v3499 = vunpack.c.h.b16 %v2696
  %v3500 = vunpack.c.l.b16 %v2697
  %v3501 = vunpack.c.h.b16 %v2697
  %v3502 = vunpack.c.l.b16 %v2698
  %v3503 = vunpack.c.h.b16 %v2698
  %v3504 = vunpack.c.l.b16 %v2699
  %v3505 = vunpack.c.h.b16 %v2699
  %v3506 = vunpack.c.l.b16 %v2700
  %v3507 = vunpack.c.h.b16 %v2700
  %v3508 = vunpack.c.l.b16 %v2701
  %v3509 = vunpack.c.h.b16 %v2701
  %v3510 = vunpack.c.l.b16 %v2702
  %v3511 = vunpack.c.h.b16 %v2702
  %v3512 = vunpack.c.l.b16 %v2703
  %v3513 = vunpack.c.h.b16 %v2703
  %v3514 = vunpack.c.l.b16 %v2704
  %v3515 = vunpack.c.h.b16 %v2704
  %v3516 = vunpack.c.l.b16 %v2705
  %v3517 = vunpack.c.h.b16 %v2705
  %v3518 = vunpack.c.l.b16 %v2706
  %v3519 = vunpack.c.h.b16 %v2706
  %v3520 = vunpack.c.l.b16 %v2707
  %v3521 = vunpack.c.h.b16 %v2707
  %v3522 = vunpack.c.l.b16 %v2708
  %v3523 = vunpack.c.h.b16 %v2708
  %v3524 = vunpack.c.l.b16 %v2709
  %v3525 = vunpack.c.h.b16 %v2709
  %v3526 = vunpack.c.l.b16 %v2710
  %v3527 = vunpack.c.h.b16 %v2710
  %v3528 = vunpack.c.l.b16 %v2711
  %v3529 = vunpack.c.h.b16 %v2711
  %v3530 = vunpack.c.l.b16 %v2712
  %v3531 = vunpack.c.h.b16 %v2712
  %v3532 = vunpack.c.l.b16 %v2713
  %v3533 = vunpack.c.h.b16 %v2713
  %v3534 = vunpack.c.l.b16 %v2714
  %v3535 = vunpack.c.h.b16 %v2714
  %v3536 = vunpack.c.l.b16 %v2715
  %v3537 = vunpack.c.h.b16 %v2715
  %v3538 = vunpack.c.l.b16 %v2716
  %v3539 = vunpack.c.h.b16 %v2716
  %v3540 = vunpack.c.l.b16 %v2717
  %v3541 = vunpack.c.h.b16 %v2717
  %v3542 = vunpack.c.l.b16 %v2718
  %v3543 = vunpack.c.h.b16 %v2718
  %v3544 = vunpack.c.l.b16 %v2719
  %v3545 = vunpack.c.h.b16 %v2719
  %v3546 = vunpack.c.l.b16 %v2720
  %v3547 = vunpack.c.h.b16 %v2720
  %v3548 = vunpack.c.l.b16 %v2721
  %v3549 = vunpack.c.h.b16 %v2721
  %v3550 = vunpack.c.l.b16 %v2722
  %v3551 = vunpack.c.h.b16 %v2722
  %v3552 = vunpack.c.l.b16 %v2723
  %v3553 = vunpack.c.h.b16 %v2723
  %v3554 = vunpack.c.l.b16 %v2724
  %v3555 = vunpack.c.h.b16 %v2724
  %v3556 = vunpack.c.l.b16 %v2725
  %v3557 = vunpack.c.h.b16 %v2725
  %v3558 = vunpack.c.l.b16 %v2726
  %v3559 = vunpack.c.h.b16 %v2726
  %v3560 = vunpack.c.l.b16 %v2727
  %v3561 = vunpack.c.h.b16 %v2727
  %v3562 = vunpack.c.l.b16 %v2728
  %v3563 = vunpack.c.h.b16 %v2728
  %v3564 = vunpack.c.l.b16 %v2729
  %v3565 = vunpack.c.h.b16 %v2729
  %v3566 = vunpack.c.l.b16 %v2730
  %v3567 = vunpack.c.h.b16 %v2730
  %v3568 = vunpack.c.l.b16 %v2731
  %v3569 = vunpack.c.h.b16 %v2731
  %v3570 = vunpack.c.l.b16 %v2732
  %v3571 = vunpack.c.h.b16 %v2732
  %v3572 = vunpack.c.l.b16 %v2733
  %v3573 = vunpack.c.h.b16 %v2733
  %v3574 = vunpack.c.l.b16 %v2734
  %v3575 = vunpack.c.h.b16 %v2734
  %v3576 = vunpack.c.l.b16 %v2735
  %v3577 = vunpack.c.h.b16 %v2735
  %v3578 = vunpack.c.l.b16 %v2736
  %v3579 = vunpack.c.h.b16 %v2736
  %v3580 = vunpack.c.l.b16 %v2737
  %v3581 = vunpack.c.h.b16 %v2737
  %v3582 = vunpack.c.l.b16 %v2738
  %v3583 = vunpack.c.h.b16 %v2738
  %v3584 = vunpack.c.l.b16 %v2739
  %v3585 = vunpack.c.h.b16 %v2739
  %v3586 = vunpack.c.l.b16 %v2740
  %v3587 = vunpack.c.h.b16 %v2740
  %v3588 = vunpack.c.l.b16 %v2741
  %v3589 = vunpack.c.h.b16 %v2741
  %v3590 = vunpack.c.l.b16 %v2742
  %v3591 = vunpack.c.h.b16 %v2742
  %v3592 = vunpack.c.l.b16 %v2743
  %v3593 = vunpack.c.h.b16 %v2743
  %v3594 = vunpack.c.l.b16 %v2744
  %v3595 = vunpack.c.h.b16 %v2744
  %v3596 = vunpack.c.l.b16 %v2745
  %v3597 = vunpack.c.h.b16 %v2745
  %v3598 = vunpack.c.l.b16 %v2746
  %v3599 = vunpack.c.h.b16 %v2746
  %v3600 = vunpack.c.l.b16 %v2747
  %v3601 = vunpack.c.h.b16 %v2747
  %v3602 = vunpack.c.l.b16 %v2748
  %v3603 = vunpack.c.h.b16 %v2748
  %v3604 = vunpack.c.l.b16 %v2749
  %v3605 = vunpack.c.h.b16 %v2749
  %v3606 = vunpack.c.l.b16 %v2750
  %v3607 = vunpack.c.h.b16 %v2750
  %v3608 = vunpack.c.l.b16 %v2751
  %v3609 = vunpack.c.h.b16 %v2751
  %v3610 = vunpack.c.l.b16 %v2752
  %v3611 = vunpack.c.h.b16 %v2752
  %v3612 = vunpack.c.l.b16 %v2753
  %v3613 = vunpack.c.h.b16 %v2753
  %v3614 = vunpack.c.l.b16 %v2754
  %v3615 = vunpack.c.h.b16 %v2754
  %v3616 = vunpack.c.l.b16 %v2755
  %v3617 = vunpack.c.h.b16 %v2755
  %v3618 = vunpack.c.l.b16 %v2756
  %v3619 = vunpack.c.h.b16 %v2756
  %v3620 = vunpack.c.l.b16 %v2757
  %v3621 = vunpack.c.h.b16 %v2757
  %v3622 = vunpack.c.l.b16 %v2758
  %v3623 = vunpack.c.h.b16 %v2758
  %v3624 = vunpack.c.l.b16 %v2759
  %v3625 = vunpack.c.h.b16 %v2759
  %v3626 = vunpack.c.l.b16 %v2760
  %v3627 = vunpack.c.h.b16 %v2760
  %v3628 = vunpack.c.l.b16 %v2761
  %v3629 = vunpack.c.h.b16 %v2761
  %v3630 = vunpack.c.l.b16 %v2762
  %v3631 = vunpack.c.h.b16 %v2762
  %v3632 = vunpack.c.l.b16 %v2763
  %v3633 = vunpack.c.h.b16 %v2763
  %v3634 = vunpack.c.l.b16 %v2764
  %v3635 = vunpack.c.h.b16 %v2764
  %v3636 = vunpack.c.l.b16 %v2765
  %v3637 = vunpack.c.h.b16 %v2765
  %v3638 = vunpack.c.l.b16 %v2766
  %v3639 = vunpack.c.h.b16 %v2766
  %v3640 = vunpack.c.l.b16 %v2767
  %v3641 = vunpack.c.h.b16 %v2767
  %v3642 = vunpack.c.l.b16 %v2768
  %v3643 = vunpack.c.h.b16 %v2768
  %v3644 = vunpack.c.l.b16 %v2769
  %v3645 = vunpack.c.h.b16 %v2769
  %v3646 = vunpack.c.l.b16 %v2770
  %v3647 = vunpack.c.h.b16 %v2770
  %v3648 = vunpack.c.l.b16 %v2771
  %v3649 = vunpack.c.h.b16 %v2771
  %v3650 = vunpack.c.l.b16 %v2772
  %v3651 = vunpack.c.h.b16 %v2772
  %v3652 = vunpack.c.l.b16 %v2773
  %v3653 = vunpack.c.h.b16 %v2773
  %v3654 = vunpack.c.l.b16 %v2774
  %v3655 = vunpack.c.h.b16 %v2774
  %v3656 = vunpack.c.l.b16 %v2775
  %v3657 = vunpack.c.h.b16 %v2775
  %v3658 = vunpack.c.l.b16 %v2776
  %v3659 = vunpack.c.h.b16 %v2776
  %v3660 = vunpack.c.l.b16 %v2777
  %v3661 = vunpack.c.h.b16 %v2777
  %v3662 = vunpack.c.l.b16 %v2778
  %v3663 = vunpack.c.h.b16 %v2778
  %v3664 = vunpack.c.l.b16 %v2779
  %v3665 = vunpack.c.h.b16 %v2779
  %v3666 = vpack.c.b16 %v3094, %v3090
  %v3667 = vpack.c.b16 %v3095, %v3091
  %v3668 = vpack.c.b16 %v3096, %v3092
  %v3669 = vpack.c.b16 %v3097, %v3093
  %v3670 = vpack.c.b16 %v3102, %v3098
  %v3671 = vpack.c.b16 %v3103, %v3099
  %v3672 = vpack.c.b16 %v3104, %v3100
  %v3673 = vpack.c.b16 %v3105, %v3101
  %v3674 = vpack.c.b16 %v3110, %v3106
  %v3675 = vpack.c.b16 %v3111, %v3107
  %v3676 = vpack.c.b16 %v3112, %v3108
  %v3677 = vpack.c.b16 %v3113, %v3109
  %v3678 = vpack.c.b16 %v3118, %v3114
  %v3679 = vpack.c.b16 %v3119, %v3115
  %v3680 = vpack.c.b16 %v3120, %v3116
  %v3681 = vpack.c.b16 %v3121, %v3117
  %v3682 = vpack.c.b16 %v3126, %v3122
  %v3683 = vpack.c.b16 %v3127, %v3123
  %v3684 = vpack.c.b16 %v3128, %v3124
  %v3685 = vpack.c.b16 %v3129, %v3125
  %v3686 = vpack.c.b16 %v3134, %v3130
  %v3687 = vpack.c.b16 %v3135, %v3131
  %v3688 = vpack.c.b16 %v3136, %v3132
  %v3689 = vpack.c.b16 %v3137, %v3133
  %v3690 = vpack.c.b16 %v3142, %v3138
  %v3691 = vpack.c.b16 %v3143, %v3139
  %v3692 = vpack.c.b16 %v3144, %v3140
  %v3693 = vpack.c.b16 %v3145, %v3141
  %v3694 = vpack.c.b16 %v3150, %v3146
  %v3695 = vpack.c.b16 %v3151, %v3147
  %v3696 = vpack.c.b16 %v3152, %v3148
  %v3697 = vpack.c.b16 %v3153, %v3149
  %v3698 = vpack.c.b16 %v3158, %v3154
  %v3699 = vpack.c.b16 %v3159, %v3155
  %v3700 = vpack.c.b16 %v3160, %v3156
  %v3701 = vpack.c.b16 %v3161, %v3157
  %v3702 = vpack.c.b16 %v3166, %v3162
  %v3703 = vpack.c.b16 %v3167, %v3163
  %v3704 = vpack.c.b16 %v3168, %v3164
  %v3705 = vpack.c.b16 %v3169, %v3165
  %v3706 = vpack.c.b16 %v3174, %v3170
  %v3707 = vpack.c.b16 %v3175, %v3171
  %v3708 = vpack.c.b16 %v3176, %v3172
  %v3709 = vpack.c.b16 %v3177, %v3173
  %v3710 = vpack.c.b16 %v3182, %v3178
  %v3711 = vpack.c.b16 %v3183, %v3179
  %v3712 = vpack.c.b16 %v3184, %v3180
  %v3713 = vpack.c.b16 %v3185, %v3181
  %v3714 = vpack.c.b16 %v3190, %v3186
  %v3715 = vpack.c.b16 %v3191, %v3187
  %v3716 = vpack.c.b16 %v3192, %v3188
  %v3717 = vpack.c.b16 %v3193, %v3189
  %v3718 = vpack.c.b16 %v3198, %v3194
  %v3719 = vpack.c.b16 %v3199, %v3195
  %v3720 = vpack.c.b16 %v3200, %v3196
  %v3721 = vpack.c.b16 %v3201, %v3197
  %v3722 = vpack.c.b16 %v3206, %v3202
  %v3723 = vpack.c.b16 %v3207, %v3203
  %v3724 = vpack.c.b16 %v3208, %v3204
  %v3725 = vpack.c.b16 %v3209, %v3205
  %v3726 = vpack.c.b16 %v3214, %v3210
  %v3727 = vpack.c.b16 %v3215, %v3211
  %v3728 = vpack.c.b16 %v3216, %v3212
  %v3729 = vpack.c.b16 %v3217, %v3213
  %v3730 = vpack.c.b16 %v3222, %v3218
  %v3731 = vpack.c.b16 %v3223, %v3219
  %v3732 = vpack.c.b16 %v3224, %v3220
  %v3733 = vpack.c.b16 %v3225, %v3221
  %v3734 = vpack.c.b16 %v3230, %v3226
  %v3735 = vpack.c.b16 %v3231, %v3227
  %v3736 = vpack.c.b16 %v3232, %v3228
  %v3737 = vpack.c.b16 %v3233, %v3229
  %v3738 = vpack.c.b16 %v3238, %v3234
  %v3739 = vpack.c.b16 %v3239, %v3235
  %v3740 = vpack.c.b16 %v3240, %v3236
  %v3741 = vpack.c.b16 %v3241, %v3237
  %v3742 = vpack.c.b16 %v3246, %v3242
  %v3743 = vpack.c.b16 %v3247, %v3243
  %v3744 = vpack.c.b16 %v3248, %v3244
  %v3745 = vpack.c.b16 %v3249, %v3245
  %v3746 = vpack.c.b16 %v3254, %v3250
  %v3747 = vpack.c.b16 %v3255, %v3251
  %v3748 = vpack.c.b16 %v3256, %v3252
  %v3749 = vpack.c.b16 %v3257, %v3253
  %v3750 = vpack.c.b16 %v3262, %v3258
  %v3751 = vpack.c.b16 %v3263, %v3259
  %v3752 = vpack.c.b16 %v3264, %v3260
  %v3753 = vpack.c.b16 %v3265, %v3261
  %v3754 = vpack.c.b16 %v3270, %v3266
  %v3755 = vpack.c.b16 %v3271, %v3267
  %v3756 = vpack.c.b16 %v3272, %v3268
  %v3757 = vpack.c.b16 %v3273, %v3269
  %v3758 = vpack.c.b16 %v3278, %v3274
  %v3759 = vpack.c.b16 %v3279, %v3275
  %v3760 = vpack.c.b16 %v3280, %v3276
  %v3761 = vpack.c.b16 %v3281, %v3277
  %v3762 = vpack.c.b16 %v3286, %v3282
  %v3763 = vpack.c.b16 %v3287, %v3283
  %v3764 = vpack.c.b16 %v3288, %v3284
  %v3765 = vpack.c.b16 %v3289, %v3285
  %v3766 = vpack.c.b16 %v3294, %v3290
  %v3767 = vpack.c.b16 %v3295, %v3291
  %v3768 = vpack.c.b16 %v3296, %v3292
  %v3769 = vpack.c.b16 %v3297, %v3293
  %v3770 = vpack.c.b16 %v3302, %v3298
  %v3771 = vpack.c.b16 %v3303, %v3299
  %v3772 = vpack.c.b16 %v3304, %v3300
  %v3773 = vpack.c.b16 %v3305, %v3301
  %v3774 = vpack.c.b16 %v3310, %v3306
  %v3775 = vpack.c.b16 %v3311, %v3307
  %v3776 = vpack.c.b16 %v3312, %v3308
  %v3777 = vpack.c.b16 %v3313, %v3309
  %v3778 = vpack.c.b16 %v3318, %v3314
  %v3779 = vpack.c.b16 %v3319, %v3315
  %v3780 = vpack.c.b16 %v3320, %v3316
  %v3781 = vpack.c.b16 %v3321, %v3317
  %v3782 = vpack.c.b16 %v3326, %v3322
  %v3783 = vpack.c.b16 %v3327, %v3323
  %v3784 = vpack.c.b16 %v3328, %v3324
  %v3785 = vpack.c.b16 %v3329, %v3325
  %v3786 = vpack.c.b16 %v3334, %v3330
  %v3787 = vpack.c.b16 %v3335, %v3331
  %v3788 = vpack.c.b16 %v3336, %v3332
  %v3789 = vpack.c.b16 %v3337, %v3333
  %v3790 = vpack.c.b16 %v3342, %v3338
  %v3791 = vpack.c.b16 %v3343, %v3339
  %v3792 = vpack.c.b16 %v3344, %v3340
  %v3793 = vpack.c.b16 %v3345, %v3341
  %v3794 = vpack.c.b16 %v3350, %v3346
  %v3795 = vpack.c.b16 %v3351, %v3347
  %v3796 = vpack.c.b16 %v3352, %v3348
  %v3797 = vpack.c.b16 %v3353, %v3349
  %v3798 = vpack.c.b16 %v3358, %v3354
  %v3799 = vpack.c.b16 %v3359, %v3355
  %v3800 = vpack.c.b16 %v3360, %v3356
  %v3801 = vpack.c.b16 %v3361, %v3357
  %v3802 = vpack.c.b16 %v3366, %v3362
  %v3803 = vpack.c.b16 %v3367, %v3363
  %v3804 = vpack.c.b16 %v3368, %v3364
  %v3805 = vpack.c.b16 %v3369, %v3365
  %v3806 = vpack.c.b16 %v3374, %v3370
  %v3807 = vpack.c.b16 %v3375, %v3371
  %v3808 = vpack.c.b16 %v3376, %v3372
  %v3809 = vpack.c.b16 %v3377, %v3373
  %v3810 = vpack.c.b16 %v3382, %v3378
  %v3811 = vpack.c.b16 %v3383, %v3379
  %v3812 = vpack.c.b16 %v3384, %v3380
  %v3813 = vpack.c.b16 %v3385, %v3381
  %v3814 = vpack.c.b16 %v3390, %v3386
  %v3815 = vpack.c.b16 %v3391, %v3387
  %v3816 = vpack.c.b16 %v3392, %v3388
  %v3817 = vpack.c.b16 %v3393, %v3389
  %v3818 = vpack.c.b16 %v3398, %v3394
  %v3819 = vpack.c.b16 %v3399, %v3395
  %v3820 = vpack.c.b16 %v3400, %v3396
  %v3821 = vpack.c.b16 %v3401, %v3397
  %v3822 = vpack.c.b16 %v3406, %v3402
  %v3823 = vpack.c.b16 %v3407, %v3403
  %v3824 = vpack.c.b16 %v3408, %v3404
  %v3825 = vpack.c.b16 %v3409, %v3405
  %v3826 = vpack.c.b16 %v3414, %v3410
  %v3827 = vpack.c.b16 %v3415, %v3411
  %v3828 = vpack.c.b16 %v3416, %v3412
  %v3829 = vpack.c.b16 %v3417, %v3413
  %v3830 = vpack.c.b16 %v3422, %v3418
  %v3831 = vpack.c.b16 %v3423, %v3419
  %v3832 = vpack.c.b16 %v3424, %v3420
  %v3833 = vpack.c.b16 %v3425, %v3421
  %v3834 = vpack.c.b16 %v3430, %v3426
  %v3835 = vpack.c.b16 %v3431, %v3427
  %v3836 = vpack.c.b16 %v3432, %v3428
  %v3837 = vpack.c.b16 %v3433, %v3429
  %v3838 = vpack.c.b16 %v3438, %v3434
  %v3839 = vpack.c.b16 %v3439, %v3435
  %v3840 = vpack.c.b16 %v3440, %v3436
  %v3841 = vpack.c.b16 %v3441, %v3437
  %v3842 = vpack.c.b16 %v3446, %v3442
  %v3843 = vpack.c.b16 %v3447, %v3443
  %v3844 = vpack.c.b16 %v3448, %v3444
  %v3845 = vpack.c.b16 %v3449, %v3445
  %v3846 = vpack.c.b16 %v3454, %v3450
  %v3847 = vpack.c.b16 %v3455, %v3451
  %v3848 = vpack.c.b16 %v3456, %v3452
  %v3849 = vpack.c.b16 %v3457, %v3453
  %v3850 = vpack.c.b16 %v3462, %v3458
  %v3851 = vpack.c.b16 %v3463, %v3459
  %v3852 = vpack.c.b16 %v3464, %v3460
  %v3853 = vpack.c.b16 %v3465, %v3461
  %v3854 = vpack.c.b16 %v3470, %v3466
  %v3855 = vpack.c.b16 %v3471, %v3467
  %v3856 = vpack.c.b16 %v3472, %v3468
  %v3857 = vpack.c.b16 %v3473, %v3469
  %v3858 = vpack.c.b16 %v3478, %v3474
  %v3859 = vpack.c.b16 %v3479, %v3475
  %v3860 = vpack.c.b16 %v3480, %v3476
  %v3861 = vpack.c.b16 %v3481, %v3477
  %v3862 = vpack.c.b16 %v3486, %v3482
  %v3863 = vpack.c.b16 %v3487, %v3483
  %v3864 = vpack.c.b16 %v3488, %v3484
  %v3865 = vpack.c.b16 %v3489, %v3485
  %v3866 = vpack.c.b16 %v3494, %v3490
  %v3867 = vpack.c.b16 %v3495, %v3491
  %v3868 = vpack.c.b16 %v3496, %v3492
  %v3869 = vpack.c.b16 %v3497, %v3493
  %v3870 = vpack.c.b16 %v3502, %v3498
  %v3871 = vpack.c.b16 %v3503, %v3499
  %v3872 = vpack.c.b16 %v3504, %v3500
  %v3873 = vpack.c.b16 %v3505, %v3501
  %v3874 = vpack.c.b16 %v3510, %v3506
  %v3875 = vpack.c.b16 %v3511, %v3507
  %v3876 = vpack.c.b16 %v3512, %v3508
  %v3877 = vpack.c.b16 %v3513, %v3509
  %v3878 = vpack.c.b16 %v3518, %v3514
  %v3879 = vpack.c.b16 %v3519, %v3515
  %v3880 = vpack.c.b16 %v3520, %v3516
  %v3881 = vpack.c.b16 %v3521, %v3517
  %v3882 = vpack.c.b16 %v3526, %v3522
  %v3883 = vpack.c.b16 %v3527, %v3523
  %v3884 = vpack.c.b16 %v3528, %v3524
  %v3885 = vpack.c.b16 %v3529, %v3525
  %v3886 = vpack.c.b16 %v3534, %v3530
  %v3887 = vpack.c.b16 %v3535, %v3531
  %v3888 = vpack.c.b16 %v3536, %v3532
  %v3889 = vpack.c.b16 %v3537, %v3533
  %v3890 = vpack.c.b16 %v3542, %v3538
  %v3891 = vpack.c.b16 %v3543, %v3539
  %v3892 = vpack.c.b16 %v3544, %v3540
  %v3893 = vpack.c.b16 %v3545, %v3541
  %v3894 = vpack.c.b16 %v3550, %v3546
  %v3895 = vpack.c.b16 %v3551, %v3547
  %v3896 = vpack.c.b16 %v3552, %v3548
  %v3897 = vpack.c.b16 %v3553, %v3549
  %v3898 = vpack.c.b16 %v3558, %v3554
  %v3899 = vpack.c.b16 %v3559, %v3555
  %v3900 = vpack.c.b16 %v3560, %v3556
  %v3901 = vpack.c.b16 %v3561, %v3557
  %v3902 = vpack.c.b16 %v3566, %v3562
  %v3903 = vpack.c.b16 %v3567, %v3563
  %v3904 = vpack.c.b16 %v3568, %v3564
  %v3905 = vpack.c.b16 %v3569, %v3565
  %v3906 = vpack.c.b16 %v3574, %v3570
  %v3907 = vpack.c.b16 %v3575, %v3571
  %v3908 = vpack.c.b16 %v3576, %v3572
  %v3909 = vpack.c.b16 %v3577, %v3573
  %v3910 = vpack.c.b16 %v3582, %v3578
  %v3911 = vpack.c.b16 %v3583, %v3579
  %v3912 = vpack.c.b16 %v3584, %v3580
  %v3913 = vpack.c.b16 %v3585, %v3581
  %v3914 = vpack.c.b16 %v3590, %v3586
  %v3915 = vpack.c.b16 %v3591, %v3587
  %v3916 = vpack.c.b16 %v3592, %v3588
  %v3917 = vpack.c.b16 %v3593, %v3589
  %v3918 = vpack.c.b16 %v3598, %v3594
  %v3919 = vpack.c.b16 %v3599, %v3595
  %v3920 = vpack.c.b16 %v3600, %v3596
  %v3921 = vpack.c.b16 %v3601, %v3597
  %v3922 = vpack.c.b16 %v3606, %v3602
  %v3923 = vpack.c.b16 %v3607, %v3603
  %v3924 = vpack.c.b16 %v3608, %v3604
  %v3925 = vpack.c.b16 %v3609, %v3605
  %v3926 = vpack.c.b16 %v3614, %v3610
  %v3927 = vpack.c.b16 %v3615, %v3611
  %v3928 = vpack.c.b16 %v3616, %v3612
  %v3929 = vpack.c.b16 %v3617, %v3613
  %v3930 = vpack.c.b16 %v3622, %v3618
  %v3931 = vpack.c.b16 %v3623, %v3619
  %v3932 = vpack.c.b16 %v3624, %v3620
  %v3933 = vpack.c.b16 %v3625, %v3621
  %v3934 = vpack.c.b16 %v3630, %v3626
  %v3935 = vpack.c.b16 %v3631, %v3627
  %v3936 = vpack.c.b16 %v3632, %v3628
  %v3937 = vpack.c.b16 %v3633, %v3629
  %v3938 = vpack.c.b16 %v3638, %v3634
  %v3939 = vpack.c.b16 %v3639, %v3635
  %v3940 = vpack.c.b16 %v3640, %v3636
  %v3941 = vpack.c.b16 %v3641, %v3637
  %v3942 = vpack.c.b16 %v3646, %v3642
  %v3943 = vpack.c.b16 %v3647, %v3643
  %v3944 = vpack.c.b16 %v3648, %v3644
  %v3945 = vpack.c.b16 %v3649, %v3645
  %v3946 = vpack.c.b16 %v3654, %v3650
  %v3947 = vpack.c.b16 %v3655, %v3651
  %v3948 = vpack.c.b16 %v3656, %v3652
  %v3949 = vpack.c.b16 %v3657, %v3653
  %v3950 = vpack.c.b16 %v3662, %v3658
  %v3951 = vpack.c.b16 %v3663, %v3659
  %v3952 = vpack.c.b16 %v3664, %v3660
  %v3953 = vpack.c.b16 %v3665, %v3661
  %4242 = vmatprep.subr.bf16.mxu0 %v3667
  %4243 = vmatpush1.bf16.msra.mxu0 %v3666
  %4244 = vmatprep.subr.bf16.mxu0 %v3671
  %4245 = vmatpush1.bf16.msra.mxu0 %v3670
  %4246 = vmatprep.subr.bf16.mxu0 %v3675
  %4247 = vmatpush1.bf16.msra.mxu0 %v3674
  %4248 = vmatprep.subr.bf16.mxu0 %v3679
  %4249 = vmatpush1.bf16.msra.mxu0 %v3678
  %4250 = vmatprep.subr.bf16.mxu0 %v3683
  %4251 = vmatpush1.bf16.msra.mxu0 %v3682
  %4252 = vmatprep.subr.bf16.mxu0 %v3687
  %4253 = vmatpush1.bf16.msra.mxu0 %v3686
  %4254 = vmatprep.subr.bf16.mxu0 %v3691
  %4255 = vmatpush1.bf16.msra.mxu0 %v3690
  %4256 = vmatprep.subr.bf16.mxu0 %v3695
  %4257 = vmatpush1.bf16.msra.mxu0 %v3694
  %4258 = vmatprep.subr.bf16.mxu0 %v3699
  %4259 = vmatpush1.bf16.msra.mxu0 %v3698
  %4260 = vmatprep.subr.bf16.mxu0 %v3703
  %4261 = vmatpush1.bf16.msra.mxu0 %v3702
  %4262 = vmatprep.subr.bf16.mxu0 %v3707
  %4263 = vmatpush1.bf16.msra.mxu0 %v3706
  %4264 = vmatprep.subr.bf16.mxu0 %v3711
  %4265 = vmatpush1.bf16.msra.mxu0 %v3710
  %4266 = vmatprep.subr.bf16.mxu0 %v3715
  %4267 = vmatpush1.bf16.msra.mxu0 %v3714
  %4268 = vmatprep.subr.bf16.mxu0 %v3719
  %4269 = vmatpush1.bf16.msra.mxu0 %v3718
  %4270 = vmatprep.subr.bf16.mxu0 %v3723
  %4271 = vmatpush1.bf16.msra.mxu0 %v3722
  %4272 = vmatprep.subr.bf16.mxu0 %v3727
  %4273 = vmatpush1.bf16.msra.mxu0 %v3726
  %4274 = vmatprep.mubr.bf16.mxu0 %v2484
  %4275 = vmatmul.mubr.bf16.gmra.mrb[0].mxu0 %v2483
  %v4276 = vpop.f32.mrb[0].mxu0
  %v4277 = vadd.f32 %v2785, %v4276
  %v4278 = vpop.f32.mrb[0].mxu0
  %v4279 = vadd.f32 %v2789, %v4278
  %v4280 = vpop.f32.mrb[0].mxu0
  %v4281 = vpop.f32.mrb[0].mxu0
  %4282 = vdwg.mxu0
  %4283 = vmatprep.subr.bf16.mxu0 %v3731
  %4284 = vmatpush1.bf16.msra.mxu0 %v3730
  %4285 = vmatprep.subr.bf16.mxu0 %v3735
  %4286 = vmatpush1.bf16.msra.mxu0 %v3734
  %4287 = vmatprep.subr.bf16.mxu0 %v3739
  %4288 = vmatpush1.bf16.msra.mxu0 %v3738
  %4289 = vmatprep.subr.bf16.mxu0 %v3743
  %4290 = vmatpush1.bf16.msra.mxu0 %v3742
  %4291 = vmatprep.subr.bf16.mxu0 %v3747
  %4292 = vmatpush1.bf16.msra.mxu0 %v3746
  %4293 = vmatprep.subr.bf16.mxu0 %v3751
  %4294 = vmatpush1.bf16.msra.mxu0 %v3750
  %4295 = vmatprep.subr.bf16.mxu0 %v3755
  %4296 = vmatpush1.bf16.msra.mxu0 %v3754
  %4297 = vmatprep.subr.bf16.mxu0 %v3759
  %4298 = vmatpush1.bf16.msra.mxu0 %v3758
  %4299 = vmatprep.subr.bf16.mxu0 %v3763
  %4300 = vmatpush1.bf16.msra.mxu0 %v3762
  %4301 = vmatprep.subr.bf16.mxu0 %v3767
  %4302 = vmatpush1.bf16.msra.mxu0 %v3766
  %4303 = vmatprep.subr.bf16.mxu0 %v3771
  %4304 = vmatpush1.bf16.msra.mxu0 %v3770
  %4305 = vmatprep.subr.bf16.mxu0 %v3775
  %4306 = vmatpush1.bf16.msra.mxu0 %v3774
  %4307 = vmatprep.subr.bf16.mxu0 %v3779
  %4308 = vmatpush1.bf16.msra.mxu0 %v3778
  %4309 = vmatprep.subr.bf16.mxu0 %v3783
  %4310 = vmatpush1.bf16.msra.mxu0 %v3782
  %4311 = vmatprep.subr.bf16.mxu0 %v3787
  %4312 = vmatpush1.bf16.msra.mxu0 %v3786
  %4313 = vmatprep.subr.bf16.mxu0 %v3791
  %4314 = vmatpush1.bf16.msra.mxu0 %v3790
  %4315 = vmatprep.mubr.bf16.mxu0 %v2486
  %4316 = vmatmul.mubr.bf16.gmra.mrb[0].mxu0 %v2485
  %v4317 = vpop.f32.mrb[0].mxu0
  %v4318 = vadd.f32 %v4277, %v4317
  %v4319 = vpop.f32.mrb[0].mxu0
  %v4320 = vadd.f32 %v4279, %v4319
  %v4321 = vpop.f32.mrb[0].mxu0
  %v4322 = vpop.f32.mrb[0].mxu0
  %4323 = vdwg.mxu0
  %4324 = vmatprep.subr.bf16.mxu0 %v3795
  %4325 = vmatpush1.bf16.msra.mxu0 %v3794
  %4326 = vmatprep.subr.bf16.mxu0 %v3799
  %4327 = vmatpush1.bf16.msra.mxu0 %v3798
  %4328 = vmatprep.subr.bf16.mxu0 %v3803
  %4329 = vmatpush1.bf16.msra.mxu0 %v3802
  %4330 = vmatprep.subr.bf16.mxu0 %v3807
  %4331 = vmatpush1.bf16.msra.mxu0 %v3806
  %4332 = vmatprep.subr.bf16.mxu0 %v3811
  %4333 = vmatpush1.bf16.msra.mxu0 %v3810
  %4334 = vmatprep.subr.bf16.mxu0 %v3815
  %4335 = vmatpush1.bf16.msra.mxu0 %v3814
  %4336 = vmatprep.subr.bf16.mxu0 %v3819
  %4337 = vmatpush1.bf16.msra.mxu0 %v3818
  %4338 = vmatprep.subr.bf16.mxu0 %v3823
  %4339 = vmatpush1.bf16.msra.mxu0 %v3822
  %4340 = vmatprep.subr.bf16.mxu0 %v3827
  %4341 = vmatpush1.bf16.msra.mxu0 %v3826
  %4342 = vmatprep.subr.bf16.mxu0 %v3831
  %4343 = vmatpush1.bf16.msra.mxu0 %v3830
  %4344 = vmatprep.subr.bf16.mxu0 %v3835
  %4345 = vmatpush1.bf16.msra.mxu0 %v3834
  %4346 = vmatprep.subr.bf16.mxu0 %v3839
  %4347 = vmatpush1.bf16.msra.mxu0 %v3838
  %4348 = vmatprep.subr.bf16.mxu0 %v3843
  %4349 = vmatpush1.bf16.msra.mxu0 %v3842
  %4350 = vmatprep.subr.bf16.mxu0 %v3847
  %4351 = vmatpush1.bf16.msra.mxu0 %v3846
  %4352 = vmatprep.subr.bf16.mxu0 %v3851
  %4353 = vmatpush1.bf16.msra.mxu0 %v3850
  %4354 = vmatprep.subr.bf16.mxu0 %v3855
  %4355 = vmatpush1.bf16.msra.mxu0 %v3854
  %4356 = vmatprep.mubr.bf16.mxu0 %v2488
  %4357 = vmatmul.mubr.bf16.gmra.mrb[0].mxu0 %v2487
  %v4358 = vpop.f32.mrb[0].mxu0
  %v4359 = vadd.f32 %v4318, %v4358
  %v4360 = vpop.f32.mrb[0].mxu0
  %v4361 = vadd.f32 %v4320, %v4360
  %v4362 = vpop.f32.mrb[0].mxu0
  %v4363 = vpop.f32.mrb[0].mxu0
  %4364 = vdwg.mxu0
  %4365 = vmatprep.subr.bf16.mxu0 %v3859
  %4366 = vmatpush1.bf16.msra.mxu0 %v3858
  %4367 = vmatprep.subr.bf16.mxu0 %v3863
  %4368 = vmatpush1.bf16.msra.mxu0 %v3862
  %4369 = vmatprep.subr.bf16.mxu0 %v3867
  %4370 = vmatpush1.bf16.msra.mxu0 %v3866
  %4371 = vmatprep.subr.bf16.mxu0 %v3871
  %4372 = vmatpush1.bf16.msra.mxu0 %v3870
  %4373 = vmatprep.subr.bf16.mxu0 %v3875
  %4374 = vmatpush1.bf16.msra.mxu0 %v3874
  %4375 = vmatprep.subr.bf16.mxu0 %v3879
  %4376 = vmatpush1.bf16.msra.mxu0 %v3878
  %4377 = vmatprep.subr.bf16.mxu0 %v3883
  %4378 = vmatpush1.bf16.msra.mxu0 %v3882
  %4379 = vmatprep.subr.bf16.mxu0 %v3887
  %4380 = vmatpush1.bf16.msra.mxu0 %v3886
  %4381 = vmatprep.subr.bf16.mxu0 %v3891
  %4382 = vmatpush1.bf16.msra.mxu0 %v3890
  %4383 = vmatprep.subr.bf16.mxu0 %v3895
  %4384 = vmatpush1.bf16.msra.mxu0 %v3894
  %4385 = vmatprep.subr.bf16.mxu0 %v3899
  %4386 = vmatpush1.bf16.msra.mxu0 %v3898
  %4387 = vmatprep.subr.bf16.mxu0 %v3903
  %4388 = vmatpush1.bf16.msra.mxu0 %v3902
  %4389 = vmatprep.subr.bf16.mxu0 %v3907
  %4390 = vmatpush1.bf16.msra.mxu0 %v3906
  %4391 = vmatprep.subr.bf16.mxu0 %v3911
  %4392 = vmatpush1.bf16.msra.mxu0 %v3910
  %4393 = vmatprep.subr.bf16.mxu0 %v3915
  %4394 = vmatpush1.bf16.msra.mxu0 %v3914
  %4395 = vmatprep.subr.bf16.mxu0 %v3919
  %4396 = vmatpush1.bf16.msra.mxu0 %v3918
  %4397 = vmatprep.mubr.bf16.mxu0 %v2490
  %4398 = vmatmul.mubr.bf16.gmra.mrb[0].mxu0 %v2489
  %v4399 = vpop.f32.mrb[0].mxu0
  %v4400 = vadd.f32 %v4359, %v4399
  %v4401 = vpop.f32.mrb[0].mxu0
  %v4402 = vadd.f32 %v4361, %v4401
  %v4403 = vpop.f32.mrb[0].mxu0
  %v4404 = vpop.f32.mrb[0].mxu0
  %4405 = vdwg.mxu0
  %4406 = vmatprep.subr.bf16.mxu0 %v3923
  %4407 = vmatpush1.bf16.msra.mxu0 %v3922
  %4408 = vmatprep.subr.bf16.mxu0 %v3927
  %4409 = vmatpush1.bf16.msra.mxu0 %v3926
  %4410 = vmatprep.subr.bf16.mxu0 %v3931
  %4411 = vmatpush1.bf16.msra.mxu0 %v3930
  %4412 = vmatprep.subr.bf16.mxu0 %v3935
  %4413 = vmatpush1.bf16.msra.mxu0 %v3934
  %4414 = vmatprep.subr.bf16.mxu0 %v3939
  %4415 = vmatpush1.bf16.msra.mxu0 %v3938
  %4416 = vmatprep.subr.bf16.mxu0 %v3943
  %4417 = vmatpush1.bf16.msra.mxu0 %v3942
  %4418 = vmatprep.subr.bf16.mxu0 %v3947
  %4419 = vmatpush1.bf16.msra.mxu0 %v3946
  %4420 = vmatprep.subr.bf16.mxu0 %v3951
  %4421 = vmatpush1.bf16.msra.mxu0 %v3950
  %4422 = vmatprep.subr.bf16.mxu0 0
  %4423 = vmatpush1.bf16.msra.mxu0 0
  %4424 = vmatprep.subr.bf16.mxu0 0
  %4425 = vmatpush1.bf16.msra.mxu0 0
  %4426 = vmatprep.subr.bf16.mxu0 0
  %4427 = vmatpush1.bf16.msra.mxu0 0
  %4428 = vmatprep.subr.bf16.mxu0 0
  %4429 = vmatpush1.bf16.msra.mxu0 0
  %4430 = vmatprep.subr.bf16.mxu0 0
  %4431 = vmatpush1.bf16.msra.mxu0 0
  %4432 = vmatprep.subr.bf16.mxu0 0
  %4433 = vmatpush1.bf16.msra.mxu0 0
  %4434 = vmatprep.subr.bf16.mxu0 0
  %4435 = vmatpush1.bf16.msra.mxu0 0
  %4436 = vmatprep.subr.bf16.mxu0 0
  %4437 = vmatpush1.bf16.msra.mxu0 0
  %4438 = vmatprep.mubr.bf16.mxu0 0
  %4439 = vmatmul.mubr.bf16.gmra.mrb[0].mxu0 %v2491
  %v4440 = vpop.f32.mrb[0].mxu0
  %v4441 = vadd.f32 %v4400, %v4440
  %v4442 = vpop.f32.mrb[0].mxu0
  %v4443 = vadd.f32 %v4402, %v4442
  %v4444 = vpop.f32.mrb[0].mxu0
  %v4445 = vpop.f32.mrb[0].mxu0
  %4446 = vdwg.mxu0
  %4447 = vmatprep.subr.bf16.mxu0 %v3669
  %4448 = vmatpush1.bf16.msra.mxu0 %v3668
  %4449 = vmatprep.subr.bf16.mxu0 %v3673
  %4450 = vmatpush1.bf16.msra.mxu0 %v3672
  %4451 = vmatprep.subr.bf16.mxu0 %v3677
  %4452 = vmatpush1.bf16.msra.mxu0 %v3676
  %4453 = vmatprep.subr.bf16.mxu0 %v3681
  %4454 = vmatpush1.bf16.msra.mxu0 %v3680
  %4455 = vmatprep.subr.bf16.mxu0 %v3685
  %4456 = vmatpush1.bf16.msra.mxu0 %v3684
  %4457 = vmatprep.subr.bf16.mxu0 %v3689
  %4458 = vmatpush1.bf16.msra.mxu0 %v3688
  %4459 = vmatprep.subr.bf16.mxu0 %v3693
  %4460 = vmatpush1.bf16.msra.mxu0 %v3692
  %4461 = vmatprep.subr.bf16.mxu0 %v3697
  %4462 = vmatpush1.bf16.msra.mxu0 %v3696
  %4463 = vmatprep.subr.bf16.mxu0 %v3701
  %4464 = vmatpush1.bf16.msra.mxu0 %v3700
  %4465 = vmatprep.subr.bf16.mxu0 %v3705
  %4466 = vmatpush1.bf16.msra.mxu0 %v3704
  %4467 = vmatprep.subr.bf16.mxu0 %v3709
  %4468 = vmatpush1.bf16.msra.mxu0 %v3708
  %4469 = vmatprep.subr.bf16.mxu0 %v3713
  %4470 = vmatpush1.bf16.msra.mxu0 %v3712
  %4471 = vmatprep.subr.bf16.mxu0 %v3717
  %4472 = vmatpush1.bf16.msra.mxu0 %v3716
  %4473 = vmatprep.subr.bf16.mxu0 %v3721
  %4474 = vmatpush1.bf16.msra.mxu0 %v3720
  %4475 = vmatprep.subr.bf16.mxu0 %v3725
  %4476 = vmatpush1.bf16.msra.mxu0 %v3724
  %4477 = vmatprep.subr.bf16.mxu0 %v3729
  %4478 = vmatpush1.bf16.msra.mxu0 %v3728
  %4479 = vmatprep.mubr.bf16.mxu0 %v2484
  %4480 = vmatmul.mubr.bf16.gmra.mrb[0].mxu0 %v2483
  %v4481 = vpop.f32.mrb[0].mxu0
  %v4482 = vadd.f32 %v2793, %v4481
  %v4483 = vpop.f32.mrb[0].mxu0
  %v4484 = vadd.f32 %v2797, %v4483
  %v4485 = vpop.f32.mrb[0].mxu0
  %v4486 = vpop.f32.mrb[0].mxu0
  %4487 = vdwg.mxu0
  %4488 = vmatprep.subr.bf16.mxu0 %v3733
  %4489 = vmatpush1.bf16.msra.mxu0 %v3732
  %4490 = vmatprep.subr.bf16.mxu0 %v3737
  %4491 = vmatpush1.bf16.msra.mxu0 %v3736
  %4492 = vmatprep.subr.bf16.mxu0 %v3741
  %4493 = vmatpush1.bf16.msra.mxu0 %v3740
  %4494 = vmatprep.subr.bf16.mxu0 %v3745
  %4495 = vmatpush1.bf16.msra.mxu0 %v3744
  %4496 = vmatprep.subr.bf16.mxu0 %v3749
  %4497 = vmatpush1.bf16.msra.mxu0 %v3748
  %4498 = vmatprep.subr.bf16.mxu0 %v3753
  %4499 = vmatpush1.bf16.msra.mxu0 %v3752
  %4500 = vmatprep.subr.bf16.mxu0 %v3757
  %4501 = vmatpush1.bf16.msra.mxu0 %v3756
  %4502 = vmatprep.subr.bf16.mxu0 %v3761
  %4503 = vmatpush1.bf16.msra.mxu0 %v3760
  %4504 = vmatprep.subr.bf16.mxu0 %v3765
  %4505 = vmatpush1.bf16.msra.mxu0 %v3764
  %4506 = vmatprep.subr.bf16.mxu0 %v3769
  %4507 = vmatpush1.bf16.msra.mxu0 %v3768
  %4508 = vmatprep.subr.bf16.mxu0 %v3773
  %4509 = vmatpush1.bf16.msra.mxu0 %v3772
  %4510 = vmatprep.subr.bf16.mxu0 %v3777
  %4511 = vmatpush1.bf16.msra.mxu0 %v3776
  %4512 = vmatprep.subr.bf16.mxu0 %v3781
  %4513 = vmatpush1.bf16.msra.mxu0 %v3780
  %4514 = vmatprep.subr.bf16.mxu0 %v3785
  %4515 = vmatpush1.bf16.msra.mxu0 %v3784
  %4516 = vmatprep.subr.bf16.mxu0 %v3789
  %4517 = vmatpush1.bf16.msra.mxu0 %v3788
  %4518 = vmatprep.subr.bf16.mxu0 %v3793
  %4519 = vmatpush1.bf16.msra.mxu0 %v3792
  %4520 = vmatprep.mubr.bf16.mxu0 %v2486
  %4521 = vmatmul.mubr.bf16.gmra.mrb[0].mxu0 %v2485
  %v4522 = vpop.f32.mrb[0].mxu0
  %v4523 = vadd.f32 %v4482, %v4522
  %v4524 = vpop.f32.mrb[0].mxu0
  %v4525 = vadd.f32 %v4484, %v4524
  %v4526 = vpop.f32.mrb[0].mxu0
  %v4527 = vpop.f32.mrb[0].mxu0
  %4528 = vdwg.mxu0
  %4529 = vmatprep.subr.bf16.mxu0 %v3797
  %4530 = vmatpush1.bf16.msra.mxu0 %v3796
  %4531 = vmatprep.subr.bf16.mxu0 %v3801
  %4532 = vmatpush1.bf16.msra.mxu0 %v3800
  %4533 = vmatprep.subr.bf16.mxu0 %v3805
  %4534 = vmatpush1.bf16.msra.mxu0 %v3804
  %4535 = vmatprep.subr.bf16.mxu0 %v3809
  %4536 = vmatpush1.bf16.msra.mxu0 %v3808
  %4537 = vmatprep.subr.bf16.mxu0 %v3813
  %4538 = vmatpush1.bf16.msra.mxu0 %v3812
  %4539 = vmatprep.subr.bf16.mxu0 %v3817
  %4540 = vmatpush1.bf16.msra.mxu0 %v3816
  %4541 = vmatprep.subr.bf16.mxu0 %v3821
  %4542 = vmatpush1.bf16.msra.mxu0 %v3820
  %4543 = vmatprep.subr.bf16.mxu0 %v3825
  %4544 = vmatpush1.bf16.msra.mxu0 %v3824
  %4545 = vmatprep.subr.bf16.mxu0 %v3829
  %4546 = vmatpush1.bf16.msra.mxu0 %v3828
  %4547 = vmatprep.subr.bf16.mxu0 %v3833
  %4548 = vmatpush1.bf16.msra.mxu0 %v3832
  %4549 = vmatprep.subr.bf16.mxu0 %v3837
  %4550 = vmatpush1.bf16.msra.mxu0 %v3836
  %4551 = vmatprep.subr.bf16.mxu0 %v3841
  %4552 = vmatpush1.bf16.msra.mxu0 %v3840
  %4553 = vmatprep.subr.bf16.mxu0 %v3845
  %4554 = vmatpush1.bf16.msra.mxu0 %v3844
  %4555 = vmatprep.subr.bf16.mxu0 %v3849
  %4556 = vmatpush1.bf16.msra.mxu0 %v3848
  %4557 = vmatprep.subr.bf16.mxu0 %v3853
  %4558 = vmatpush1.bf16.msra.mxu0 %v3852
  %4559 = vmatprep.subr.bf16.mxu0 %v3857
  %4560 = vmatpush1.bf16.msra.mxu0 %v3856
  %4561 = vmatprep.mubr.bf16.mxu0 %v2488
  %4562 = vmatmul.mubr.bf16.gmra.mrb[0].mxu0 %v2487
  %v4563 = vpop.f32.mrb[0].mxu0
  %v4564 = vadd.f32 %v4523, %v4563
  %v4565 = vpop.f32.mrb[0].mxu0
  %v4566 = vadd.f32 %v4525, %v4565
  %v4567 = vpop.f32.mrb[0].mxu0
  %v4568 = vpop.f32.mrb[0].mxu0
  %4569 = vdwg.mxu0
  %4570 = vmatprep.subr.bf16.mxu0 %v3861
  %4571 = vmatpush1.bf16.msra.mxu0 %v3860
  %4572 = vmatprep.subr.bf16.mxu0 %v3865
  %4573 = vmatpush1.bf16.msra.mxu0 %v3864
  %4574 = vmatprep.subr.bf16.mxu0 %v3869
  %4575 = vmatpush1.bf16.msra.mxu0 %v3868
  %4576 = vmatprep.subr.bf16.mxu0 %v3873
  %4577 = vmatpush1.bf16.msra.mxu0 %v3872
  %4578 = vmatprep.subr.bf16.mxu0 %v3877
  %4579 = vmatpush1.bf16.msra.mxu0 %v3876
  %4580 = vmatprep.subr.bf16.mxu0 %v3881
  %4581 = vmatpush1.bf16.msra.mxu0 %v3880
  %4582 = vmatprep.subr.bf16.mxu0 %v3885
  %4583 = vmatpush1.bf16.msra.mxu0 %v3884
  %4584 = vmatprep.subr.bf16.mxu0 %v3889
  %4585 = vmatpush1.bf16.msra.mxu0 %v3888
  %4586 = vmatprep.subr.bf16.mxu0 %v3893
  %4587 = vmatpush1.bf16.msra.mxu0 %v3892
  %4588 = vmatprep.subr.bf16.mxu0 %v3897
  %4589 = vmatpush1.bf16.msra.mxu0 %v3896
  %4590 = vmatprep.subr.bf16.mxu0 %v3901
  %4591 = vmatpush1.bf16.msra.mxu0 %v3900
  %4592 = vmatprep.subr.bf16.mxu0 %v3905
  %4593 = vmatpush1.bf16.msra.mxu0 %v3904
  %4594 = vmatprep.subr.bf16.mxu0 %v3909
  %4595 = vmatpush1.bf16.msra.mxu0 %v3908
  %4596 = vmatprep.subr.bf16.mxu0 %v3913
  %4597 = vmatpush1.bf16.msra.mxu0 %v3912
  %4598 = vmatprep.subr.bf16.mxu0 %v3917
  %4599 = vmatpush1.bf16.msra.mxu0 %v3916
  %4600 = vmatprep.subr.bf16.mxu0 %v3921
  %4601 = vmatpush1.bf16.msra.mxu0 %v3920
  %4602 = vmatprep.mubr.bf16.mxu0 %v2490
  %4603 = vmatmul.mubr.bf16.gmra.mrb[0].mxu0 %v2489
  %v4604 = vpop.f32.mrb[0].mxu0
  %v4605 = vadd.f32 %v4564, %v4604
  %v4606 = vpop.f32.mrb[0].mxu0
  %v4607 = vadd.f32 %v4566, %v4606
  %v4608 = vpop.f32.mrb[0].mxu0
  %v4609 = vpop.f32.mrb[0].mxu0
  %4610 = vdwg.mxu0
  %4611 = vmatprep.subr.bf16.mxu0 %v3925
  %4612 = vmatpush1.bf16.msra.mxu0 %v3924
  %4613 = vmatprep.subr.bf16.mxu0 %v3929
  %4614 = vmatpush1.bf16.msra.mxu0 %v3928
  %4615 = vmatprep.subr.bf16.mxu0 %v3933
  %4616 = vmatpush1.bf16.msra.mxu0 %v3932
  %4617 = vmatprep.subr.bf16.mxu0 %v3937
  %4618 = vmatpush1.bf16.msra.mxu0 %v3936
  %4619 = vmatprep.subr.bf16.mxu0 %v3941
  %4620 = vmatpush1.bf16.msra.mxu0 %v3940
  %4621 = vmatprep.subr.bf16.mxu0 %v3945
  %4622 = vmatpush1.bf16.msra.mxu0 %v3944
  %4623 = vmatprep.subr.bf16.mxu0 %v3949
  %4624 = vmatpush1.bf16.msra.mxu0 %v3948
  %4625 = vmatprep.subr.bf16.mxu0 %v3953
  %4626 = vmatpush1.bf16.msra.mxu0 %v3952
  %4627 = vmatprep.subr.bf16.mxu0 0
  %4628 = vmatpush1.bf16.msra.mxu0 0
  %4629 = vmatprep.subr.bf16.mxu0 0
  %4630 = vmatpush1.bf16.msra.mxu0 0
  %4631 = vmatprep.subr.bf16.mxu0 0
  %4632 = vmatpush1.bf16.msra.mxu0 0
  %4633 = vmatprep.subr.bf16.mxu0 0
  %4634 = vmatpush1.bf16.msra.mxu0 0
  %4635 = vmatprep.subr.bf16.mxu0 0
  %4636 = vmatpush1.bf16.msra.mxu0 0
  %4637 = vmatprep.subr.bf16.mxu0 0
  %4638 = vmatpush1.bf16.msra.mxu0 0
  %4639 = vmatprep.subr.bf16.mxu0 0
  %4640 = vmatpush1.bf16.msra.mxu0 0
  %4641 = vmatprep.subr.bf16.mxu0 0
  %4642 = vmatpush1.bf16.msra.mxu0 0
  %4643 = vmatprep.mubr.bf16.mxu0 0
  %4644 = vmatmul.mubr.bf16.gmra.mrb[0].mxu0 %v2491
  %v4645 = vpop.f32.mrb[0].mxu0
  %v4646 = vadd.f32 %v4605, %v4645
  %v4647 = vpop.f32.mrb[0].mxu0
  %v4648 = vadd.f32 %v4607, %v4647
  %v4649 = vpop.f32.mrb[0].mxu0
  %v4650 = vpop.f32.mrb[0].mxu0
  %4651 = vdwg.mxu0
  %v4652 = vsub.f32 0.0, %v4441
  %v4653 = vsub.f32 0.0, %v4443
  %v4654 = vsub.f32 0.0, %v4646
  %v4655 = vsub.f32 0.0, %v4648
  %v4656 = vmul.f32 %v4652, 1.442695
  %v4657 = vpow.pop %v4656
  %v4658 = vmul.f32 %v4653, 1.442695
  %v4659 = vpow.pop %v4658
  %v4660 = vmul.f32 %v4654, 1.442695
  %v4661 = vpow.pop %v4660
  %v4662 = vmul.f32 %v4655, 1.442695
  %v4663 = vpow.pop %v4662
  %v4664 = vadd.f32 %v4657, 1.0
  %v4665 = vadd.f32 %v4659, 1.0
  %v4666 = vadd.f32 %v4661, 1.0
  %v4667 = vadd.f32 %v4663, 1.0
  %v4668 = vrcp.pop %v4664
  %v4669 = vrcp.pop %v4665
  %v4670 = vrcp.pop %v4666
  %v4671 = vrcp.pop %v4667
  %v4672 = vpack.c.bf16 %v4668, %v4668
  %v4673 = vpack.c.bf16 %v4669, %v4669
  %v4674 = vpack.c.bf16 %v4670, %v4670
  %v4675 = vpack.c.bf16 %v4671, %v4671
  %v4680 = vunpack.c.l.b16 %v4672
  %v4681 = vunpack.c.l.b16 %v4673
  %v4682 = vunpack.c.l.b16 %v4674
  %v4683 = vunpack.c.l.b16 %v4675
  %v4684 = vpack.c.b16 %v4681, %v4680
  %v4685 = vpack.c.b16 %v4683, %v4682
  %4688 = vst [vmem:[%s9] sm:$0xff] %v4684
  %4689 = vst [vmem:[%s9 + $0x8] sm:$0xff] %v4685
  // Predicated region
  $region38: #{forward.1} parent=0 // pred_check
    _
  $region39: #{forward.1} parent=0 // pred_check_branch
    %4691 = sbr.rel (0) target = $region41
  $region40: #{forward.1} parent=0 // pred_region
    _
  $region41: #{forward.1} parent=0 // pred_fallthru
    _
  // Predicated region
  $region42: #{forward.1} parent=0 // pred_check
    _
  $region43: #{forward.1} parent=0 // pred_check_branch
    %4693 = sbr.rel (0) target = $region45
  $region44: #{forward.1} parent=0 // pred_region
    _
  $region45: #{forward.1} parent=0 // pred_fallthru
    _

</llo_original>
